<compile_context>
chip_gen: v7x
topology: tpu7x:2x2x1
jax: 0.10.0
libtpu: 0.0.40
codegen_flags: <defaults>
</compile_context>

<pallas_src>
import jax
import jax.numpy as jnp
from jax import lax
from jax.experimental import pallas as pl
from jax.experimental.pallas import tpu as pltpu

BT = 8  # images per grid step (batch tile)


# ------------------------------- Pallas kernel ------------------------------ #
def _cnn_kernel(lhs1_ref, t1_ref, b1_ref, hp1a_ref, hp1b_ref,
                t2_ref, b2_ref, hp2a_ref, hp2b_ref,
                wfc1_ref, bfc1_ref, wfc2_ref, bfc2_ref, out_ref):
    f32, bf16 = jnp.float32, jnp.bfloat16

    # ---- conv1 + bias + ReLU: one batched Toeplitz matmul for all BT images ----
    # rows = b*24 + ho, lanes = p*256 + w2*20 + c (16 zero-pad lanes per half)
    a1 = jnp.dot(lhs1_ref[...], t1_ref[...], preferred_element_type=f32)
    a1 = jnp.maximum(a1 + b1_ref[...], 0.0)                        # (192, 512)

    # ---- maxpool #1 fused with conv2's height im2col -------------------------
    # width pool = lane-half max; height pool + dh-shift gather = two exact 0/1
    # block-diagonal selector matmuls:  g[dh*64 + b*8 + ho2, :] = pool1[b, ho2+dh, :]
    a1w = jnp.maximum(a1[:, :256], a1[:, 256:]).astype(bf16)       # (192, 256)
    g = jnp.maximum(jnp.dot(hp1a_ref[...], a1w, preferred_element_type=f32),
                    jnp.dot(hp1b_ref[...], a1w, preferred_element_type=f32))  # (320, 256)

    # ---- conv2 (5x5, 20->32): contraction over (width, Cin) per kernel row ----
    acc2 = jnp.zeros((BT * 8, 256), f32)
    for dh in range(5):
        acc2 += jnp.dot(g[dh * BT * 8:(dh + 1) * BT * 8, :].astype(bf16),
                        t2_ref[dh], preferred_element_type=f32)
    a2 = jnp.maximum(acc2 + b2_ref[...], 0.0)                      # (64, 256)

    # ---- maxpool #2: width = lane-half max, height = selector matmuls ---------
    # x3 rows are grouped by pooled row r:  x3[r*8 + b, :] = pool2[b, r, :]
    a2w = jnp.maximum(a2[:, :128], a2[:, 128:]).astype(bf16)       # (64, 128)
    x3 = jnp.maximum(jnp.dot(hp2a_ref[...], a2w, preferred_element_type=f32),
                     jnp.dot(hp2b_ref[...], a2w, preferred_element_type=f32))  # (32, 128)

    # ---- fc1 (512->512) + ReLU: contraction split over the 4 pooled rows ------
    # (PyTorch NCHW flatten is folded into wfc1's row permutation at pack time.)
    h = jnp.zeros((BT, 512), f32)
    for r in range(4):
        h += jnp.dot(x3[r * BT:(r + 1) * BT, :].astype(bf16), wfc1_ref[r],
                     preferred_element_type=f32)
    h = jnp.maximum(h + bfc1_ref[...], 0.0)                        # (8, 512)

    # ---- fc2 (512->10, zero-padded to 128 lanes => dense (8,128) store) -------
    logits = jnp.dot(h.astype(bf16), wfc2_ref[...],
                     preferred_element_type=f32) + bfc2_ref[...]   # (8, 128)
    out_ref[...] = logits.astype(out_ref.dtype)


# --------------------------- Parameter creation ----------------------------- #
def init_params(key):
    """PyTorch-convention parameters (Conv2d OIHW, Linear (out,in)), default init."""
    def uniform(k, shape, fan_in):
        bound = 1.0 / jnp.sqrt(jnp.asarray(fan_in, jnp.float32))
        return jax.random.uniform(k, shape, jnp.float32, -bound, bound)

    keys = jax.random.split(key, 8)
    return {
        "w1": uniform(keys[0], (20, 1, 5, 5), 25),
        "b1": uniform(keys[1], (20,), 25),
        "w2": uniform(keys[2], (32, 20, 5, 5), 500),
        "b2": uniform(keys[3], (32,), 500),
        "fc1_w": uniform(keys[4], (512, 512), 512),
        "fc1_b": uniform(keys[5], (512,), 512),
        "fc2_w": uniform(keys[6], (10, 512), 512),
        "fc2_b": uniform(keys[7], (10,), 512),
    }


def pack_params(params, bt=BT):
    """One-time host-side repack: Toeplitz conv weights, pool/shift selectors, fc1 perm."""
    f32, bf16 = jnp.float32, jnp.bfloat16
    w1, b1 = params["w1"], params["b1"]
    w2, b2 = params["w2"], params["b2"]
    fc1_w, fc1_b = params["fc1_w"], params["fc1_b"]
    fc2_w, fc2_b = params["fc2_w"], params["fc2_b"]

    # conv1 Toeplitz: T1[dh*32 + j, p*256 + w2*20 + c] = w1[c,0,dh, j-(2*w2+p)]
    w1r = w1[:, 0, :, :]                                              # (20,5,5)[c,dh,dw]
    S1 = (jnp.arange(32)[None, :, None] ==
          (jnp.arange(24)[:, None, None] + jnp.arange(5)[None, None, :])).astype(f32)
    T1 = jnp.einsum("wjd,cnd->njwc", S1, w1r)                         # (5,32,24,20)
    T1 = T1.reshape(5, 32, 12, 2, 20).transpose(0, 1, 3, 2, 4).reshape(5, 32, 2, 240)
    T1 = jnp.pad(T1, ((0, 0), (0, 0), (0, 0), (0, 16))).reshape(160, 512)
    b1row = jnp.tile(jnp.concatenate([jnp.tile(b1, 12), jnp.zeros(16, f32)]), 2)
    b1row = b1row.reshape(1, 512)

    # conv2 Toeplitz: T2[dh, w*20+ci (pad->256), p*128 + wo2*32 + c2]
    S2 = (jnp.arange(12)[None, :, None] ==
          (jnp.arange(8)[:, None, None] + jnp.arange(5)[None, None, :])).astype(f32)
    T2 = jnp.einsum("owd,kind->nwiok", S2, w2)                        # (5,12,20,8,32)
    T2 = T2.reshape(5, 240, 8, 32)
    T2 = jnp.pad(T2, ((0, 0), (0, 16), (0, 0), (0, 0)))               # (5,256,8,32)
    T2 = T2.reshape(5, 256, 4, 2, 32).transpose(0, 1, 3, 2, 4).reshape(5, 256, 256)
    b2row = jnp.tile(b2, 8).reshape(1, 256)

    # pool1 + conv2-height-shift selectors (block-diagonal over the batch tile):
    # g[dh*(bt*8) + b*8 + ho2, :] = max of conv1 rows (2*(ho2+dh), 2*(ho2+dh)+1) of image b
    r_idx = jnp.arange(5 * bt * 8)
    dh_o, b_o, h_o = r_idx // (bt * 8), (r_idx // 8) % bt, r_idx % 8
    c_idx = jnp.arange(bt * 24)
    b_i, h_i = c_idx // 24, c_idx % 24
    same = b_o[:, None] == b_i[None, :]
    hp1a = (same & (h_i[None, :] == 2 * (h_o + dh_o)[:, None])).astype(bf16)
    hp1b = (same & (h_i[None, :] == 2 * (h_o + dh_o)[:, None] + 1)).astype(bf16)

    # pool2 selectors grouped by pooled row r: x3[r*bt + b, :] = pool2 row (b, r)
    rr = jnp.arange(4 * bt)
    r_o, b_o2 = rr // bt, rr % bt
    cc = jnp.arange(bt * 8)
    b_i2, h_i2 = cc // 8, cc % 8
    same2 = b_o2[:, None] == b_i2[None, :]
    hp2a = (same2 & (h_i2[None, :] == 2 * r_o[:, None])).astype(bf16)
    hp2b = (same2 & (h_i2[None, :] == 2 * r_o[:, None] + 1)).astype(bf16)

    # fc1: fold PyTorch's NCHW flatten (c*16 + h*4 + w) into a row permutation of W^T.
    ho = jnp.arange(4)[:, None, None]
    wo = jnp.arange(4)[None, :, None]
    c2 = jnp.arange(32)[None, None, :]
    perm = (c2 * 16 + ho * 4 + wo).reshape(-1)                        # kernel-flat -> torch-flat
    wfc1 = fc1_w[:, perm].T.reshape(4, 128, 512)                      # [r, wo*32+c2, out]
    bfc1 = fc1_b.reshape(1, 512)

    # fc2: zero-pad 10 -> 128 output lanes for a lane-dense store.
    wfc2 = jnp.pad(fc2_w.T, ((0, 0), (0, 118)))                       # (512, 128)
    bfc2 = jnp.pad(fc2_b, (0, 118)).reshape(1, 128)

    return dict(
        t1=T1.astype(bf16), b1=b1row.astype(f32), hp1a=hp1a, hp1b=hp1b,
        t2=T2.astype(bf16), b2=b2row.astype(f32), hp2a=hp2a, hp2b=hp2b,
        wfc1=wfc1.astype(bf16), bfc1=bfc1.astype(f32),
        wfc2=wfc2.astype(bf16), bfc2=bfc2.astype(f32),
    )


# ------------------------------ Forward pass -------------------------------- #
def cnn_forward(packed, x_nchw):
    B = x_nchw.shape[0]
    B_pad = ((B + BT - 1) // BT) * BT
    x = x_nchw.reshape(B, 28, 28).astype(jnp.float32)     # Cin == 1
    x = jnp.pad(x, ((0, B_pad - B), (0, 0), (0, 4)))      # pad batch->8k, W 28->32
    # First-layer height im2col (5 shifted copies along lanes); everything after
    # this stays fused inside the single Pallas kernel.
    lhs1 = jnp.concatenate([x[:, dh:dh + 24, :] for dh in range(5)], axis=2)
    lhs1 = lhs1.reshape(B_pad * 24, 160).astype(jnp.bfloat16)

    out = pl.pallas_call(
        _cnn_kernel,
        out_shape=jax.ShapeDtypeStruct((B_pad, 128), jnp.float32),
        grid=(B_pad // BT,),
        in_specs=[
            pl.BlockSpec((BT * 24, 160), lambda i: (i, 0)),        # conv1 lhs (im2col, bf16)
            pl.BlockSpec((160, 512), lambda i: (0, 0)),            # conv1 Toeplitz (bf16)
            pl.BlockSpec((1, 512), lambda i: (0, 0)),              # conv1 bias row
            pl.BlockSpec((5 * BT * 8, BT * 24), lambda i: (0, 0)), # pool1+shift selector a
            pl.BlockSpec((5 * BT * 8, BT * 24), lambda i: (0, 0)), # pool1+shift selector b
            pl.BlockSpec((5, 256, 256), lambda i: (0, 0, 0)),      # conv2 Toeplitz (bf16)
            pl.BlockSpec((1, 256), lambda i: (0, 0)),              # conv2 bias row
            pl.BlockSpec((4 * BT, BT * 8), lambda i: (0, 0)),      # pool2 selector a
            pl.BlockSpec((4 * BT, BT * 8), lambda i: (0, 0)),      # pool2 selector b
            pl.BlockSpec((4, 128, 512), lambda i: (0, 0, 0)),      # fc1 weight (permuted)
            pl.BlockSpec((1, 512), lambda i: (0, 0)),              # fc1 bias
            pl.BlockSpec((512, 128), lambda i: (0, 0)),            # fc2 weight (padded)
            pl.BlockSpec((1, 128), lambda i: (0, 0)),              # fc2 bias (padded)
        ],
        out_specs=pl.BlockSpec((BT, 128), lambda i: (i, 0)),
        compiler_params=pltpu.CompilerParams(
            dimension_semantics=("parallel",)),
    )(lhs1, packed["t1"], packed["b1"], packed["hp1a"], packed["hp1b"],
      packed["t2"], packed["b2"], packed["hp2a"], packed["hp2b"],
      packed["wfc1"], packed["bfc1"], packed["wfc2"], packed["bfc2"])

    return out[:B, :10]                                    # (B, 10) logits


# --------------------------- Pure-JAX reference ------------------------------ #
def reference_forward(params, x_nchw):
    x = x_nchw.astype(jnp.float32)
    y = lax.conv_general_dilated(
        x, params["w1"], window_strides=(1, 1), padding="VALID",
        dimension_numbers=("NCHW", "OIHW", "NCHW")) + params["b1"][None, :, None, None]
    y = jnp.maximum(y, 0.0)
    y = lax.reduce_window(y, -jnp.inf, lax.max, (1, 1, 2, 2), (1, 1, 2, 2), "VALID")
    y = lax.conv_general_dilated(
        y, params["w2"], window_strides=(1, 1), padding="VALID",
        dimension_numbers=("NCHW", "OIHW", "NCHW")) + params["b2"][None, :, None, None]
    y = jnp.maximum(y, 0.0)
    y = lax.reduce_window(y, -jnp.inf, lax.max, (1, 1, 2, 2), (1, 1, 2, 2), "VALID")
    y = y.reshape(y.shape[0], -1)
    y = jnp.maximum(y @ params["fc1_w"].T + params["fc1_b"], 0.0)
    return y @ params["fc2_w"].T + params["fc2_b"]


# ---------------------------------- Main ------------------------------------ #
if __name__ == "__main__":
    key = jax.random.PRNGKey(0)
    pkey, xkey = jax.random.split(key)
    params = init_params(pkey)
    packed = pack_params(params)                           # one-time host/XLA repack

    # 28x28 single-channel input is required by fc1 = Linear(32*4*4, ...).
    x = jax.random.normal(xkey, (2, 1, 28, 28), dtype=jnp.float32)

    fwd = jax.jit(cnn_forward)
    out = jax.block_until_ready(fwd(packed, x))
    assert out.shape == (2, 10), out.shape
    assert bool(jnp.all(jnp.isfinite(out)))

    ref = reference_forward(params, x)
    err = float(jnp.max(jnp.abs(out - ref)))
    assert err < 5e-2, f"max abs error vs reference: {err}"

    print("KERNEL_OK")
</pallas_src>

<mosaic_0001>
module attributes {stable_mosaic.version = 11 : i64} {
  func.func @_cnn_kernel(%arg0: i32, %arg1: memref<192x160xbf16, #tpu.memory_space<vmem>>, %arg2: memref<160x512xbf16, #tpu.memory_space<vmem>>, %arg3: memref<1x512xf32, #tpu.memory_space<vmem>>, %arg4: memref<320x192xbf16, #tpu.memory_space<vmem>>, %arg5: memref<320x192xbf16, #tpu.memory_space<vmem>>, %arg6: memref<5x256x256xbf16, #tpu.memory_space<vmem>>, %arg7: memref<1x256xf32, #tpu.memory_space<vmem>>, %arg8: memref<32x64xbf16, #tpu.memory_space<vmem>>, %arg9: memref<32x64xbf16, #tpu.memory_space<vmem>>, %arg10: memref<4x128x512xbf16, #tpu.memory_space<vmem>>, %arg11: memref<1x512xf32, #tpu.memory_space<vmem>>, %arg12: memref<512x128xbf16, #tpu.memory_space<vmem>>, %arg13: memref<1x128xf32, #tpu.memory_space<vmem>>, %arg14: memref<8x128xf32, #tpu.memory_space<vmem>>) attributes {dimension_semantics = [#tpu.dimension_semantics<parallel>], iteration_bounds = array<i64: 1>, scalar_prefetch = 0 : i64, scratch_operands = 0 : i64, tpu.core_type = #tpu.core_type<tc>, window_params = [{transform_indices = @transform_0, window_bounds = array<i64: 192, 160>}, {pipeline_mode = #tpu.pipeline_mode<synchronous>, transform_indices = @transform_1, window_bounds = array<i64: 160, 512>}, {pipeline_mode = #tpu.pipeline_mode<synchronous>, transform_indices = @transform_2, window_bounds = array<i64: 1, 512>}, {pipeline_mode = #tpu.pipeline_mode<synchronous>, transform_indices = @transform_3, window_bounds = array<i64: 320, 192>}, {pipeline_mode = #tpu.pipeline_mode<synchronous>, transform_indices = @transform_4, window_bounds = array<i64: 320, 192>}, {pipeline_mode = #tpu.pipeline_mode<synchronous>, transform_indices = @transform_5, window_bounds = array<i64: 5, 256, 256>}, {pipeline_mode = #tpu.pipeline_mode<synchronous>, transform_indices = @transform_6, window_bounds = array<i64: 1, 256>}, {pipeline_mode = #tpu.pipeline_mode<synchronous>, transform_indices = @transform_7, window_bounds = array<i64: 32, 64>}, {pipeline_mode = #tpu.pipeline_mode<synchronous>, transform_indices = @transform_8, window_bounds = array<i64: 32, 64>}, {pipeline_mode = #tpu.pipeline_mode<synchronous>, transform_indices = @transform_9, window_bounds = array<i64: 4, 128, 512>}, {pipeline_mode = #tpu.pipeline_mode<synchronous>, transform_indices = @transform_10, window_bounds = array<i64: 1, 512>}, {pipeline_mode = #tpu.pipeline_mode<synchronous>, transform_indices = @transform_11, window_bounds = array<i64: 512, 128>}, {pipeline_mode = #tpu.pipeline_mode<synchronous>, transform_indices = @transform_12, window_bounds = array<i64: 1, 128>}, {transform_indices = @transform_13, window_bounds = array<i64: 8, 128>}]} {
    %c0 = arith.constant 0 : index
    %c0_0 = arith.constant 0 : index
    %0 = vector.load %arg1[%c0, %c0_0] : memref<192x160xbf16, #tpu.memory_space<vmem>>, vector<192x160xbf16>
    %c0_1 = arith.constant 0 : index
    %c0_2 = arith.constant 0 : index
    %1 = vector.load %arg2[%c0_1, %c0_2] : memref<160x512xbf16, #tpu.memory_space<vmem>>, vector<160x512xbf16>
    %cst = arith.constant dense<0.000000e+00> : vector<192x512xf32>
    %2 = tpu.matmul %0, %1, %cst {dimension_numbers = #tpu.dot_dimension_numbers<[1], [0], [0], [1], [0, 0, 1, 1], [], []>} : vector<192x160xbf16>, vector<160x512xbf16>, vector<192x512xf32> -> vector<192x512xf32>
    %c0_3 = arith.constant 0 : index
    %c0_4 = arith.constant 0 : index
    %3 = vector.load %arg3[%c0_3, %c0_4] : memref<1x512xf32, #tpu.memory_space<vmem>>, vector<1x512xf32>
    %4 = vector.broadcast %3 : vector<1x512xf32> to vector<192x512xf32>
    %5 = arith.addf %2, %4 : vector<192x512xf32>
    %cst_5 = arith.constant 0.000000e+00 : f32
    %6 = vector.broadcast %cst_5 : f32 to vector<192x512xf32>
    %7 = arith.maximumf %5, %6 : vector<192x512xf32>
    %8 = vector.extract_strided_slice %7 {offsets = [0, 0], sizes = [192, 256], strides = [1, 1]} : vector<192x512xf32> to vector<192x256xf32>
    %9 = vector.extract_strided_slice %7 {offsets = [0, 256], sizes = [192, 256], strides = [1, 1]} : vector<192x512xf32> to vector<192x256xf32>
    %10 = arith.maximumf %8, %9 : vector<192x256xf32>
    %11 = arith.truncf %10 : vector<192x256xf32> to vector<192x256xbf16>
    %c0_6 = arith.constant 0 : index
    %c0_7 = arith.constant 0 : index
    %12 = vector.load %arg4[%c0_6, %c0_7] : memref<320x192xbf16, #tpu.memory_space<vmem>>, vector<320x192xbf16>
    %cst_8 = arith.constant dense<0.000000e+00> : vector<320x256xf32>
    %13 = tpu.matmul %12, %11, %cst_8 {dimension_numbers = #tpu.dot_dimension_numbers<[1], [0], [0], [1], [0, 0, 1, 1], [], []>} : vector<320x192xbf16>, vector<192x256xbf16>, vector<320x256xf32> -> vector<320x256xf32>
    %c0_9 = arith.constant 0 : index
    %c0_10 = arith.constant 0 : index
    %14 = vector.load %arg5[%c0_9, %c0_10] : memref<320x192xbf16, #tpu.memory_space<vmem>>, vector<320x192xbf16>
    %cst_11 = arith.constant dense<0.000000e+00> : vector<320x256xf32>
    %15 = tpu.matmul %14, %11, %cst_11 {dimension_numbers = #tpu.dot_dimension_numbers<[1], [0], [0], [1], [0, 0, 1, 1], [], []>} : vector<320x192xbf16>, vector<192x256xbf16>, vector<320x256xf32> -> vector<320x256xf32>
    %16 = arith.maximumf %13, %15 : vector<320x256xf32>
    %cst_12 = arith.constant 0.000000e+00 : f32
    %17 = vector.broadcast %cst_12 : f32 to vector<64x256xf32>
    %18 = vector.extract_strided_slice %16 {offsets = [0, 0], sizes = [64, 256], strides = [1, 1]} : vector<320x256xf32> to vector<64x256xf32>
    %19 = arith.truncf %18 : vector<64x256xf32> to vector<64x256xbf16>
    %c0_13 = arith.constant 0 : index
    %c0_14 = arith.constant 0 : index
    %c0_15 = arith.constant 0 : index
    %20 = vector.load %arg6[%c0_13, %c0_14, %c0_15] : memref<5x256x256xbf16, #tpu.memory_space<vmem>>, vector<1x256x256xbf16>
    %21 = vector.shape_cast %20 : vector<1x256x256xbf16> to vector<256x256xbf16>
    %cst_16 = arith.constant dense<0.000000e+00> : vector<64x256xf32>
    %22 = tpu.matmul %19, %21, %cst_16 {dimension_numbers = #tpu.dot_dimension_numbers<[1], [0], [0], [1], [0, 0, 1, 1], [], []>} : vector<64x256xbf16>, vector<256x256xbf16>, vector<64x256xf32> -> vector<64x256xf32>
    %23 = arith.addf %17, %22 : vector<64x256xf32>
    %24 = vector.extract_strided_slice %16 {offsets = [64, 0], sizes = [64, 256], strides = [1, 1]} : vector<320x256xf32> to vector<64x256xf32>
    %25 = arith.truncf %24 : vector<64x256xf32> to vector<64x256xbf16>
    %c1 = arith.constant 1 : index
    %c0_17 = arith.constant 0 : index
    %c0_18 = arith.constant 0 : index
    %26 = vector.load %arg6[%c1, %c0_17, %c0_18] : memref<5x256x256xbf16, #tpu.memory_space<vmem>>, vector<1x256x256xbf16>
    %27 = vector.shape_cast %26 : vector<1x256x256xbf16> to vector<256x256xbf16>
    %cst_19 = arith.constant dense<0.000000e+00> : vector<64x256xf32>
    %28 = tpu.matmul %25, %27, %cst_19 {dimension_numbers = #tpu.dot_dimension_numbers<[1], [0], [0], [1], [0, 0, 1, 1], [], []>} : vector<64x256xbf16>, vector<256x256xbf16>, vector<64x256xf32> -> vector<64x256xf32>
    %29 = arith.addf %23, %28 : vector<64x256xf32>
    %30 = vector.extract_strided_slice %16 {offsets = [128, 0], sizes = [64, 256], strides = [1, 1]} : vector<320x256xf32> to vector<64x256xf32>
    %31 = arith.truncf %30 : vector<64x256xf32> to vector<64x256xbf16>
    %c2 = arith.constant 2 : index
    %c0_20 = arith.constant 0 : index
    %c0_21 = arith.constant 0 : index
    %32 = vector.load %arg6[%c2, %c0_20, %c0_21] : memref<5x256x256xbf16, #tpu.memory_space<vmem>>, vector<1x256x256xbf16>
    %33 = vector.shape_cast %32 : vector<1x256x256xbf16> to vector<256x256xbf16>
    %cst_22 = arith.constant dense<0.000000e+00> : vector<64x256xf32>
    %34 = tpu.matmul %31, %33, %cst_22 {dimension_numbers = #tpu.dot_dimension_numbers<[1], [0], [0], [1], [0, 0, 1, 1], [], []>} : vector<64x256xbf16>, vector<256x256xbf16>, vector<64x256xf32> -> vector<64x256xf32>
    %35 = arith.addf %29, %34 : vector<64x256xf32>
    %36 = vector.extract_strided_slice %16 {offsets = [192, 0], sizes = [64, 256], strides = [1, 1]} : vector<320x256xf32> to vector<64x256xf32>
    %37 = arith.truncf %36 : vector<64x256xf32> to vector<64x256xbf16>
    %c3 = arith.constant 3 : index
    %c0_23 = arith.constant 0 : index
    %c0_24 = arith.constant 0 : index
    %38 = vector.load %arg6[%c3, %c0_23, %c0_24] : memref<5x256x256xbf16, #tpu.memory_space<vmem>>, vector<1x256x256xbf16>
    %39 = vector.shape_cast %38 : vector<1x256x256xbf16> to vector<256x256xbf16>
    %cst_25 = arith.constant dense<0.000000e+00> : vector<64x256xf32>
    %40 = tpu.matmul %37, %39, %cst_25 {dimension_numbers = #tpu.dot_dimension_numbers<[1], [0], [0], [1], [0, 0, 1, 1], [], []>} : vector<64x256xbf16>, vector<256x256xbf16>, vector<64x256xf32> -> vector<64x256xf32>
    %41 = arith.addf %35, %40 : vector<64x256xf32>
    %42 = vector.extract_strided_slice %16 {offsets = [256, 0], sizes = [64, 256], strides = [1, 1]} : vector<320x256xf32> to vector<64x256xf32>
    %43 = arith.truncf %42 : vector<64x256xf32> to vector<64x256xbf16>
    %c4 = arith.constant 4 : index
    %c0_26 = arith.constant 0 : index
    %c0_27 = arith.constant 0 : index
    %44 = vector.load %arg6[%c4, %c0_26, %c0_27] : memref<5x256x256xbf16, #tpu.memory_space<vmem>>, vector<1x256x256xbf16>
    %45 = vector.shape_cast %44 : vector<1x256x256xbf16> to vector<256x256xbf16>
    %cst_28 = arith.constant dense<0.000000e+00> : vector<64x256xf32>
    %46 = tpu.matmul %43, %45, %cst_28 {dimension_numbers = #tpu.dot_dimension_numbers<[1], [0], [0], [1], [0, 0, 1, 1], [], []>} : vector<64x256xbf16>, vector<256x256xbf16>, vector<64x256xf32> -> vector<64x256xf32>
    %47 = arith.addf %41, %46 : vector<64x256xf32>
    %c0_29 = arith.constant 0 : index
    %c0_30 = arith.constant 0 : index
    %48 = vector.load %arg7[%c0_29, %c0_30] : memref<1x256xf32, #tpu.memory_space<vmem>>, vector<1x256xf32>
    %49 = vector.broadcast %48 : vector<1x256xf32> to vector<64x256xf32>
    %50 = arith.addf %47, %49 : vector<64x256xf32>
    %cst_31 = arith.constant 0.000000e+00 : f32
    %51 = vector.broadcast %cst_31 : f32 to vector<64x256xf32>
    %52 = arith.maximumf %50, %51 : vector<64x256xf32>
    %53 = vector.extract_strided_slice %52 {offsets = [0, 0], sizes = [64, 128], strides = [1, 1]} : vector<64x256xf32> to vector<64x128xf32>
    %54 = vector.extract_strided_slice %52 {offsets = [0, 128], sizes = [64, 128], strides = [1, 1]} : vector<64x256xf32> to vector<64x128xf32>
    %55 = arith.maximumf %53, %54 : vector<64x128xf32>
    %56 = arith.truncf %55 : vector<64x128xf32> to vector<64x128xbf16>
    %c0_32 = arith.constant 0 : index
    %c0_33 = arith.constant 0 : index
    %57 = vector.load %arg8[%c0_32, %c0_33] : memref<32x64xbf16, #tpu.memory_space<vmem>>, vector<32x64xbf16>
    %cst_34 = arith.constant dense<0.000000e+00> : vector<32x128xf32>
    %58 = tpu.matmul %57, %56, %cst_34 {dimension_numbers = #tpu.dot_dimension_numbers<[1], [0], [0], [1], [0, 0, 1, 1], [], []>} : vector<32x64xbf16>, vector<64x128xbf16>, vector<32x128xf32> -> vector<32x128xf32>
    %c0_35 = arith.constant 0 : index
    %c0_36 = arith.constant 0 : index
    %59 = vector.load %arg9[%c0_35, %c0_36] : memref<32x64xbf16, #tpu.memory_space<vmem>>, vector<32x64xbf16>
    %cst_37 = arith.constant dense<0.000000e+00> : vector<32x128xf32>
    %60 = tpu.matmul %59, %56, %cst_37 {dimension_numbers = #tpu.dot_dimension_numbers<[1], [0], [0], [1], [0, 0, 1, 1], [], []>} : vector<32x64xbf16>, vector<64x128xbf16>, vector<32x128xf32> -> vector<32x128xf32>
    %61 = arith.maximumf %58, %60 : vector<32x128xf32>
    %cst_38 = arith.constant 0.000000e+00 : f32
    %62 = vector.broadcast %cst_38 : f32 to vector<8x512xf32>
    %63 = vector.extract_strided_slice %61 {offsets = [0, 0], sizes = [8, 128], strides = [1, 1]} : vector<32x128xf32> to vector<8x128xf32>
    %64 = arith.truncf %63 : vector<8x128xf32> to vector<8x128xbf16>
    %c0_39 = arith.constant 0 : index
    %c0_40 = arith.constant 0 : index
    %c0_41 = arith.constant 0 : index
    %65 = vector.load %arg10[%c0_39, %c0_40, %c0_41] : memref<4x128x512xbf16, #tpu.memory_space<vmem>>, vector<1x128x512xbf16>
    %66 = vector.shape_cast %65 : vector<1x128x512xbf16> to vector<128x512xbf16>
    %cst_42 = arith.constant dense<0.000000e+00> : vector<8x512xf32>
    %67 = tpu.matmul %64, %66, %cst_42 {dimension_numbers = #tpu.dot_dimension_numbers<[1], [0], [0], [1], [0, 0, 1, 1], [], []>} : vector<8x128xbf16>, vector<128x512xbf16>, vector<8x512xf32> -> vector<8x512xf32>
    %68 = arith.addf %62, %67 : vector<8x512xf32>
    %69 = vector.extract_strided_slice %61 {offsets = [8, 0], sizes = [8, 128], strides = [1, 1]} : vector<32x128xf32> to vector<8x128xf32>
    %70 = arith.truncf %69 : vector<8x128xf32> to vector<8x128xbf16>
    %c1_43 = arith.constant 1 : index
    %c0_44 = arith.constant 0 : index
    %c0_45 = arith.constant 0 : index
    %71 = vector.load %arg10[%c1_43, %c0_44, %c0_45] : memref<4x128x512xbf16, #tpu.memory_space<vmem>>, vector<1x128x512xbf16>
    %72 = vector.shape_cast %71 : vector<1x128x512xbf16> to vector<128x512xbf16>
    %cst_46 = arith.constant dense<0.000000e+00> : vector<8x512xf32>
    %73 = tpu.matmul %70, %72, %cst_46 {dimension_numbers = #tpu.dot_dimension_numbers<[1], [0], [0], [1], [0, 0, 1, 1], [], []>} : vector<8x128xbf16>, vector<128x512xbf16>, vector<8x512xf32> -> vector<8x512xf32>
    %74 = arith.addf %68, %73 : vector<8x512xf32>
    %75 = vector.extract_strided_slice %61 {offsets = [16, 0], sizes = [8, 128], strides = [1, 1]} : vector<32x128xf32> to vector<8x128xf32>
    %76 = arith.truncf %75 : vector<8x128xf32> to vector<8x128xbf16>
    %c2_47 = arith.constant 2 : index
    %c0_48 = arith.constant 0 : index
    %c0_49 = arith.constant 0 : index
    %77 = vector.load %arg10[%c2_47, %c0_48, %c0_49] : memref<4x128x512xbf16, #tpu.memory_space<vmem>>, vector<1x128x512xbf16>
    %78 = vector.shape_cast %77 : vector<1x128x512xbf16> to vector<128x512xbf16>
    %cst_50 = arith.constant dense<0.000000e+00> : vector<8x512xf32>
    %79 = tpu.matmul %76, %78, %cst_50 {dimension_numbers = #tpu.dot_dimension_numbers<[1], [0], [0], [1], [0, 0, 1, 1], [], []>} : vector<8x128xbf16>, vector<128x512xbf16>, vector<8x512xf32> -> vector<8x512xf32>
    %80 = arith.addf %74, %79 : vector<8x512xf32>
    %81 = vector.extract_strided_slice %61 {offsets = [24, 0], sizes = [8, 128], strides = [1, 1]} : vector<32x128xf32> to vector<8x128xf32>
    %82 = arith.truncf %81 : vector<8x128xf32> to vector<8x128xbf16>
    %c3_51 = arith.constant 3 : index
    %c0_52 = arith.constant 0 : index
    %c0_53 = arith.constant 0 : index
    %83 = vector.load %arg10[%c3_51, %c0_52, %c0_53] : memref<4x128x512xbf16, #tpu.memory_space<vmem>>, vector<1x128x512xbf16>
    %84 = vector.shape_cast %83 : vector<1x128x512xbf16> to vector<128x512xbf16>
    %cst_54 = arith.constant dense<0.000000e+00> : vector<8x512xf32>
    %85 = tpu.matmul %82, %84, %cst_54 {dimension_numbers = #tpu.dot_dimension_numbers<[1], [0], [0], [1], [0, 0, 1, 1], [], []>} : vector<8x128xbf16>, vector<128x512xbf16>, vector<8x512xf32> -> vector<8x512xf32>
    %86 = arith.addf %80, %85 : vector<8x512xf32>
    %c0_55 = arith.constant 0 : index
    %c0_56 = arith.constant 0 : index
    %87 = vector.load %arg11[%c0_55, %c0_56] : memref<1x512xf32, #tpu.memory_space<vmem>>, vector<1x512xf32>
    %88 = vector.broadcast %87 : vector<1x512xf32> to vector<8x512xf32>
    %89 = arith.addf %86, %88 : vector<8x512xf32>
    %cst_57 = arith.constant 0.000000e+00 : f32
    %90 = vector.broadcast %cst_57 : f32 to vector<8x512xf32>
    %91 = arith.maximumf %89, %90 : vector<8x512xf32>
    %92 = arith.truncf %91 : vector<8x512xf32> to vector<8x512xbf16>
    %c0_58 = arith.constant 0 : index
    %c0_59 = arith.constant 0 : index
    %93 = vector.load %arg12[%c0_58, %c0_59] : memref<512x128xbf16, #tpu.memory_space<vmem>>, vector<512x128xbf16>
    %cst_60 = arith.constant dense<0.000000e+00> : vector<8x128xf32>
    %94 = tpu.matmul %92, %93, %cst_60 {dimension_numbers = #tpu.dot_dimension_numbers<[1], [0], [0], [1], [0, 0, 1, 1], [], []>} : vector<8x512xbf16>, vector<512x128xbf16>, vector<8x128xf32> -> vector<8x128xf32>
    %c0_61 = arith.constant 0 : index
    %c0_62 = arith.constant 0 : index
    %95 = vector.load %arg13[%c0_61, %c0_62] : memref<1x128xf32, #tpu.memory_space<vmem>>, vector<1x128xf32>
    %96 = vector.broadcast %95 : vector<1x128xf32> to vector<8x128xf32>
    %97 = arith.addf %94, %96 : vector<8x128xf32>
    %c0_63 = arith.constant 0 : index
    %c0_64 = arith.constant 0 : index
    %98 = vector.load %arg14[%c0_63, %c0_64] : memref<8x128xf32, #tpu.memory_space<vmem>>, vector<8x128xf32>
    tpu.vector_store %arg14[%c0_63, %c0_64], %97 {strides = array<i32>} : memref<8x128xf32, #tpu.memory_space<vmem>>, vector<8x128xf32>,
    return
  }
  func.func @transform_0(%arg0: i32) -> (i32, i32) {
    %c0_i32 = arith.constant 0 : i32
    %c0_i32_0 = arith.constant 0 : i32
    return %arg0, %c0_i32 : i32, i32
  }
  func.func @transform_1(%arg0: i32) -> (i32, i32) {
    %c0_i32 = arith.constant 0 : i32
    %c0_i32_0 = arith.constant 0 : i32
    %c0_i32_1 = arith.constant 0 : i32
    return %c0_i32, %c0_i32_0 : i32, i32
  }
  func.func @transform_2(%arg0: i32) -> (i32, i32) {
    %c0_i32 = arith.constant 0 : i32
    %c0_i32_0 = arith.constant 0 : i32
    %c0_i32_1 = arith.constant 0 : i32
    return %c0_i32, %c0_i32_0 : i32, i32
  }
  func.func @transform_3(%arg0: i32) -> (i32, i32) {
    %c0_i32 = arith.constant 0 : i32
    %c0_i32_0 = arith.constant 0 : i32
    %c0_i32_1 = arith.constant 0 : i32
    return %c0_i32, %c0_i32_0 : i32, i32
  }
  func.func @transform_4(%arg0: i32) -> (i32, i32) {
    %c0_i32 = arith.constant 0 : i32
    %c0_i32_0 = arith.constant 0 : i32
    %c0_i32_1 = arith.constant 0 : i32
    return %c0_i32, %c0_i32_0 : i32, i32
  }
  func.func @transform_5(%arg0: i32) -> (i32, i32, i32) {
    %c0_i32 = arith.constant 0 : i32
    %c0_i32_0 = arith.constant 0 : i32
    %c0_i32_1 = arith.constant 0 : i32
    %c0_i32_2 = arith.constant 0 : i32
    return %c0_i32, %c0_i32_0, %c0_i32_1 : i32, i32, i32
  }
  func.func @transform_6(%arg0: i32) -> (i32, i32) {
    %c0_i32 = arith.constant 0 : i32
    %c0_i32_0 = arith.constant 0 : i32
    %c0_i32_1 = arith.constant 0 : i32
    return %c0_i32, %c0_i32_0 : i32, i32
  }
  func.func @transform_7(%arg0: i32) -> (i32, i32) {
    %c0_i32 = arith.constant 0 : i32
    %c0_i32_0 = arith.constant 0 : i32
    %c0_i32_1 = arith.constant 0 : i32
    return %c0_i32, %c0_i32_0 : i32, i32
  }
  func.func @transform_8(%arg0: i32) -> (i32, i32) {
    %c0_i32 = arith.constant 0 : i32
    %c0_i32_0 = arith.constant 0 : i32
    %c0_i32_1 = arith.constant 0 : i32
    return %c0_i32, %c0_i32_0 : i32, i32
  }
  func.func @transform_9(%arg0: i32) -> (i32, i32, i32) {
    %c0_i32 = arith.constant 0 : i32
    %c0_i32_0 = arith.constant 0 : i32
    %c0_i32_1 = arith.constant 0 : i32
    %c0_i32_2 = arith.constant 0 : i32
    return %c0_i32, %c0_i32_0, %c0_i32_1 : i32, i32, i32
  }
  func.func @transform_10(%arg0: i32) -> (i32, i32) {
    %c0_i32 = arith.constant 0 : i32
    %c0_i32_0 = arith.constant 0 : i32
    %c0_i32_1 = arith.constant 0 : i32
    return %c0_i32, %c0_i32_0 : i32, i32
  }
  func.func @transform_11(%arg0: i32) -> (i32, i32) {
    %c0_i32 = arith.constant 0 : i32
    %c0_i32_0 = arith.constant 0 : i32
    %c0_i32_1 = arith.constant 0 : i32
    return %c0_i32, %c0_i32_0 : i32, i32
  }
  func.func @transform_12(%arg0: i32) -> (i32, i32) {
    %c0_i32 = arith.constant 0 : i32
    %c0_i32_0 = arith.constant 0 : i32
    %c0_i32_1 = arith.constant 0 : i32
    return %c0_i32, %c0_i32_0 : i32, i32
  }
  func.func @transform_13(%arg0: i32) -> (i32, i32) {
    %c0_i32 = arith.constant 0 : i32
    %c0_i32_0 = arith.constant 0 : i32
    return %arg0, %c0_i32 : i32, i32
  }
}

</mosaic_0001>

<llo_original>
// kernel: cnn_forward.1
$region0: #{cnn_forward.1}
  #allocation0 [shape = 'u32[]', space=smem, size = 0x4, offset = 0x4, fixed_abs, tag = 'smem constant byte address 0x4 - core index']
  #allocation1 [shape = 'u32[144,128]{1,0:T(1,128)}', space=vmem, size = 0x12000, scoped, tag = 'internal scratch']
  %s0 = inlined_call_operand.vmem [shape: bf16[192,160], index: 0, kind: input, shape index: {}]
  %s1 = inlined_call_operand.vmem [shape: bf16[160,512], index: 1, kind: input, shape index: {}]
  %s2 = inlined_call_operand.vmem [shape: f32[1,512], index: 2, kind: input, shape index: {}]
  %s3 = inlined_call_operand.vmem [shape: bf16[320,192], index: 3, kind: input, shape index: {}]
  %s4 = inlined_call_operand.vmem [shape: bf16[320,192], index: 4, kind: input, shape index: {}]
  %s5 = inlined_call_operand.vmem [shape: bf16[5,256,256], index: 5, kind: input, shape index: {}]
  %s6 = inlined_call_operand.vmem [shape: f32[1,256], index: 6, kind: input, shape index: {}]
  %s7 = inlined_call_operand.vmem [shape: bf16[32,64], index: 7, kind: input, shape index: {}]
  %s8 = inlined_call_operand.hbm [shape: bf16[32,64], index: 8, kind: input, shape index: {}]
  %s9 = inlined_call_operand.vmem [shape: bf16[4,128,512], index: 9, kind: input, shape index: {}]
  %s10 = inlined_call_operand.hbm [shape: f32[1,512], index: 10, kind: input, shape index: {}]
  %s11 = inlined_call_operand.vmem [shape: bf16[512,128], index: 11, kind: input, shape index: {}]
  %s12 = inlined_call_operand.hbm [shape: f32[1,128], index: 12, kind: input, shape index: {}]
  %s13 = inlined_call_operand.vmem [shape: f32[8,128], index: 13, kind: output, shape index: {}]
  %s14 = sld [smem:[#allocation0]]
  $region74: #{cnn_forward.1} parent=0
    _
  %s16 = ssub.s32 1, %s14
  %s17 = scalar_select 0, %s16, %s14
  $region1: #{cnn_forward.1} parent=0
    #allocation2 [shape = 'u8[8192]{0}', space=vmem, size = 0x2000, scoped, tag = 'input window, operand 8, single buffered']
    #allocation3 [shape = 's32[1]{0}', space=sflag, size = 0x4, scoped, tag = 'scoped memory for cnn_forward.1']
    #allocation4 [shape = 'u8[2048]{0}', space=vmem, size = 0x800, scoped, tag = 'input window, operand 10, single buffered']
    #allocation5 [shape = 's32[1]{0}', space=sflag, size = 0x4, scoped, tag = 'scoped memory for cnn_forward.1']
    #allocation6 [shape = 'u8[512]{0}', space=vmem, size = 0x400, scoped, tag = 'input window, operand 12, single buffered']
    %18 = vsyncpa [#allocation3], 0
    %19 = vsyncpa [#allocation5], 0
    // Predicated region
    $region2: #{cnn_forward.1} parent=1 // pred_check
      _
    $region3: #{cnn_forward.1} parent=1 // pred_check_branch
      %21 = sbr.rel (0) target = $region5
    $region4: #{cnn_forward.1} parent=1 // pred_region
      _
    $region5: #{cnn_forward.1} parent=1 // pred_fallthru
      _
    // Predicated region
    $region6: #{cnn_forward.1} parent=1 // pred_check
      _
    $region7: #{cnn_forward.1} parent=1 // pred_check_branch
      %23 = sbr.rel (0) target = $region9
    $region8: #{cnn_forward.1} parent=1 // pred_region
      _
    $region9: #{cnn_forward.1} parent=1 // pred_fallthru
      _
    // Predicated region
    $region10: #{cnn_forward.1} parent=1 // pred_check
      _
    $region11: #{cnn_forward.1} parent=1 // pred_check_branch
      %25 = sbr.rel (0) target = $region13
    $region12: #{cnn_forward.1} parent=1 // pred_region
      _
    $region13: #{cnn_forward.1} parent=1 // pred_fallthru
      _
    // Predicated region
    $region14: #{cnn_forward.1} parent=1 // pred_check
      _
    $region15: #{cnn_forward.1} parent=1 // pred_check_branch
      %27 = sbr.rel (0) target = $region17
    $region16: #{cnn_forward.1} parent=1 // pred_region
      _
    $region17: #{cnn_forward.1} parent=1 // pred_fallthru
      _
    // Predicated region
    $region18: #{cnn_forward.1} parent=1 // pred_check
      _
    $region19: #{cnn_forward.1} parent=1 // pred_check_branch
      %29 = sbr.rel (0) target = $region21
    $region20: #{cnn_forward.1} parent=1 // pred_region
      _
    $region21: #{cnn_forward.1} parent=1 // pred_fallthru
      _
    // Predicated region
    $region22: #{cnn_forward.1} parent=1 // pred_check
      _
    $region23: #{cnn_forward.1} parent=1 // pred_check_branch
      %31 = sbr.rel (0) target = $region25
    $region24: #{cnn_forward.1} parent=1 // pred_region
      _
    $region25: #{cnn_forward.1} parent=1 // pred_fallthru
      _
    // Predicated region
    $region26: #{cnn_forward.1} parent=1 // pred_check
      _
    $region27: #{cnn_forward.1} parent=1 // pred_check_branch
      %33 = sbr.rel (0) target = $region29
    $region28: #{cnn_forward.1} parent=1 // pred_region
      _
    $region29: #{cnn_forward.1} parent=1 // pred_fallthru
      _
    // Predicated region
    $region30: #{cnn_forward.1} parent=1 // pred_check
      _
    $region31: #{cnn_forward.1} parent=1 // pred_check_branch
      %35 = sbr.rel (0) target = $region33
    $region32: #{cnn_forward.1} parent=1 // pred_region
      _
    $region33: #{cnn_forward.1} parent=1 // pred_fallthru
      _
    // Predicated region
    $region34: #{cnn_forward.1} parent=1 // pred_check
      _
    $region35: #{cnn_forward.1} parent=1 // pred_check_branch
      %37 = sbr.rel (0) target = $region37
    $region36: #{cnn_forward.1} parent=1 // pred_region
      %s39 = ssub.s32 256, 256
      %40 = vsyncadd [#allocation3], %s39
      %s41 = sshll.u32 [#allocation2], 4
      %s42 = int_to_ptr.vmem [resolvable:$true] %s41
      %47 = dma.hbm_to_vmem [thread:$0]  %s8, 256, %s42, [#allocation3], 64, 64, 4
    $region37: #{cnn_forward.1} parent=1 // pred_fallthru
      _
    // Predicated region
    $region38: #{cnn_forward.1} parent=1 // pred_check
      _
    $region39: #{cnn_forward.1} parent=1 // pred_check_branch
      %49 = sbr.rel (0) target = $region41
    $region40: #{cnn_forward.1} parent=1 // pred_region
      _
    $region41: #{cnn_forward.1} parent=1 // pred_fallthru
      _
    // Predicated region
    $region42: #{cnn_forward.1} parent=1 // pred_check
      _
    $region43: #{cnn_forward.1} parent=1 // pred_check_branch
      %51 = sbr.rel (0) target = $region45
    $region44: #{cnn_forward.1} parent=1 // pred_region
      %s53 = ssub.s32 64, 64
      %54 = vsyncadd [#allocation5], %s53
      %s56 = sshll.u32 [#allocation4], 4
      %s57 = int_to_ptr.vmem [resolvable:$true] %s56
      %59 = dma.hbm_to_vmem [thread:$0]  %s10, 64, %s57, [#allocation5]
    $region45: #{cnn_forward.1} parent=1 // pred_fallthru
      _
    // Predicated region
    $region46: #{cnn_forward.1} parent=1 // pred_check
      _
    $region47: #{cnn_forward.1} parent=1 // pred_check_branch
      %61 = sbr.rel (0) target = $region49
    $region48: #{cnn_forward.1} parent=1 // pred_region
      _
    $region49: #{cnn_forward.1} parent=1 // pred_fallthru
      _
    // Predicated region
    $region50: #{cnn_forward.1} parent=1 // pred_check
      _
    $region51: #{cnn_forward.1} parent=1 // pred_check_branch
      %63 = sbr.rel (0) target = $region53
    $region52: #{cnn_forward.1} parent=1 // pred_region
      %s65 = ssub.s32 16, 16
      %66 = vsyncadd [#allocation5], %s65
      %s68 = sshll.u32 [#allocation6], 4
      %s69 = int_to_ptr.vmem [resolvable:$true] %s68
      %71 = dma.hbm_to_vmem [thread:$0]  %s12, 16, %s69, [#allocation5]
    $region53: #{cnn_forward.1} parent=1 // pred_fallthru
      _
    // Predicated region
    $region54: #{cnn_forward.1} parent=1 // pred_check
      _
    $region55: #{cnn_forward.1} parent=1 // pred_check_branch
      %73 = sbr.rel (0) target = $region57
    $region56: #{cnn_forward.1} parent=1 // pred_region
      %74 = dma.done [#allocation3], 256
    $region57: #{cnn_forward.1} parent=1 // pred_fallthru
      _
    // Predicated region
    $region58: #{cnn_forward.1} parent=1 // pred_check
      _
    $region59: #{cnn_forward.1} parent=1 // pred_check_branch
      %76 = sbr.rel (0) target = $region61
    $region60: #{cnn_forward.1} parent=1 // pred_region
      %77 = dma.done [#allocation5], 64
    $region61: #{cnn_forward.1} parent=1 // pred_fallthru
      _
    // Predicated region
    $region62: #{cnn_forward.1} parent=1 // pred_check
      _
    $region63: #{cnn_forward.1} parent=1 // pred_check_branch
      %79 = sbr.rel (0) target = $region65
    $region64: #{cnn_forward.1} parent=1 // pred_region
      %80 = dma.done [#allocation5], 16
    $region65: #{cnn_forward.1} parent=1 // pred_fallthru
      _
    %v82 = vld [vmem:[%s0] sm:$0xff]
    %v83 = vld [vmem:[%s0 + $0x8] sm:$0xff]
    %v84 = vld [vmem:[%s0 + $0x10] sm:$0xff]
    %v85 = vld [vmem:[%s0 + $0x18] sm:$0xff]
    %v86 = vld [vmem:[%s0 + $0x20] sm:$0xff]
    %v87 = vld [vmem:[%s0 + $0x28] sm:$0xff]
    %v88 = vld [vmem:[%s0 + $0x30] sm:$0xff]
    %v89 = vld [vmem:[%s0 + $0x38] sm:$0xff]
    %v90 = vld [vmem:[%s0 + $0x40] sm:$0xff]
    %v91 = vld [vmem:[%s0 + $0x48] sm:$0xff]
    %v92 = vld [vmem:[%s0 + $0x50] sm:$0xff]
    %v93 = vld [vmem:[%s0 + $0x58] sm:$0xff]
    %v94 = vld [vmem:[%s0 + $0x60] sm:$0xff]
    %v95 = vld [vmem:[%s0 + $0x68] sm:$0xff]
    %v96 = vld [vmem:[%s0 + $0x70] sm:$0xff]
    %v97 = vld [vmem:[%s0 + $0x78] sm:$0xff]
    %v98 = vld [vmem:[%s0 + $0x80] sm:$0xff]
    %v99 = vld [vmem:[%s0 + $0x88] sm:$0xff]
    %v100 = vld [vmem:[%s0 + $0x90] sm:$0xff]
    %v101 = vld [vmem:[%s0 + $0x98] sm:$0xff]
    %v102 = vld [vmem:[%s0 + $0xa0] sm:$0xff]
    %v103 = vld [vmem:[%s0 + $0xa8] sm:$0xff]
    %v104 = vld [vmem:[%s0 + $0xb0] sm:$0xff]
    %v105 = vld [vmem:[%s0 + $0xb8] sm:$0xff]
    %v106 = vld [vmem:[%s1] sm:$0xff]
    %v107 = vld [vmem:[%s1 + $0x8] sm:$0xff]
    %v108 = vld [vmem:[%s1 + $0x10] sm:$0xff]
    %v109 = vld [vmem:[%s1 + $0x18] sm:$0xff]
    %v110 = vld [vmem:[%s1 + $0x20] sm:$0xff]
    %v111 = vld [vmem:[%s1 + $0x28] sm:$0xff]
    %v112 = vld [vmem:[%s1 + $0x30] sm:$0xff]
    %v113 = vld [vmem:[%s1 + $0x38] sm:$0xff]
    %v114 = vld [vmem:[%s1 + $0x40] sm:$0xff]
    %v115 = vld [vmem:[%s1 + $0x48] sm:$0xff]
    %v116 = vld [vmem:[%s1 + $0x50] sm:$0xff]
    %v117 = vld [vmem:[%s1 + $0x58] sm:$0xff]
    %v118 = vld [vmem:[%s1 + $0x60] sm:$0xff]
    %v119 = vld [vmem:[%s1 + $0x68] sm:$0xff]
    %v120 = vld [vmem:[%s1 + $0x70] sm:$0xff]
    %v121 = vld [vmem:[%s1 + $0x78] sm:$0xff]
    %v122 = vld [vmem:[%s1 + $0x80] sm:$0xff]
    %v123 = vld [vmem:[%s1 + $0x88] sm:$0xff]
    %v124 = vld [vmem:[%s1 + $0x90] sm:$0xff]
    %v125 = vld [vmem:[%s1 + $0x98] sm:$0xff]
    %v126 = vld [vmem:[%s1 + $0xa0] sm:$0xff]
    %v127 = vld [vmem:[%s1 + $0xa8] sm:$0xff]
    %v128 = vld [vmem:[%s1 + $0xb0] sm:$0xff]
    %v129 = vld [vmem:[%s1 + $0xb8] sm:$0xff]
    %v130 = vld [vmem:[%s1 + $0xc0] sm:$0xff]
    %v131 = vld [vmem:[%s1 + $0xc8] sm:$0xff]
    %v132 = vld [vmem:[%s1 + $0xd0] sm:$0xff]
    %v133 = vld [vmem:[%s1 + $0xd8] sm:$0xff]
    %v134 = vld [vmem:[%s1 + $0xe0] sm:$0xff]
    %v135 = vld [vmem:[%s1 + $0xe8] sm:$0xff]
    %v136 = vld [vmem:[%s1 + $0xf0] sm:$0xff]
    %v137 = vld [vmem:[%s1 + $0xf8] sm:$0xff]
    %v138 = vld [vmem:[%s1 + $0x100] sm:$0xff]
    %v139 = vld [vmem:[%s1 + $0x108] sm:$0xff]
    %v140 = vld [vmem:[%s1 + $0x110] sm:$0xff]
    %v141 = vld [vmem:[%s1 + $0x118] sm:$0xff]
    %v142 = vld [vmem:[%s1 + $0x120] sm:$0xff]
    %v143 = vld [vmem:[%s1 + $0x128] sm:$0xff]
    %v144 = vld [vmem:[%s1 + $0x130] sm:$0xff]
    %v145 = vld [vmem:[%s1 + $0x138] sm:$0xff]
    %v146 = vld [vmem:[%s2] sm:$0xf]
    %v148 = vlaneseq
    %v149 = vshrl.u32 %v148, 7
    %v150 = vsub.s32 0, %v149
    %v151 = vrot.slane %v146, %v150
    %v152 = vlaneseq
    %v153 = vshrl.u32 %v152, 7
    %v154 = vsub.s32 1, %v153
    %v155 = vrot.slane %v146, %v154
    %v156 = vlaneseq
    %v157 = vshrl.u32 %v156, 7
    %v158 = vsub.s32 2, %v157
    %v159 = vrot.slane %v146, %v158
    %v160 = vlaneseq
    %v161 = vshrl.u32 %v160, 7
    %v162 = vsub.s32 3, %v161
    %v163 = vrot.slane %v146, %v162
    %v192 = vunpack.c.l.b16 %v82
    %v193 = vunpack.c.h.b16 %v82
    %v194 = vunpack.c.l.b16 %v83
    %v195 = vunpack.c.h.b16 %v83
    %v196 = vunpack.c.l.b16 %v84
    %v197 = vunpack.c.h.b16 %v84
    %v198 = vunpack.c.l.b16 %v85
    %v199 = vunpack.c.h.b16 %v85
    %v200 = vunpack.c.l.b16 %v86
    %v201 = vunpack.c.h.b16 %v86
    %v202 = vunpack.c.l.b16 %v87
    %v203 = vunpack.c.h.b16 %v87
    %v204 = vunpack.c.l.b16 %v88
    %v205 = vunpack.c.h.b16 %v88
    %v206 = vunpack.c.l.b16 %v89
    %v207 = vunpack.c.h.b16 %v89
    %v208 = vunpack.c.l.b16 %v90
    %v209 = vunpack.c.h.b16 %v90
    %v210 = vunpack.c.l.b16 %v91
    %v211 = vunpack.c.h.b16 %v91
    %v212 = vunpack.c.l.b16 %v92
    %v213 = vunpack.c.h.b16 %v92
    %v214 = vunpack.c.l.b16 %v93
    %v215 = vunpack.c.h.b16 %v93
    %v216 = vunpack.c.l.b16 %v94
    %v217 = vunpack.c.h.b16 %v94
    %v218 = vunpack.c.l.b16 %v95
    %v219 = vunpack.c.h.b16 %v95
    %v220 = vunpack.c.l.b16 %v96
    %v221 = vunpack.c.h.b16 %v96
    %v222 = vunpack.c.l.b16 %v97
    %v223 = vunpack.c.h.b16 %v97
    %v224 = vunpack.c.l.b16 %v98
    %v225 = vunpack.c.h.b16 %v98
    %v226 = vunpack.c.l.b16 %v99
    %v227 = vunpack.c.h.b16 %v99
    %v228 = vunpack.c.l.b16 %v100
    %v229 = vunpack.c.h.b16 %v100
    %v230 = vunpack.c.l.b16 %v101
    %v231 = vunpack.c.h.b16 %v101
    %v232 = vunpack.c.l.b16 %v102
    %v233 = vunpack.c.h.b16 %v102
    %v234 = vunpack.c.l.b16 %v103
    %v235 = vunpack.c.h.b16 %v103
    %v236 = vunpack.c.l.b16 %v104
    %v237 = vunpack.c.h.b16 %v104
    %v238 = vunpack.c.l.b16 %v105
    %v239 = vunpack.c.h.b16 %v105
    %v240 = vpack.c.b16 %v194, %v192
    %v241 = vpack.c.b16 %v195, %v193
    %v242 = vpack.c.b16 %v198, %v196
    %v243 = vpack.c.b16 %v199, %v197
    %v244 = vpack.c.b16 %v202, %v200
    %v245 = vpack.c.b16 %v203, %v201
    %v246 = vpack.c.b16 %v206, %v204
    %v247 = vpack.c.b16 %v207, %v205
    %v248 = vpack.c.b16 %v210, %v208
    %v249 = vpack.c.b16 %v211, %v209
    %v250 = vpack.c.b16 %v214, %v212
    %v251 = vpack.c.b16 %v215, %v213
    %v252 = vpack.c.b16 %v218, %v216
    %v253 = vpack.c.b16 %v219, %v217
    %v254 = vpack.c.b16 %v222, %v220
    %v255 = vpack.c.b16 %v223, %v221
    %v256 = vpack.c.b16 %v226, %v224
    %v257 = vpack.c.b16 %v227, %v225
    %v258 = vpack.c.b16 %v230, %v228
    %v259 = vpack.c.b16 %v231, %v229
    %v260 = vpack.c.b16 %v234, %v232
    %v261 = vpack.c.b16 %v235, %v233
    %v262 = vpack.c.b16 %v238, %v236
    %v263 = vpack.c.b16 %v239, %v237
    %v316 = vunpack.c.l.b16 %v106
    %v317 = vunpack.c.h.b16 %v106
    %v318 = vunpack.c.l.b16 %v107
    %v319 = vunpack.c.h.b16 %v107
    %v320 = vunpack.c.l.b16 %v108
    %v321 = vunpack.c.h.b16 %v108
    %v322 = vunpack.c.l.b16 %v109
    %v323 = vunpack.c.h.b16 %v109
    %v324 = vunpack.c.l.b16 %v110
    %v325 = vunpack.c.h.b16 %v110
    %v326 = vunpack.c.l.b16 %v111
    %v327 = vunpack.c.h.b16 %v111
    %v328 = vunpack.c.l.b16 %v112
    %v329 = vunpack.c.h.b16 %v112
    %v330 = vunpack.c.l.b16 %v113
    %v331 = vunpack.c.h.b16 %v113
    %v332 = vunpack.c.l.b16 %v114
    %v333 = vunpack.c.h.b16 %v114
    %v334 = vunpack.c.l.b16 %v115
    %v335 = vunpack.c.h.b16 %v115
    %v336 = vunpack.c.l.b16 %v116
    %v337 = vunpack.c.h.b16 %v116
    %v338 = vunpack.c.l.b16 %v117
    %v339 = vunpack.c.h.b16 %v117
    %v340 = vunpack.c.l.b16 %v118
    %v341 = vunpack.c.h.b16 %v118
    %v342 = vunpack.c.l.b16 %v119
    %v343 = vunpack.c.h.b16 %v119
    %v344 = vunpack.c.l.b16 %v120
    %v345 = vunpack.c.h.b16 %v120
    %v346 = vunpack.c.l.b16 %v121
    %v347 = vunpack.c.h.b16 %v121
    %v348 = vunpack.c.l.b16 %v122
    %v349 = vunpack.c.h.b16 %v122
    %v350 = vunpack.c.l.b16 %v123
    %v351 = vunpack.c.h.b16 %v123
    %v352 = vunpack.c.l.b16 %v124
    %v353 = vunpack.c.h.b16 %v124
    %v354 = vunpack.c.l.b16 %v125
    %v355 = vunpack.c.h.b16 %v125
    %v356 = vunpack.c.l.b16 %v126
    %v357 = vunpack.c.h.b16 %v126
    %v358 = vunpack.c.l.b16 %v127
    %v359 = vunpack.c.h.b16 %v127
    %v360 = vunpack.c.l.b16 %v128
    %v361 = vunpack.c.h.b16 %v128
    %v362 = vunpack.c.l.b16 %v129
    %v363 = vunpack.c.h.b16 %v129
    %v364 = vunpack.c.l.b16 %v130
    %v365 = vunpack.c.h.b16 %v130
    %v366 = vunpack.c.l.b16 %v131
    %v367 = vunpack.c.h.b16 %v131
    %v368 = vunpack.c.l.b16 %v132
    %v369 = vunpack.c.h.b16 %v132
    %v370 = vunpack.c.l.b16 %v133
    %v371 = vunpack.c.h.b16 %v133
    %v372 = vunpack.c.l.b16 %v134
    %v373 = vunpack.c.h.b16 %v134
    %v374 = vunpack.c.l.b16 %v135
    %v375 = vunpack.c.h.b16 %v135
    %v376 = vunpack.c.l.b16 %v136
    %v377 = vunpack.c.h.b16 %v136
    %v378 = vunpack.c.l.b16 %v137
    %v379 = vunpack.c.h.b16 %v137
    %v380 = vunpack.c.l.b16 %v138
    %v381 = vunpack.c.h.b16 %v138
    %v382 = vunpack.c.l.b16 %v139
    %v383 = vunpack.c.h.b16 %v139
    %v384 = vunpack.c.l.b16 %v140
    %v385 = vunpack.c.h.b16 %v140
    %v386 = vunpack.c.l.b16 %v141
    %v387 = vunpack.c.h.b16 %v141
    %v388 = vunpack.c.l.b16 %v142
    %v389 = vunpack.c.h.b16 %v142
    %v390 = vunpack.c.l.b16 %v143
    %v391 = vunpack.c.h.b16 %v143
    %v392 = vunpack.c.l.b16 %v144
    %v393 = vunpack.c.h.b16 %v144
    %v394 = vunpack.c.l.b16 %v145
    %v395 = vunpack.c.h.b16 %v145
    %v396 = vpack.c.b16 %v320, %v316
    %v397 = vpack.c.b16 %v321, %v317
    %v398 = vpack.c.b16 %v322, %v318
    %v399 = vpack.c.b16 %v323, %v319
    %v400 = vpack.c.b16 %v328, %v324
    %v401 = vpack.c.b16 %v329, %v325
    %v402 = vpack.c.b16 %v330, %v326
    %v403 = vpack.c.b16 %v331, %v327
    %v404 = vpack.c.b16 %v336, %v332
    %v405 = vpack.c.b16 %v337, %v333
    %v406 = vpack.c.b16 %v338, %v334
    %v407 = vpack.c.b16 %v339, %v335
    %v408 = vpack.c.b16 %v344, %v340
    %v409 = vpack.c.b16 %v345, %v341
    %v410 = vpack.c.b16 %v346, %v342
    %v411 = vpack.c.b16 %v347, %v343
    %v412 = vpack.c.b16 %v352, %v348
    %v413 = vpack.c.b16 %v353, %v349
    %v414 = vpack.c.b16 %v354, %v350
    %v415 = vpack.c.b16 %v355, %v351
    %v416 = vpack.c.b16 %v360, %v356
    %v417 = vpack.c.b16 %v361, %v357
    %v418 = vpack.c.b16 %v362, %v358
    %v419 = vpack.c.b16 %v363, %v359
    %v420 = vpack.c.b16 %v368, %v364
    %v421 = vpack.c.b16 %v369, %v365
    %v422 = vpack.c.b16 %v370, %v366
    %v423 = vpack.c.b16 %v371, %v367
    %v424 = vpack.c.b16 %v376, %v372
    %v425 = vpack.c.b16 %v377, %v373
    %v426 = vpack.c.b16 %v378, %v374
    %v427 = vpack.c.b16 %v379, %v375
    %v428 = vpack.c.b16 %v384, %v380
    %v429 = vpack.c.b16 %v385, %v381
    %v430 = vpack.c.b16 %v386, %v382
    %v431 = vpack.c.b16 %v387, %v383
    %v432 = vpack.c.b16 %v392, %v388
    %v433 = vpack.c.b16 %v393, %v389
    %v434 = vpack.c.b16 %v394, %v390
    %v435 = vpack.c.b16 %v395, %v391
    %vm476 = vcmask 261120
    %v478 = vsel %vm476, %v241, 0
    %v481 = vsel %vm476, %v243, 0
    %v484 = vsel %vm476, %v245, 0
    %v487 = vsel %vm476, %v247, 0
    %v490 = vsel %vm476, %v249, 0
    %v493 = vsel %vm476, %v251, 0
    %v496 = vsel %vm476, %v253, 0
    %v499 = vsel %vm476, %v255, 0
    %v502 = vsel %vm476, %v257, 0
    %v505 = vsel %vm476, %v259, 0
    %v508 = vsel %vm476, %v261, 0
    %v511 = vsel %vm476, %v263, 0
    %513 = vmatprep.subr.bf16.mxu0 %v397
    %514 = vmatpush1.bf16.msra.mxu0 %v396
    %515 = vmatprep.subr.bf16.mxu0 %v401
    %516 = vmatpush1.bf16.msra.mxu0 %v400
    %517 = vmatprep.subr.bf16.mxu0 %v405
    %518 = vmatpush1.bf16.msra.mxu0 %v404
    %519 = vmatprep.subr.bf16.mxu0 %v409
    %520 = vmatpush1.bf16.msra.mxu0 %v408
    %521 = vmatprep.subr.bf16.mxu0 %v413
    %522 = vmatpush1.bf16.msra.mxu0 %v412
    %523 = vmatprep.subr.bf16.mxu0 %v417
    %524 = vmatpush1.bf16.msra.mxu0 %v416
    %525 = vmatprep.subr.bf16.mxu0 %v421
    %526 = vmatpush1.bf16.msra.mxu0 %v420
    %527 = vmatprep.subr.bf16.mxu0 %v425
    %528 = vmatpush1.bf16.msra.mxu0 %v424
    %529 = vmatprep.subr.bf16.mxu0 %v429
    %530 = vmatpush1.bf16.msra.mxu0 %v428
    %531 = vmatprep.subr.bf16.mxu0 %v433
    %532 = vmatpush1.bf16.msra.mxu0 %v432
    %533 = vmatprep.subr.bf16.mxu0 0
    %534 = vmatpush1.bf16.msra.mxu0 0
    %535 = vmatprep.subr.bf16.mxu0 0
    %536 = vmatpush1.bf16.msra.mxu0 0
    %537 = vmatprep.subr.bf16.mxu0 0
    %538 = vmatpush1.bf16.msra.mxu0 0
    %539 = vmatprep.subr.bf16.mxu0 0
    %540 = vmatpush1.bf16.msra.mxu0 0
    %541 = vmatprep.subr.bf16.mxu0 0
    %542 = vmatpush1.bf16.msra.mxu0 0
    %543 = vmatprep.subr.bf16.mxu0 0
    %544 = vmatpush1.bf16.msra.mxu0 0
    %545 = vmatprep.mubr.bf16.mxu0 %v478
    %546 = vmatmul.mubr.bf16.gmra.mrb[0].mxu0 %v240
    %v547 = vpop.f32.mrb[0].mxu0
    %v548 = vadd.f32 %v151, %v547
    %v549 = vpop.f32.mrb[0].mxu0
    %v550 = vadd.f32 %v155, %v549
    %v551 = vpop.f32.mrb[0].mxu0
    %v552 = vadd.f32 %v151, %v551
    %v553 = vpop.f32.mrb[0].mxu0
    %v554 = vadd.f32 %v155, %v553
    %555 = vmatprep.mubr.bf16.mxu0 %v481
    %556 = vmatmul.mubr.bf16.gmra.mrb[0].mxu0 %v242
    %v557 = vpop.f32.mrb[0].mxu0
    %v558 = vadd.f32 %v151, %v557
    %v559 = vpop.f32.mrb[0].mxu0
    %v560 = vadd.f32 %v155, %v559
    %v561 = vpop.f32.mrb[0].mxu0
    %v562 = vadd.f32 %v151, %v561
    %v563 = vpop.f32.mrb[0].mxu0
    %v564 = vadd.f32 %v155, %v563
    %565 = vmatprep.mubr.bf16.mxu0 %v484
    %566 = vmatmul.mubr.bf16.gmra.mrb[0].mxu0 %v244
    %v567 = vpop.f32.mrb[0].mxu0
    %v568 = vadd.f32 %v151, %v567
    %v569 = vpop.f32.mrb[0].mxu0
    %v570 = vadd.f32 %v155, %v569
    %v571 = vpop.f32.mrb[0].mxu0
    %v572 = vadd.f32 %v151, %v571
    %v573 = vpop.f32.mrb[0].mxu0
    %v574 = vadd.f32 %v155, %v573
    %575 = vmatprep.mubr.bf16.mxu0 %v487
    %576 = vmatmul.mubr.bf16.gmra.mrb[0].mxu0 %v246
    %v577 = vpop.f32.mrb[0].mxu0
    %v578 = vadd.f32 %v151, %v577
    %v579 = vpop.f32.mrb[0].mxu0
    %v580 = vadd.f32 %v155, %v579
    %v581 = vpop.f32.mrb[0].mxu0
    %v582 = vadd.f32 %v151, %v581
    %v583 = vpop.f32.mrb[0].mxu0
    %v584 = vadd.f32 %v155, %v583
    %585 = vmatprep.mubr.bf16.mxu0 %v490
    %586 = vmatmul.mubr.bf16.gmra.mrb[0].mxu0 %v248
    %v587 = vpop.f32.mrb[0].mxu0
    %v588 = vadd.f32 %v151, %v587
    %v589 = vpop.f32.mrb[0].mxu0
    %v590 = vadd.f32 %v155, %v589
    %v591 = vpop.f32.mrb[0].mxu0
    %v592 = vadd.f32 %v151, %v591
    %v593 = vpop.f32.mrb[0].mxu0
    %v594 = vadd.f32 %v155, %v593
    %595 = vmatprep.mubr.bf16.mxu0 %v493
    %596 = vmatmul.mubr.bf16.gmra.mrb[0].mxu0 %v250
    %v597 = vpop.f32.mrb[0].mxu0
    %v598 = vadd.f32 %v151, %v597
    %v599 = vpop.f32.mrb[0].mxu0
    %v600 = vadd.f32 %v155, %v599
    %v601 = vpop.f32.mrb[0].mxu0
    %v602 = vadd.f32 %v151, %v601
    %v603 = vpop.f32.mrb[0].mxu0
    %v604 = vadd.f32 %v155, %v603
    %605 = vmatprep.mubr.bf16.mxu0 %v496
    %606 = vmatmul.mubr.bf16.gmra.mrb[0].mxu0 %v252
    %v607 = vpop.f32.mrb[0].mxu0
    %v608 = vadd.f32 %v151, %v607
    %v609 = vpop.f32.mrb[0].mxu0
    %v610 = vadd.f32 %v155, %v609
    %v611 = vpop.f32.mrb[0].mxu0
    %v612 = vadd.f32 %v151, %v611
    %v613 = vpop.f32.mrb[0].mxu0
    %v614 = vadd.f32 %v155, %v613
    %615 = vmatprep.mubr.bf16.mxu0 %v499
    %616 = vmatmul.mubr.bf16.gmra.mrb[0].mxu0 %v254
    %v617 = vpop.f32.mrb[0].mxu0
    %v618 = vadd.f32 %v151, %v617
    %v619 = vpop.f32.mrb[0].mxu0
    %v620 = vadd.f32 %v155, %v619
    %v621 = vpop.f32.mrb[0].mxu0
    %v622 = vadd.f32 %v151, %v621
    %v623 = vpop.f32.mrb[0].mxu0
    %v624 = vadd.f32 %v155, %v623
    %625 = vmatprep.mubr.bf16.mxu0 %v502
    %626 = vmatmul.mubr.bf16.gmra.mrb[0].mxu0 %v256
    %v627 = vpop.f32.mrb[0].mxu0
    %v628 = vadd.f32 %v151, %v627
    %v629 = vpop.f32.mrb[0].mxu0
    %v630 = vadd.f32 %v155, %v629
    %v631 = vpop.f32.mrb[0].mxu0
    %v632 = vadd.f32 %v151, %v631
    %v633 = vpop.f32.mrb[0].mxu0
    %v634 = vadd.f32 %v155, %v633
    %635 = vmatprep.mubr.bf16.mxu0 %v505
    %636 = vmatmul.mubr.bf16.gmra.mrb[0].mxu0 %v258
    %v637 = vpop.f32.mrb[0].mxu0
    %v638 = vadd.f32 %v151, %v637
    %v639 = vpop.f32.mrb[0].mxu0
    %v640 = vadd.f32 %v155, %v639
    %v641 = vpop.f32.mrb[0].mxu0
    %v642 = vadd.f32 %v151, %v641
    %v643 = vpop.f32.mrb[0].mxu0
    %v644 = vadd.f32 %v155, %v643
    %645 = vmatprep.mubr.bf16.mxu0 %v508
    %646 = vmatmul.mubr.bf16.gmra.mrb[0].mxu0 %v260
    %v647 = vpop.f32.mrb[0].mxu0
    %v648 = vadd.f32 %v151, %v647
    %v649 = vpop.f32.mrb[0].mxu0
    %v650 = vadd.f32 %v155, %v649
    %v651 = vpop.f32.mrb[0].mxu0
    %v652 = vadd.f32 %v151, %v651
    %v653 = vpop.f32.mrb[0].mxu0
    %v654 = vadd.f32 %v155, %v653
    %655 = vmatprep.mubr.bf16.mxu0 %v511
    %656 = vmatmul.mubr.bf16.gmra.mrb[0].mxu0 %v262
    %v657 = vpop.f32.mrb[0].mxu0
    %v658 = vadd.f32 %v151, %v657
    %v659 = vpop.f32.mrb[0].mxu0
    %v660 = vadd.f32 %v155, %v659
    %v661 = vpop.f32.mrb[0].mxu0
    %v662 = vadd.f32 %v151, %v661
    %v663 = vpop.f32.mrb[0].mxu0
    %v664 = vadd.f32 %v155, %v663
    %665 = vdwg.mxu0
    %666 = vmatprep.subr.bf16.mxu0 %v399
    %667 = vmatpush1.bf16.msra.mxu0 %v398
    %668 = vmatprep.subr.bf16.mxu0 %v403
    %669 = vmatpush1.bf16.msra.mxu0 %v402
    %670 = vmatprep.subr.bf16.mxu0 %v407
    %671 = vmatpush1.bf16.msra.mxu0 %v406
    %672 = vmatprep.subr.bf16.mxu0 %v411
    %673 = vmatpush1.bf16.msra.mxu0 %v410
    %674 = vmatprep.subr.bf16.mxu0 %v415
    %675 = vmatpush1.bf16.msra.mxu0 %v414
    %676 = vmatprep.subr.bf16.mxu0 %v419
    %677 = vmatpush1.bf16.msra.mxu0 %v418
    %678 = vmatprep.subr.bf16.mxu0 %v423
    %679 = vmatpush1.bf16.msra.mxu0 %v422
    %680 = vmatprep.subr.bf16.mxu0 %v427
    %681 = vmatpush1.bf16.msra.mxu0 %v426
    %682 = vmatprep.subr.bf16.mxu0 %v431
    %683 = vmatpush1.bf16.msra.mxu0 %v430
    %684 = vmatprep.subr.bf16.mxu0 %v435
    %685 = vmatpush1.bf16.msra.mxu0 %v434
    %686 = vmatprep.subr.bf16.mxu0 0
    %687 = vmatpush1.bf16.msra.mxu0 0
    %688 = vmatprep.subr.bf16.mxu0 0
    %689 = vmatpush1.bf16.msra.mxu0 0
    %690 = vmatprep.subr.bf16.mxu0 0
    %691 = vmatpush1.bf16.msra.mxu0 0
    %692 = vmatprep.subr.bf16.mxu0 0
    %693 = vmatpush1.bf16.msra.mxu0 0
    %694 = vmatprep.subr.bf16.mxu0 0
    %695 = vmatpush1.bf16.msra.mxu0 0
    %696 = vmatprep.subr.bf16.mxu0 0
    %697 = vmatpush1.bf16.msra.mxu0 0
    %698 = vmatprep.mubr.bf16.mxu0 %v478
    %699 = vmatmul.mubr.bf16.gmra.mrb[0].mxu0 %v240
    %v700 = vpop.f32.mrb[0].mxu0
    %v701 = vadd.f32 %v159, %v700
    %v702 = vpop.f32.mrb[0].mxu0
    %v703 = vadd.f32 %v163, %v702
    %v704 = vpop.f32.mrb[0].mxu0
    %v705 = vadd.f32 %v159, %v704
    %v706 = vpop.f32.mrb[0].mxu0
    %v707 = vadd.f32 %v163, %v706
    %708 = vmatprep.mubr.bf16.mxu0 %v481
    %709 = vmatmul.mubr.bf16.gmra.mrb[0].mxu0 %v242
    %v710 = vpop.f32.mrb[0].mxu0
    %v711 = vadd.f32 %v159, %v710
    %v712 = vpop.f32.mrb[0].mxu0
    %v713 = vadd.f32 %v163, %v712
    %v714 = vpop.f32.mrb[0].mxu0
    %v715 = vadd.f32 %v159, %v714
    %v716 = vpop.f32.mrb[0].mxu0
    %v717 = vadd.f32 %v163, %v716
    %718 = vmatprep.mubr.bf16.mxu0 %v484
    %719 = vmatmul.mubr.bf16.gmra.mrb[0].mxu0 %v244
    %v720 = vpop.f32.mrb[0].mxu0
    %v721 = vadd.f32 %v159, %v720
    %v722 = vpop.f32.mrb[0].mxu0
    %v723 = vadd.f32 %v163, %v722
    %v724 = vpop.f32.mrb[0].mxu0
    %v725 = vadd.f32 %v159, %v724
    %v726 = vpop.f32.mrb[0].mxu0
    %v727 = vadd.f32 %v163, %v726
    %728 = vmatprep.mubr.bf16.mxu0 %v487
    %729 = vmatmul.mubr.bf16.gmra.mrb[0].mxu0 %v246
    %v730 = vpop.f32.mrb[0].mxu0
    %v731 = vadd.f32 %v159, %v730
    %v732 = vpop.f32.mrb[0].mxu0
    %v733 = vadd.f32 %v163, %v732
    %v734 = vpop.f32.mrb[0].mxu0
    %v735 = vadd.f32 %v159, %v734
    %v736 = vpop.f32.mrb[0].mxu0
    %v737 = vadd.f32 %v163, %v736
    %738 = vmatprep.mubr.bf16.mxu0 %v490
    %739 = vmatmul.mubr.bf16.gmra.mrb[0].mxu0 %v248
    %v740 = vpop.f32.mrb[0].mxu0
    %v741 = vadd.f32 %v159, %v740
    %v742 = vpop.f32.mrb[0].mxu0
    %v743 = vadd.f32 %v163, %v742
    %v744 = vpop.f32.mrb[0].mxu0
    %v745 = vadd.f32 %v159, %v744
    %v746 = vpop.f32.mrb[0].mxu0
    %v747 = vadd.f32 %v163, %v746
    %748 = vmatprep.mubr.bf16.mxu0 %v493
    %749 = vmatmul.mubr.bf16.gmra.mrb[0].mxu0 %v250
    %v750 = vpop.f32.mrb[0].mxu0
    %v751 = vadd.f32 %v159, %v750
    %v752 = vpop.f32.mrb[0].mxu0
    %v753 = vadd.f32 %v163, %v752
    %v754 = vpop.f32.mrb[0].mxu0
    %v755 = vadd.f32 %v159, %v754
    %v756 = vpop.f32.mrb[0].mxu0
    %v757 = vadd.f32 %v163, %v756
    %758 = vmatprep.mubr.bf16.mxu0 %v496
    %759 = vmatmul.mubr.bf16.gmra.mrb[0].mxu0 %v252
    %v760 = vpop.f32.mrb[0].mxu0
    %v761 = vadd.f32 %v159, %v760
    %v762 = vpop.f32.mrb[0].mxu0
    %v763 = vadd.f32 %v163, %v762
    %v764 = vpop.f32.mrb[0].mxu0
    %v765 = vadd.f32 %v159, %v764
    %v766 = vpop.f32.mrb[0].mxu0
    %v767 = vadd.f32 %v163, %v766
    %768 = vmatprep.mubr.bf16.mxu0 %v499
    %769 = vmatmul.mubr.bf16.gmra.mrb[0].mxu0 %v254
    %v770 = vpop.f32.mrb[0].mxu0
    %v771 = vadd.f32 %v159, %v770
    %v772 = vpop.f32.mrb[0].mxu0
    %v773 = vadd.f32 %v163, %v772
    %v774 = vpop.f32.mrb[0].mxu0
    %v775 = vadd.f32 %v159, %v774
    %v776 = vpop.f32.mrb[0].mxu0
    %v777 = vadd.f32 %v163, %v776
    %778 = vmatprep.mubr.bf16.mxu0 %v502
    %779 = vmatmul.mubr.bf16.gmra.mrb[0].mxu0 %v256
    %v780 = vpop.f32.mrb[0].mxu0
    %v781 = vadd.f32 %v159, %v780
    %v782 = vpop.f32.mrb[0].mxu0
    %v783 = vadd.f32 %v163, %v782
    %v784 = vpop.f32.mrb[0].mxu0
    %v785 = vadd.f32 %v159, %v784
    %v786 = vpop.f32.mrb[0].mxu0
    %v787 = vadd.f32 %v163, %v786
    %788 = vmatprep.mubr.bf16.mxu0 %v505
    %789 = vmatmul.mubr.bf16.gmra.mrb[0].mxu0 %v258
    %v790 = vpop.f32.mrb[0].mxu0
    %v791 = vadd.f32 %v159, %v790
    %v792 = vpop.f32.mrb[0].mxu0
    %v793 = vadd.f32 %v163, %v792
    %v794 = vpop.f32.mrb[0].mxu0
    %v795 = vadd.f32 %v159, %v794
    %v796 = vpop.f32.mrb[0].mxu0
    %v797 = vadd.f32 %v163, %v796
    %798 = vmatprep.mubr.bf16.mxu0 %v508
    %799 = vmatmul.mubr.bf16.gmra.mrb[0].mxu0 %v260
    %v800 = vpop.f32.mrb[0].mxu0
    %v801 = vadd.f32 %v159, %v800
    %v802 = vpop.f32.mrb[0].mxu0
    %v803 = vadd.f32 %v163, %v802
    %v804 = vpop.f32.mrb[0].mxu0
    %v805 = vadd.f32 %v159, %v804
    %v806 = vpop.f32.mrb[0].mxu0
    %v807 = vadd.f32 %v163, %v806
    %808 = vmatprep.mubr.bf16.mxu0 %v511
    %809 = vmatmul.mubr.bf16.gmra.mrb[0].mxu0 %v262
    %v810 = vpop.f32.mrb[0].mxu0
    %v811 = vadd.f32 %v159, %v810
    %v812 = vpop.f32.mrb[0].mxu0
    %v813 = vadd.f32 %v163, %v812
    %v814 = vpop.f32.mrb[0].mxu0
    %v815 = vadd.f32 %v159, %v814
    %v816 = vpop.f32.mrb[0].mxu0
    %v817 = vadd.f32 %v163, %v816
    %818 = vdwg.mxu0
    %v819 = vmax.f32 %v548, 0.0
    %v820 = vmax.f32 %v550, 0.0
    %v821 = vmax.f32 %v701, 0.0
    %v822 = vmax.f32 %v703, 0.0
    %v823 = vmax.f32 %v552, 0.0
    %v824 = vmax.f32 %v554, 0.0
    %v825 = vmax.f32 %v705, 0.0
    %v826 = vmax.f32 %v707, 0.0
    %v827 = vmax.f32 %v558, 0.0
    %v828 = vmax.f32 %v560, 0.0
    %v829 = vmax.f32 %v711, 0.0
    %v830 = vmax.f32 %v713, 0.0
    %v831 = vmax.f32 %v562, 0.0
    %v832 = vmax.f32 %v564, 0.0
    %v833 = vmax.f32 %v715, 0.0
    %v834 = vmax.f32 %v717, 0.0
    %v835 = vmax.f32 %v568, 0.0
    %v836 = vmax.f32 %v570, 0.0
    %v837 = vmax.f32 %v721, 0.0
    %v838 = vmax.f32 %v723, 0.0
    %v839 = vmax.f32 %v572, 0.0
    %v840 = vmax.f32 %v574, 0.0
    %v841 = vmax.f32 %v725, 0.0
    %v842 = vmax.f32 %v727, 0.0
    %v843 = vmax.f32 %v578, 0.0
    %v844 = vmax.f32 %v580, 0.0
    %v845 = vmax.f32 %v731, 0.0
    %v846 = vmax.f32 %v733, 0.0
    %v847 = vmax.f32 %v582, 0.0
    %v848 = vmax.f32 %v584, 0.0
    %v849 = vmax.f32 %v735, 0.0
    %v850 = vmax.f32 %v737, 0.0
    %v851 = vmax.f32 %v588, 0.0
    %v852 = vmax.f32 %v590, 0.0
    %v853 = vmax.f32 %v741, 0.0
    %v854 = vmax.f32 %v743, 0.0
    %v855 = vmax.f32 %v592, 0.0
    %v856 = vmax.f32 %v594, 0.0
    %v857 = vmax.f32 %v745, 0.0
    %v858 = vmax.f32 %v747, 0.0
    %v859 = vmax.f32 %v598, 0.0
    %v860 = vmax.f32 %v600, 0.0
    %v861 = vmax.f32 %v751, 0.0
    %v862 = vmax.f32 %v753, 0.0
    %v863 = vmax.f32 %v602, 0.0
    %v864 = vmax.f32 %v604, 0.0
    %v865 = vmax.f32 %v755, 0.0
    %v866 = vmax.f32 %v757, 0.0
    %v867 = vmax.f32 %v608, 0.0
    %v868 = vmax.f32 %v610, 0.0
    %v869 = vmax.f32 %v761, 0.0
    %v870 = vmax.f32 %v763, 0.0
    %v871 = vmax.f32 %v612, 0.0
    %v872 = vmax.f32 %v614, 0.0
    %v873 = vmax.f32 %v765, 0.0
    %v874 = vmax.f32 %v767, 0.0
    %v875 = vmax.f32 %v618, 0.0
    %v876 = vmax.f32 %v620, 0.0
    %v877 = vmax.f32 %v771, 0.0
    %v878 = vmax.f32 %v773, 0.0
    %v879 = vmax.f32 %v622, 0.0
    %v880 = vmax.f32 %v624, 0.0
    %v881 = vmax.f32 %v775, 0.0
    %v882 = vmax.f32 %v777, 0.0
    %v883 = vmax.f32 %v628, 0.0
    %v884 = vmax.f32 %v630, 0.0
    %v885 = vmax.f32 %v781, 0.0
    %v886 = vmax.f32 %v783, 0.0
    %v887 = vmax.f32 %v632, 0.0
    %v888 = vmax.f32 %v634, 0.0
    %v889 = vmax.f32 %v785, 0.0
    %v890 = vmax.f32 %v787, 0.0
    %v891 = vmax.f32 %v638, 0.0
    %v892 = vmax.f32 %v640, 0.0
    %v893 = vmax.f32 %v791, 0.0
    %v894 = vmax.f32 %v793, 0.0
    %v895 = vmax.f32 %v642, 0.0
    %v896 = vmax.f32 %v644, 0.0
    %v897 = vmax.f32 %v795, 0.0
    %v898 = vmax.f32 %v797, 0.0
    %v899 = vmax.f32 %v648, 0.0
    %v900 = vmax.f32 %v650, 0.0
    %v901 = vmax.f32 %v801, 0.0
    %v902 = vmax.f32 %v803, 0.0
    %v903 = vmax.f32 %v652, 0.0
    %v904 = vmax.f32 %v654, 0.0
    %v905 = vmax.f32 %v805, 0.0
    %v906 = vmax.f32 %v807, 0.0
    %v907 = vmax.f32 %v658, 0.0
    %v908 = vmax.f32 %v660, 0.0
    %v909 = vmax.f32 %v811, 0.0
    %v910 = vmax.f32 %v813, 0.0
    %v911 = vmax.f32 %v662, 0.0
    %v912 = vmax.f32 %v664, 0.0
    %v913 = vmax.f32 %v815, 0.0
    %v914 = vmax.f32 %v817, 0.0
    %v915 = vmax.f32 %v819, %v821
    %v916 = vmax.f32 %v820, %v822
    %v917 = vmax.f32 %v823, %v825
    %v918 = vmax.f32 %v824, %v826
    %v919 = vmax.f32 %v827, %v829
    %v920 = vmax.f32 %v828, %v830
    %v921 = vmax.f32 %v831, %v833
    %v922 = vmax.f32 %v832, %v834
    %v923 = vmax.f32 %v835, %v837
    %v924 = vmax.f32 %v836, %v838
    %v925 = vmax.f32 %v839, %v841
    %v926 = vmax.f32 %v840, %v842
    %v927 = vmax.f32 %v843, %v845
    %v928 = vmax.f32 %v844, %v846
    %v929 = vmax.f32 %v847, %v849
    %v930 = vmax.f32 %v848, %v850
    %v931 = vmax.f32 %v851, %v853
    %v932 = vmax.f32 %v852, %v854
    %v933 = vmax.f32 %v855, %v857
    %v934 = vmax.f32 %v856, %v858
    %v935 = vmax.f32 %v859, %v861
    %v936 = vmax.f32 %v860, %v862
    %v937 = vmax.f32 %v863, %v865
    %v938 = vmax.f32 %v864, %v866
    %v939 = vmax.f32 %v867, %v869
    %v940 = vmax.f32 %v868, %v870
    %v941 = vmax.f32 %v871, %v873
    %v942 = vmax.f32 %v872, %v874
    %v943 = vmax.f32 %v875, %v877
    %v944 = vmax.f32 %v876, %v878
    %v945 = vmax.f32 %v879, %v881
    %v946 = vmax.f32 %v880, %v882
    %v947 = vmax.f32 %v883, %v885
    %v948 = vmax.f32 %v884, %v886
    %v949 = vmax.f32 %v887, %v889
    %v950 = vmax.f32 %v888, %v890
    %v951 = vmax.f32 %v891, %v893
    %v952 = vmax.f32 %v892, %v894
    %v953 = vmax.f32 %v895, %v897
    %v954 = vmax.f32 %v896, %v898
    %v955 = vmax.f32 %v899, %v901
    %v956 = vmax.f32 %v900, %v902
    %v957 = vmax.f32 %v903, %v905
    %v958 = vmax.f32 %v904, %v906
    %v959 = vmax.f32 %v907, %v909
    %v960 = vmax.f32 %v908, %v910
    %v961 = vmax.f32 %v911, %v913
    %v962 = vmax.f32 %v912, %v914
    %v963 = vpack.c.bf16 %v917, %v915
    %v964 = vpack.c.bf16 %v918, %v916
    %v965 = vpack.c.bf16 %v921, %v919
    %v966 = vpack.c.bf16 %v922, %v920
    %v967 = vpack.c.bf16 %v925, %v923
    %v968 = vpack.c.bf16 %v926, %v924
    %v969 = vpack.c.bf16 %v929, %v927
    %v970 = vpack.c.bf16 %v930, %v928
    %v971 = vpack.c.bf16 %v933, %v931
    %v972 = vpack.c.bf16 %v934, %v932
    %v973 = vpack.c.bf16 %v937, %v935
    %v974 = vpack.c.bf16 %v938, %v936
    %v975 = vpack.c.bf16 %v941, %v939
    %v976 = vpack.c.bf16 %v942, %v940
    %v977 = vpack.c.bf16 %v945, %v943
    %v978 = vpack.c.bf16 %v946, %v944
    %v979 = vpack.c.bf16 %v949, %v947
    %v980 = vpack.c.bf16 %v950, %v948
    %v981 = vpack.c.bf16 %v953, %v951
    %v982 = vpack.c.bf16 %v954, %v952
    %v983 = vpack.c.bf16 %v957, %v955
    %v984 = vpack.c.bf16 %v958, %v956
    %v985 = vpack.c.bf16 %v961, %v959
    %v986 = vpack.c.bf16 %v962, %v960
    %v987 = vld [vmem:[%s3] sm:$0xff]
    %v988 = vld [vmem:[%s3 + $0x8] sm:$0xff]
    %v989 = vld [vmem:[%s3 + $0x10] sm:$0xff]
    %v990 = vld [vmem:[%s3 + $0x18] sm:$0xff]
    %v991 = vld [vmem:[%s3 + $0x20] sm:$0xff]
    %v992 = vld [vmem:[%s3 + $0x28] sm:$0xff]
    %v993 = vld [vmem:[%s3 + $0x30] sm:$0xff]
    %v994 = vld [vmem:[%s3 + $0x38] sm:$0xff]
    %v995 = vld [vmem:[%s3 + $0x40] sm:$0xff]
    %v996 = vld [vmem:[%s3 + $0x48] sm:$0xff]
    %v997 = vld [vmem:[%s3 + $0x50] sm:$0xff]
    %v998 = vld [vmem:[%s3 + $0x58] sm:$0xff]
    %v999 = vld [vmem:[%s3 + $0x60] sm:$0xff]
    %v1000 = vld [vmem:[%s3 + $0x68] sm:$0xff]
    %v1001 = vld [vmem:[%s3 + $0x70] sm:$0xff]
    %v1002 = vld [vmem:[%s3 + $0x78] sm:$0xff]
    %v1003 = vld [vmem:[%s3 + $0x80] sm:$0xff]
    %v1004 = vld [vmem:[%s3 + $0x88] sm:$0xff]
    %v1005 = vld [vmem:[%s3 + $0x90] sm:$0xff]
    %v1006 = vld [vmem:[%s3 + $0x98] sm:$0xff]
    %v1007 = vld [vmem:[%s3 + $0xa0] sm:$0xff]
    %v1008 = vld [vmem:[%s3 + $0xa8] sm:$0xff]
    %v1009 = vld [vmem:[%s3 + $0xb0] sm:$0xff]
    %v1010 = vld [vmem:[%s3 + $0xb8] sm:$0xff]
    %v1011 = vld [vmem:[%s3 + $0xc0] sm:$0xff]
    %v1012 = vld [vmem:[%s3 + $0xc8] sm:$0xff]
    %v1013 = vld [vmem:[%s3 + $0xd0] sm:$0xff]
    %v1014 = vld [vmem:[%s3 + $0xd8] sm:$0xff]
    %v1015 = vld [vmem:[%s3 + $0xe0] sm:$0xff]
    %v1016 = vld [vmem:[%s3 + $0xe8] sm:$0xff]
    %v1017 = vld [vmem:[%s3 + $0xf0] sm:$0xff]
    %v1018 = vld [vmem:[%s3 + $0xf8] sm:$0xff]
    %v1019 = vld [vmem:[%s3 + $0x100] sm:$0xff]
    %v1020 = vld [vmem:[%s3 + $0x108] sm:$0xff]
    %v1021 = vld [vmem:[%s3 + $0x110] sm:$0xff]
    %v1022 = vld [vmem:[%s3 + $0x118] sm:$0xff]
    %v1023 = vld [vmem:[%s3 + $0x120] sm:$0xff]
    %v1024 = vld [vmem:[%s3 + $0x128] sm:$0xff]
    %v1025 = vld [vmem:[%s3 + $0x130] sm:$0xff]
    %v1026 = vld [vmem:[%s3 + $0x138] sm:$0xff]
    %v1067 = vunpack.c.l.b16 %v987
    %v1068 = vunpack.c.h.b16 %v987
    %v1069 = vunpack.c.l.b16 %v988
    %v1070 = vunpack.c.h.b16 %v988
    %v1071 = vunpack.c.l.b16 %v989
    %v1072 = vunpack.c.h.b16 %v989
    %v1073 = vunpack.c.l.b16 %v990
    %v1074 = vunpack.c.h.b16 %v990
    %v1075 = vunpack.c.l.b16 %v991
    %v1076 = vunpack.c.h.b16 %v991
    %v1077 = vunpack.c.l.b16 %v992
    %v1078 = vunpack.c.h.b16 %v992
    %v1079 = vunpack.c.l.b16 %v993
    %v1080 = vunpack.c.h.b16 %v993
    %v1081 = vunpack.c.l.b16 %v994
    %v1082 = vunpack.c.h.b16 %v994
    %v1083 = vunpack.c.l.b16 %v995
    %v1084 = vunpack.c.h.b16 %v995
    %v1085 = vunpack.c.l.b16 %v996
    %v1086 = vunpack.c.h.b16 %v996
    %v1087 = vunpack.c.l.b16 %v997
    %v1088 = vunpack.c.h.b16 %v997
    %v1089 = vunpack.c.l.b16 %v998
    %v1090 = vunpack.c.h.b16 %v998
    %v1091 = vunpack.c.l.b16 %v999
    %v1092 = vunpack.c.h.b16 %v999
    %v1093 = vunpack.c.l.b16 %v1000
    %v1094 = vunpack.c.h.b16 %v1000
    %v1095 = vunpack.c.l.b16 %v1001
    %v1096 = vunpack.c.h.b16 %v1001
    %v1097 = vunpack.c.l.b16 %v1002
    %v1098 = vunpack.c.h.b16 %v1002
    %v1099 = vunpack.c.l.b16 %v1003
    %v1100 = vunpack.c.h.b16 %v1003
    %v1101 = vunpack.c.l.b16 %v1004
    %v1102 = vunpack.c.h.b16 %v1004
    %v1103 = vunpack.c.l.b16 %v1005
    %v1104 = vunpack.c.h.b16 %v1005
    %v1105 = vunpack.c.l.b16 %v1006
    %v1106 = vunpack.c.h.b16 %v1006
    %v1107 = vunpack.c.l.b16 %v1007
    %v1108 = vunpack.c.h.b16 %v1007
    %v1109 = vunpack.c.l.b16 %v1008
    %v1110 = vunpack.c.h.b16 %v1008
    %v1111 = vunpack.c.l.b16 %v1009
    %v1112 = vunpack.c.h.b16 %v1009
    %v1113 = vunpack.c.l.b16 %v1010
    %v1114 = vunpack.c.h.b16 %v1010
    %v1115 = vunpack.c.l.b16 %v1011
    %v1116 = vunpack.c.h.b16 %v1011
    %v1117 = vunpack.c.l.b16 %v1012
    %v1118 = vunpack.c.h.b16 %v1012
    %v1119 = vunpack.c.l.b16 %v1013
    %v1120 = vunpack.c.h.b16 %v1013
    %v1121 = vunpack.c.l.b16 %v1014
    %v1122 = vunpack.c.h.b16 %v1014
    %v1123 = vunpack.c.l.b16 %v1015
    %v1124 = vunpack.c.h.b16 %v1015
    %v1125 = vunpack.c.l.b16 %v1016
    %v1126 = vunpack.c.h.b16 %v1016
    %v1127 = vunpack.c.l.b16 %v1017
    %v1128 = vunpack.c.h.b16 %v1017
    %v1129 = vunpack.c.l.b16 %v1018
    %v1130 = vunpack.c.h.b16 %v1018
    %v1131 = vunpack.c.l.b16 %v1019
    %v1132 = vunpack.c.h.b16 %v1019
    %v1133 = vunpack.c.l.b16 %v1020
    %v1134 = vunpack.c.h.b16 %v1020
    %v1135 = vunpack.c.l.b16 %v1021
    %v1136 = vunpack.c.h.b16 %v1021
    %v1137 = vunpack.c.l.b16 %v1022
    %v1138 = vunpack.c.h.b16 %v1022
    %v1139 = vunpack.c.l.b16 %v1023
    %v1140 = vunpack.c.h.b16 %v1023
    %v1141 = vunpack.c.l.b16 %v1024
    %v1142 = vunpack.c.h.b16 %v1024
    %v1143 = vunpack.c.l.b16 %v1025
    %v1144 = vunpack.c.h.b16 %v1025
    %v1145 = vunpack.c.l.b16 %v1026
    %v1146 = vunpack.c.h.b16 %v1026
    %v1147 = vpack.c.b16 %v1069, %v1067
    %v1148 = vpack.c.b16 %v1070, %v1068
    %v1149 = vpack.c.b16 %v1073, %v1071
    %v1150 = vpack.c.b16 %v1074, %v1072
    %v1151 = vpack.c.b16 %v1077, %v1075
    %v1152 = vpack.c.b16 %v1078, %v1076
    %v1153 = vpack.c.b16 %v1081, %v1079
    %v1154 = vpack.c.b16 %v1082, %v1080
    %v1155 = vpack.c.b16 %v1085, %v1083
    %v1156 = vpack.c.b16 %v1086, %v1084
    %v1157 = vpack.c.b16 %v1089, %v1087
    %v1158 = vpack.c.b16 %v1090, %v1088
    %v1159 = vpack.c.b16 %v1093, %v1091
    %v1160 = vpack.c.b16 %v1094, %v1092
    %v1161 = vpack.c.b16 %v1097, %v1095
    %v1162 = vpack.c.b16 %v1098, %v1096
    %v1163 = vpack.c.b16 %v1101, %v1099
    %v1164 = vpack.c.b16 %v1102, %v1100
    %v1165 = vpack.c.b16 %v1105, %v1103
    %v1166 = vpack.c.b16 %v1106, %v1104
    %v1167 = vpack.c.b16 %v1109, %v1107
    %v1168 = vpack.c.b16 %v1110, %v1108
    %v1169 = vpack.c.b16 %v1113, %v1111
    %v1170 = vpack.c.b16 %v1114, %v1112
    %v1171 = vpack.c.b16 %v1117, %v1115
    %v1172 = vpack.c.b16 %v1118, %v1116
    %v1173 = vpack.c.b16 %v1121, %v1119
    %v1174 = vpack.c.b16 %v1122, %v1120
    %v1175 = vpack.c.b16 %v1125, %v1123
    %v1176 = vpack.c.b16 %v1126, %v1124
    %v1177 = vpack.c.b16 %v1129, %v1127
    %v1178 = vpack.c.b16 %v1130, %v1128
    %v1179 = vpack.c.b16 %v1133, %v1131
    %v1180 = vpack.c.b16 %v1134, %v1132
    %v1181 = vpack.c.b16 %v1137, %v1135
    %v1182 = vpack.c.b16 %v1138, %v1136
    %v1183 = vpack.c.b16 %v1141, %v1139
    %v1184 = vpack.c.b16 %v1142, %v1140
    %v1185 = vpack.c.b16 %v1145, %v1143
    %v1186 = vpack.c.b16 %v1146, %v1144
    %vm1207 = vcmask 523264
    %v1209 = vsel %vm1207, %v1148, 0
    %v1212 = vsel %vm1207, %v1150, 0
    %v1215 = vsel %vm1207, %v1152, 0
    %v1218 = vsel %vm1207, %v1154, 0
    %v1221 = vsel %vm1207, %v1156, 0
    %v1224 = vsel %vm1207, %v1158, 0
    %v1227 = vsel %vm1207, %v1160, 0
    %v1230 = vsel %vm1207, %v1162, 0
    %v1233 = vsel %vm1207, %v1164, 0
    %v1236 = vsel %vm1207, %v1166, 0
    %v1239 = vsel %vm1207, %v1168, 0
    %v1242 = vsel %vm1207, %v1170, 0
    %v1245 = vsel %vm1207, %v1172, 0
    %v1248 = vsel %vm1207, %v1174, 0
    %v1251 = vsel %vm1207, %v1176, 0
    %v1254 = vsel %vm1207, %v1178, 0
    %v1257 = vsel %vm1207, %v1180, 0
    %v1260 = vsel %vm1207, %v1182, 0
    %v1263 = vsel %vm1207, %v1184, 0
    %v1266 = vsel %vm1207, %v1186, 0
    %1268 = vmatprep.subr.bf16.mxu0 %v964
    %1269 = vmatpush1.bf16.msra.mxu0 %v963
    %1270 = vmatprep.subr.bf16.mxu0 %v966
    %1271 = vmatpush1.bf16.msra.mxu0 %v965
    %1272 = vmatprep.subr.bf16.mxu0 %v968
    %1273 = vmatpush1.bf16.msra.mxu0 %v967
    %1274 = vmatprep.subr.bf16.mxu0 %v970
    %1275 = vmatpush1.bf16.msra.mxu0 %v969
    %1276 = vmatprep.subr.bf16.mxu0 %v972
    %1277 = vmatpush1.bf16.msra.mxu0 %v971
    %1278 = vmatprep.subr.bf16.mxu0 %v974
    %1279 = vmatpush1.bf16.msra.mxu0 %v973
    %1280 = vmatprep.subr.bf16.mxu0 %v976
    %1281 = vmatpush1.bf16.msra.mxu0 %v975
    %1282 = vmatprep.subr.bf16.mxu0 %v978
    %1283 = vmatpush1.bf16.msra.mxu0 %v977
    %1284 = vmatprep.subr.bf16.mxu0 %v980
    %1285 = vmatpush1.bf16.msra.mxu0 %v979
    %1286 = vmatprep.subr.bf16.mxu0 %v982
    %1287 = vmatpush1.bf16.msra.mxu0 %v981
    %1288 = vmatprep.subr.bf16.mxu0 %v984
    %1289 = vmatpush1.bf16.msra.mxu0 %v983
    %1290 = vmatprep.subr.bf16.mxu0 %v986
    %1291 = vmatpush1.bf16.msra.mxu0 %v985
    %1292 = vmatprep.subr.bf16.mxu0 0
    %1293 = vmatpush1.bf16.msra.mxu0 0
    %1294 = vmatprep.subr.bf16.mxu0 0
    %1295 = vmatpush1.bf16.msra.mxu0 0
    %1296 = vmatprep.subr.bf16.mxu0 0
    %1297 = vmatpush1.bf16.msra.mxu0 0
    %1298 = vmatprep.subr.bf16.mxu0 0
    %1299 = vmatpush1.bf16.msra.mxu0 0
    %1300 = vmatprep.mubr.bf16.mxu0 %v1209
    %1301 = vmatmul.mubr.bf16.gmra.mrb[0].mxu0 %v1147
    %v1302 = vpop.f32.mrb[0].mxu0
    %v1303 = vadd.f32 0.0, %v1302
    %v1304 = vpop.f32.mrb[0].mxu0
    %v1305 = vadd.f32 0.0, %v1304
    %v1306 = vpop.f32.mrb[0].mxu0
    %v1307 = vadd.f32 0.0, %v1306
    %v1308 = vpop.f32.mrb[0].mxu0
    %v1309 = vadd.f32 0.0, %v1308
    %1310 = vmatprep.mubr.bf16.mxu0 %v1212
    %1311 = vmatmul.mubr.bf16.gmra.mrb[0].mxu0 %v1149
    %v1312 = vpop.f32.mrb[0].mxu0
    %v1313 = vadd.f32 0.0, %v1312
    %v1314 = vpop.f32.mrb[0].mxu0
    %v1315 = vadd.f32 0.0, %v1314
    %v1316 = vpop.f32.mrb[0].mxu0
    %v1317 = vadd.f32 0.0, %v1316
    %v1318 = vpop.f32.mrb[0].mxu0
    %v1319 = vadd.f32 0.0, %v1318
    %1320 = vmatprep.mubr.bf16.mxu0 %v1215
    %1321 = vmatmul.mubr.bf16.gmra.mrb[0].mxu0 %v1151
    %v1322 = vpop.f32.mrb[0].mxu0
    %v1323 = vadd.f32 0.0, %v1322
    %v1324 = vpop.f32.mrb[0].mxu0
    %v1325 = vadd.f32 0.0, %v1324
    %v1326 = vpop.f32.mrb[0].mxu0
    %v1327 = vadd.f32 0.0, %v1326
    %v1328 = vpop.f32.mrb[0].mxu0
    %v1329 = vadd.f32 0.0, %v1328
    %1330 = vmatprep.mubr.bf16.mxu0 %v1218
    %1331 = vmatmul.mubr.bf16.gmra.mrb[0].mxu0 %v1153
    %v1332 = vpop.f32.mrb[0].mxu0
    %v1333 = vadd.f32 0.0, %v1332
    %v1334 = vpop.f32.mrb[0].mxu0
    %v1335 = vadd.f32 0.0, %v1334
    %v1336 = vpop.f32.mrb[0].mxu0
    %v1337 = vadd.f32 0.0, %v1336
    %v1338 = vpop.f32.mrb[0].mxu0
    %v1339 = vadd.f32 0.0, %v1338
    %1340 = vmatprep.mubr.bf16.mxu0 %v1221
    %1341 = vmatmul.mubr.bf16.gmra.mrb[0].mxu0 %v1155
    %v1342 = vpop.f32.mrb[0].mxu0
    %v1343 = vadd.f32 0.0, %v1342
    %v1344 = vpop.f32.mrb[0].mxu0
    %v1345 = vadd.f32 0.0, %v1344
    %v1346 = vpop.f32.mrb[0].mxu0
    %v1347 = vadd.f32 0.0, %v1346
    %v1348 = vpop.f32.mrb[0].mxu0
    %v1349 = vadd.f32 0.0, %v1348
    %1350 = vmatprep.mubr.bf16.mxu0 %v1224
    %1351 = vmatmul.mubr.bf16.gmra.mrb[0].mxu0 %v1157
    %v1352 = vpop.f32.mrb[0].mxu0
    %v1353 = vadd.f32 0.0, %v1352
    %v1354 = vpop.f32.mrb[0].mxu0
    %v1355 = vadd.f32 0.0, %v1354
    %v1356 = vpop.f32.mrb[0].mxu0
    %v1357 = vadd.f32 0.0, %v1356
    %v1358 = vpop.f32.mrb[0].mxu0
    %v1359 = vadd.f32 0.0, %v1358
    %1360 = vmatprep.mubr.bf16.mxu0 %v1227
    %1361 = vmatmul.mubr.bf16.gmra.mrb[0].mxu0 %v1159
    %v1362 = vpop.f32.mrb[0].mxu0
    %v1363 = vadd.f32 0.0, %v1362
    %v1364 = vpop.f32.mrb[0].mxu0
    %v1365 = vadd.f32 0.0, %v1364
    %v1366 = vpop.f32.mrb[0].mxu0
    %v1367 = vadd.f32 0.0, %v1366
    %v1368 = vpop.f32.mrb[0].mxu0
    %v1369 = vadd.f32 0.0, %v1368
    %1370 = vmatprep.mubr.bf16.mxu0 %v1230
    %1371 = vmatmul.mubr.bf16.gmra.mrb[0].mxu0 %v1161
    %v1372 = vpop.f32.mrb[0].mxu0
    %v1373 = vadd.f32 0.0, %v1372
    %v1374 = vpop.f32.mrb[0].mxu0
    %v1375 = vadd.f32 0.0, %v1374
    %v1376 = vpop.f32.mrb[0].mxu0
    %v1377 = vadd.f32 0.0, %v1376
    %v1378 = vpop.f32.mrb[0].mxu0
    %v1379 = vadd.f32 0.0, %v1378
    %1380 = vmatprep.mubr.bf16.mxu0 %v1233
    %1381 = vmatmul.mubr.bf16.gmra.mrb[0].mxu0 %v1163
    %v1382 = vpop.f32.mrb[0].mxu0
    %v1383 = vadd.f32 0.0, %v1382
    %v1384 = vpop.f32.mrb[0].mxu0
    %v1385 = vadd.f32 0.0, %v1384
    %v1386 = vpop.f32.mrb[0].mxu0
    %v1387 = vadd.f32 0.0, %v1386
    %v1388 = vpop.f32.mrb[0].mxu0
    %v1389 = vadd.f32 0.0, %v1388
    %1390 = vmatprep.mubr.bf16.mxu0 %v1236
    %1391 = vmatmul.mubr.bf16.gmra.mrb[0].mxu0 %v1165
    %v1392 = vpop.f32.mrb[0].mxu0
    %v1393 = vadd.f32 0.0, %v1392
    %v1394 = vpop.f32.mrb[0].mxu0
    %v1395 = vadd.f32 0.0, %v1394
    %v1396 = vpop.f32.mrb[0].mxu0
    %v1397 = vadd.f32 0.0, %v1396
    %v1398 = vpop.f32.mrb[0].mxu0
    %v1399 = vadd.f32 0.0, %v1398
    %1400 = vmatprep.mubr.bf16.mxu0 %v1239
    %1401 = vmatmul.mubr.bf16.gmra.mrb[0].mxu0 %v1167
    %v1402 = vpop.f32.mrb[0].mxu0
    %v1403 = vadd.f32 0.0, %v1402
    %v1404 = vpop.f32.mrb[0].mxu0
    %v1405 = vadd.f32 0.0, %v1404
    %v1406 = vpop.f32.mrb[0].mxu0
    %v1407 = vadd.f32 0.0, %v1406
    %v1408 = vpop.f32.mrb[0].mxu0
    %v1409 = vadd.f32 0.0, %v1408
    %1410 = vmatprep.mubr.bf16.mxu0 %v1242
    %1411 = vmatmul.mubr.bf16.gmra.mrb[0].mxu0 %v1169
    %v1412 = vpop.f32.mrb[0].mxu0
    %v1413 = vadd.f32 0.0, %v1412
    %v1414 = vpop.f32.mrb[0].mxu0
    %v1415 = vadd.f32 0.0, %v1414
    %v1416 = vpop.f32.mrb[0].mxu0
    %v1417 = vadd.f32 0.0, %v1416
    %v1418 = vpop.f32.mrb[0].mxu0
    %v1419 = vadd.f32 0.0, %v1418
    %1420 = vmatprep.mubr.bf16.mxu0 %v1245
    %1421 = vmatmul.mubr.bf16.gmra.mrb[0].mxu0 %v1171
    %v1422 = vpop.f32.mrb[0].mxu0
    %v1423 = vadd.f32 0.0, %v1422
    %v1424 = vpop.f32.mrb[0].mxu0
    %v1425 = vadd.f32 0.0, %v1424
    %v1426 = vpop.f32.mrb[0].mxu0
    %v1427 = vadd.f32 0.0, %v1426
    %v1428 = vpop.f32.mrb[0].mxu0
    %v1429 = vadd.f32 0.0, %v1428
    %1430 = vmatprep.mubr.bf16.mxu0 %v1248
    %1431 = vmatmul.mubr.bf16.gmra.mrb[0].mxu0 %v1173
    %v1432 = vpop.f32.mrb[0].mxu0
    %v1433 = vadd.f32 0.0, %v1432
    %v1434 = vpop.f32.mrb[0].mxu0
    %v1435 = vadd.f32 0.0, %v1434
    %v1436 = vpop.f32.mrb[0].mxu0
    %v1437 = vadd.f32 0.0, %v1436
    %v1438 = vpop.f32.mrb[0].mxu0
    %v1439 = vadd.f32 0.0, %v1438
    %1440 = vmatprep.mubr.bf16.mxu0 %v1251
    %1441 = vmatmul.mubr.bf16.gmra.mrb[0].mxu0 %v1175
    %v1442 = vpop.f32.mrb[0].mxu0
    %v1443 = vadd.f32 0.0, %v1442
    %v1444 = vpop.f32.mrb[0].mxu0
    %v1445 = vadd.f32 0.0, %v1444
    %v1446 = vpop.f32.mrb[0].mxu0
    %v1447 = vadd.f32 0.0, %v1446
    %v1448 = vpop.f32.mrb[0].mxu0
    %v1449 = vadd.f32 0.0, %v1448
    %1450 = vmatprep.mubr.bf16.mxu0 %v1254
    %1451 = vmatmul.mubr.bf16.gmra.mrb[0].mxu0 %v1177
    %v1452 = vpop.f32.mrb[0].mxu0
    %v1453 = vadd.f32 0.0, %v1452
    %v1454 = vpop.f32.mrb[0].mxu0
    %v1455 = vadd.f32 0.0, %v1454
    %v1456 = vpop.f32.mrb[0].mxu0
    %v1457 = vadd.f32 0.0, %v1456
    %v1458 = vpop.f32.mrb[0].mxu0
    %v1459 = vadd.f32 0.0, %v1458
    %1460 = vmatprep.mubr.bf16.mxu0 %v1257
    %1461 = vmatmul.mubr.bf16.gmra.mrb[0].mxu0 %v1179
    %v1462 = vpop.f32.mrb[0].mxu0
    %v1463 = vadd.f32 0.0, %v1462
    %v1464 = vpop.f32.mrb[0].mxu0
    %v1465 = vadd.f32 0.0, %v1464
    %v1466 = vpop.f32.mrb[0].mxu0
    %v1467 = vadd.f32 0.0, %v1466
    %v1468 = vpop.f32.mrb[0].mxu0
    %v1469 = vadd.f32 0.0, %v1468
    %1470 = vmatprep.mubr.bf16.mxu0 %v1260
    %1471 = vmatmul.mubr.bf16.gmra.mrb[0].mxu0 %v1181
    %v1472 = vpop.f32.mrb[0].mxu0
    %v1473 = vadd.f32 0.0, %v1472
    %v1474 = vpop.f32.mrb[0].mxu0
    %v1475 = vadd.f32 0.0, %v1474
    %v1476 = vpop.f32.mrb[0].mxu0
    %v1477 = vadd.f32 0.0, %v1476
    %v1478 = vpop.f32.mrb[0].mxu0
    %v1479 = vadd.f32 0.0, %v1478
    %1480 = vmatprep.mubr.bf16.mxu0 %v1263
    %1481 = vmatmul.mubr.bf16.gmra.mrb[0].mxu0 %v1183
    %v1482 = vpop.f32.mrb[0].mxu0
    %v1483 = vadd.f32 0.0, %v1482
    %v1484 = vpop.f32.mrb[0].mxu0
    %v1485 = vadd.f32 0.0, %v1484
    %v1486 = vpop.f32.mrb[0].mxu0
    %v1487 = vadd.f32 0.0, %v1486
    %v1488 = vpop.f32.mrb[0].mxu0
    %v1489 = vadd.f32 0.0, %v1488
    %1490 = vmatprep.mubr.bf16.mxu0 %v1266
    %1491 = vmatmul.mubr.bf16.gmra.mrb[0].mxu0 %v1185
    %v1492 = vpop.f32.mrb[0].mxu0
    %v1493 = vadd.f32 0.0, %v1492
    %v1494 = vpop.f32.mrb[0].mxu0
    %v1495 = vadd.f32 0.0, %v1494
    %v1496 = vpop.f32.mrb[0].mxu0
    %v1497 = vadd.f32 0.0, %v1496
    %v1498 = vpop.f32.mrb[0].mxu0
    %v1499 = vadd.f32 0.0, %v1498
    %1500 = vdwg.mxu0
    %v1501 = vld [vmem:[%s4] sm:$0xff]
    %v1502 = vld [vmem:[%s4 + $0x8] sm:$0xff]
    %v1503 = vld [vmem:[%s4 + $0x10] sm:$0xff]
    %v1504 = vld [vmem:[%s4 + $0x18] sm:$0xff]
    %v1505 = vld [vmem:[%s4 + $0x20] sm:$0xff]
    %v1506 = vld [vmem:[%s4 + $0x28] sm:$0xff]
    %v1507 = vld [vmem:[%s4 + $0x30] sm:$0xff]
    %v1508 = vld [vmem:[%s4 + $0x38] sm:$0xff]
    %v1509 = vld [vmem:[%s4 + $0x40] sm:$0xff]
    %v1510 = vld [vmem:[%s4 + $0x48] sm:$0xff]
    %v1511 = vld [vmem:[%s4 + $0x50] sm:$0xff]
    %v1512 = vld [vmem:[%s4 + $0x58] sm:$0xff]
    %v1513 = vld [vmem:[%s4 + $0x60] sm:$0xff]
    %v1514 = vld [vmem:[%s4 + $0x68] sm:$0xff]
    %v1515 = vld [vmem:[%s4 + $0x70] sm:$0xff]
    %v1516 = vld [vmem:[%s4 + $0x78] sm:$0xff]
    %v1517 = vld [vmem:[%s4 + $0x80] sm:$0xff]
    %v1518 = vld [vmem:[%s4 + $0x88] sm:$0xff]
    %v1519 = vld [vmem:[%s4 + $0x90] sm:$0xff]
    %v1520 = vld [vmem:[%s4 + $0x98] sm:$0xff]
    %v1521 = vld [vmem:[%s4 + $0xa0] sm:$0xff]
    %v1522 = vld [vmem:[%s4 + $0xa8] sm:$0xff]
    %v1523 = vld [vmem:[%s4 + $0xb0] sm:$0xff]
    %v1524 = vld [vmem:[%s4 + $0xb8] sm:$0xff]
    %v1525 = vld [vmem:[%s4 + $0xc0] sm:$0xff]
    %v1526 = vld [vmem:[%s4 + $0xc8] sm:$0xff]
    %v1527 = vld [vmem:[%s4 + $0xd0] sm:$0xff]
    %v1528 = vld [vmem:[%s4 + $0xd8] sm:$0xff]
    %v1529 = vld [vmem:[%s4 + $0xe0] sm:$0xff]
    %v1530 = vld [vmem:[%s4 + $0xe8] sm:$0xff]
    %v1531 = vld [vmem:[%s4 + $0xf0] sm:$0xff]
    %v1532 = vld [vmem:[%s4 + $0xf8] sm:$0xff]
    %v1533 = vld [vmem:[%s4 + $0x100] sm:$0xff]
    %v1534 = vld [vmem:[%s4 + $0x108] sm:$0xff]
    %v1535 = vld [vmem:[%s4 + $0x110] sm:$0xff]
    %v1536 = vld [vmem:[%s4 + $0x118] sm:$0xff]
    %v1537 = vld [vmem:[%s4 + $0x120] sm:$0xff]
    %v1538 = vld [vmem:[%s4 + $0x128] sm:$0xff]
    %v1539 = vld [vmem:[%s4 + $0x130] sm:$0xff]
    %v1540 = vld [vmem:[%s4 + $0x138] sm:$0xff]
    %v1581 = vunpack.c.l.b16 %v1501
    %v1582 = vunpack.c.h.b16 %v1501
    %v1583 = vunpack.c.l.b16 %v1502
    %v1584 = vunpack.c.h.b16 %v1502
    %v1585 = vunpack.c.l.b16 %v1503
    %v1586 = vunpack.c.h.b16 %v1503
    %v1587 = vunpack.c.l.b16 %v1504
    %v1588 = vunpack.c.h.b16 %v1504
    %v1589 = vunpack.c.l.b16 %v1505
    %v1590 = vunpack.c.h.b16 %v1505
    %v1591 = vunpack.c.l.b16 %v1506
    %v1592 = vunpack.c.h.b16 %v1506
    %v1593 = vunpack.c.l.b16 %v1507
    %v1594 = vunpack.c.h.b16 %v1507
    %v1595 = vunpack.c.l.b16 %v1508
    %v1596 = vunpack.c.h.b16 %v1508
    %v1597 = vunpack.c.l.b16 %v1509
    %v1598 = vunpack.c.h.b16 %v1509
    %v1599 = vunpack.c.l.b16 %v1510
    %v1600 = vunpack.c.h.b16 %v1510
    %v1601 = vunpack.c.l.b16 %v1511
    %v1602 = vunpack.c.h.b16 %v1511
    %v1603 = vunpack.c.l.b16 %v1512
    %v1604 = vunpack.c.h.b16 %v1512
    %v1605 = vunpack.c.l.b16 %v1513
    %v1606 = vunpack.c.h.b16 %v1513
    %v1607 = vunpack.c.l.b16 %v1514
    %v1608 = vunpack.c.h.b16 %v1514
    %v1609 = vunpack.c.l.b16 %v1515
    %v1610 = vunpack.c.h.b16 %v1515
    %v1611 = vunpack.c.l.b16 %v1516
    %v1612 = vunpack.c.h.b16 %v1516
    %v1613 = vunpack.c.l.b16 %v1517
    %v1614 = vunpack.c.h.b16 %v1517
    %v1615 = vunpack.c.l.b16 %v1518
    %v1616 = vunpack.c.h.b16 %v1518
    %v1617 = vunpack.c.l.b16 %v1519
    %v1618 = vunpack.c.h.b16 %v1519
    %v1619 = vunpack.c.l.b16 %v1520
    %v1620 = vunpack.c.h.b16 %v1520
    %v1621 = vunpack.c.l.b16 %v1521
    %v1622 = vunpack.c.h.b16 %v1521
    %v1623 = vunpack.c.l.b16 %v1522
    %v1624 = vunpack.c.h.b16 %v1522
    %v1625 = vunpack.c.l.b16 %v1523
    %v1626 = vunpack.c.h.b16 %v1523
    %v1627 = vunpack.c.l.b16 %v1524
    %v1628 = vunpack.c.h.b16 %v1524
    %v1629 = vunpack.c.l.b16 %v1525
    %v1630 = vunpack.c.h.b16 %v1525
    %v1631 = vunpack.c.l.b16 %v1526
    %v1632 = vunpack.c.h.b16 %v1526
    %v1633 = vunpack.c.l.b16 %v1527
    %v1634 = vunpack.c.h.b16 %v1527
    %v1635 = vunpack.c.l.b16 %v1528
    %v1636 = vunpack.c.h.b16 %v1528
    %v1637 = vunpack.c.l.b16 %v1529
    %v1638 = vunpack.c.h.b16 %v1529
    %v1639 = vunpack.c.l.b16 %v1530
    %v1640 = vunpack.c.h.b16 %v1530
    %v1641 = vunpack.c.l.b16 %v1531
    %v1642 = vunpack.c.h.b16 %v1531
    %v1643 = vunpack.c.l.b16 %v1532
    %v1644 = vunpack.c.h.b16 %v1532
    %v1645 = vunpack.c.l.b16 %v1533
    %v1646 = vunpack.c.h.b16 %v1533
    %v1647 = vunpack.c.l.b16 %v1534
    %v1648 = vunpack.c.h.b16 %v1534
    %v1649 = vunpack.c.l.b16 %v1535
    %v1650 = vunpack.c.h.b16 %v1535
    %v1651 = vunpack.c.l.b16 %v1536
    %v1652 = vunpack.c.h.b16 %v1536
    %v1653 = vunpack.c.l.b16 %v1537
    %v1654 = vunpack.c.h.b16 %v1537
    %v1655 = vunpack.c.l.b16 %v1538
    %v1656 = vunpack.c.h.b16 %v1538
    %v1657 = vunpack.c.l.b16 %v1539
    %v1658 = vunpack.c.h.b16 %v1539
    %v1659 = vunpack.c.l.b16 %v1540
    %v1660 = vunpack.c.h.b16 %v1540
    %v1661 = vpack.c.b16 %v1583, %v1581
    %v1662 = vpack.c.b16 %v1584, %v1582
    %v1663 = vpack.c.b16 %v1587, %v1585
    %v1664 = vpack.c.b16 %v1588, %v1586
    %v1665 = vpack.c.b16 %v1591, %v1589
    %v1666 = vpack.c.b16 %v1592, %v1590
    %v1667 = vpack.c.b16 %v1595, %v1593
    %v1668 = vpack.c.b16 %v1596, %v1594
    %v1669 = vpack.c.b16 %v1599, %v1597
    %v1670 = vpack.c.b16 %v1600, %v1598
    %v1671 = vpack.c.b16 %v1603, %v1601
    %v1672 = vpack.c.b16 %v1604, %v1602
    %v1673 = vpack.c.b16 %v1607, %v1605
    %v1674 = vpack.c.b16 %v1608, %v1606
    %v1675 = vpack.c.b16 %v1611, %v1609
    %v1676 = vpack.c.b16 %v1612, %v1610
    %v1677 = vpack.c.b16 %v1615, %v1613
    %v1678 = vpack.c.b16 %v1616, %v1614
    %v1679 = vpack.c.b16 %v1619, %v1617
    %v1680 = vpack.c.b16 %v1620, %v1618
    %v1681 = vpack.c.b16 %v1623, %v1621
    %v1682 = vpack.c.b16 %v1624, %v1622
    %v1683 = vpack.c.b16 %v1627, %v1625
    %v1684 = vpack.c.b16 %v1628, %v1626
    %v1685 = vpack.c.b16 %v1631, %v1629
    %v1686 = vpack.c.b16 %v1632, %v1630
    %v1687 = vpack.c.b16 %v1635, %v1633
    %v1688 = vpack.c.b16 %v1636, %v1634
    %v1689 = vpack.c.b16 %v1639, %v1637
    %v1690 = vpack.c.b16 %v1640, %v1638
    %v1691 = vpack.c.b16 %v1643, %v1641
    %v1692 = vpack.c.b16 %v1644, %v1642
    %v1693 = vpack.c.b16 %v1647, %v1645
    %v1694 = vpack.c.b16 %v1648, %v1646
    %v1695 = vpack.c.b16 %v1651, %v1649
    %v1696 = vpack.c.b16 %v1652, %v1650
    %v1697 = vpack.c.b16 %v1655, %v1653
    %v1698 = vpack.c.b16 %v1656, %v1654
    %v1699 = vpack.c.b16 %v1659, %v1657
    %v1700 = vpack.c.b16 %v1660, %v1658
    %v1722 = vsel %vm1207, %v1662, 0
    %v1725 = vsel %vm1207, %v1664, 0
    %v1728 = vsel %vm1207, %v1666, 0
    %v1731 = vsel %vm1207, %v1668, 0
    %v1734 = vsel %vm1207, %v1670, 0
    %v1737 = vsel %vm1207, %v1672, 0
    %v1740 = vsel %vm1207, %v1674, 0
    %v1743 = vsel %vm1207, %v1676, 0
    %v1746 = vsel %vm1207, %v1678, 0
    %v1749 = vsel %vm1207, %v1680, 0
    %v1752 = vsel %vm1207, %v1682, 0
    %v1755 = vsel %vm1207, %v1684, 0
    %v1758 = vsel %vm1207, %v1686, 0
    %v1761 = vsel %vm1207, %v1688, 0
    %v1764 = vsel %vm1207, %v1690, 0
    %v1767 = vsel %vm1207, %v1692, 0
    %v1770 = vsel %vm1207, %v1694, 0
    %v1773 = vsel %vm1207, %v1696, 0
    %v1776 = vsel %vm1207, %v1698, 0
    %v1779 = vsel %vm1207, %v1700, 0
    %1781 = vmatprep.subr.bf16.mxu0 %v964
    %1782 = vmatpush1.bf16.msra.mxu0 %v963
    %1783 = vmatprep.subr.bf16.mxu0 %v966
    %1784 = vmatpush1.bf16.msra.mxu0 %v965
    %1785 = vmatprep.subr.bf16.mxu0 %v968
    %1786 = vmatpush1.bf16.msra.mxu0 %v967
    %1787 = vmatprep.subr.bf16.mxu0 %v970
    %1788 = vmatpush1.bf16.msra.mxu0 %v969
    %1789 = vmatprep.subr.bf16.mxu0 %v972
    %1790 = vmatpush1.bf16.msra.mxu0 %v971
    %1791 = vmatprep.subr.bf16.mxu0 %v974
    %1792 = vmatpush1.bf16.msra.mxu0 %v973
    %1793 = vmatprep.subr.bf16.mxu0 %v976
    %1794 = vmatpush1.bf16.msra.mxu0 %v975
    %1795 = vmatprep.subr.bf16.mxu0 %v978
    %1796 = vmatpush1.bf16.msra.mxu0 %v977
    %1797 = vmatprep.subr.bf16.mxu0 %v980
    %1798 = vmatpush1.bf16.msra.mxu0 %v979
    %1799 = vmatprep.subr.bf16.mxu0 %v982
    %1800 = vmatpush1.bf16.msra.mxu0 %v981
    %1801 = vmatprep.subr.bf16.mxu0 %v984
    %1802 = vmatpush1.bf16.msra.mxu0 %v983
    %1803 = vmatprep.subr.bf16.mxu0 %v986
    %1804 = vmatpush1.bf16.msra.mxu0 %v985
    %1805 = vmatprep.subr.bf16.mxu0 0
    %1806 = vmatpush1.bf16.msra.mxu0 0
    %1807 = vmatprep.subr.bf16.mxu0 0
    %1808 = vmatpush1.bf16.msra.mxu0 0
    %1809 = vmatprep.subr.bf16.mxu0 0
    %1810 = vmatpush1.bf16.msra.mxu0 0
    %1811 = vmatprep.subr.bf16.mxu0 0
    %1812 = vmatpush1.bf16.msra.mxu0 0
    %1813 = vmatprep.mubr.bf16.mxu0 %v1722
    %1814 = vmatmul.mubr.bf16.gmra.mrb[0].mxu0 %v1661
    %v1815 = vpop.f32.mrb[0].mxu0
    %v1816 = vadd.f32 0.0, %v1815
    %v1817 = vpop.f32.mrb[0].mxu0
    %v1818 = vadd.f32 0.0, %v1817
    %v1819 = vpop.f32.mrb[0].mxu0
    %v1820 = vadd.f32 0.0, %v1819
    %v1821 = vpop.f32.mrb[0].mxu0
    %v1822 = vadd.f32 0.0, %v1821
    %1823 = vmatprep.mubr.bf16.mxu0 %v1725
    %1824 = vmatmul.mubr.bf16.gmra.mrb[0].mxu0 %v1663
    %v1825 = vpop.f32.mrb[0].mxu0
    %v1826 = vadd.f32 0.0, %v1825
    %v1827 = vpop.f32.mrb[0].mxu0
    %v1828 = vadd.f32 0.0, %v1827
    %v1829 = vpop.f32.mrb[0].mxu0
    %v1830 = vadd.f32 0.0, %v1829
    %v1831 = vpop.f32.mrb[0].mxu0
    %v1832 = vadd.f32 0.0, %v1831
    %1833 = vmatprep.mubr.bf16.mxu0 %v1728
    %1834 = vmatmul.mubr.bf16.gmra.mrb[0].mxu0 %v1665
    %v1835 = vpop.f32.mrb[0].mxu0
    %v1836 = vadd.f32 0.0, %v1835
    %v1837 = vpop.f32.mrb[0].mxu0
    %v1838 = vadd.f32 0.0, %v1837
    %v1839 = vpop.f32.mrb[0].mxu0
    %v1840 = vadd.f32 0.0, %v1839
    %v1841 = vpop.f32.mrb[0].mxu0
    %v1842 = vadd.f32 0.0, %v1841
    %1843 = vmatprep.mubr.bf16.mxu0 %v1731
    %1844 = vmatmul.mubr.bf16.gmra.mrb[0].mxu0 %v1667
    %v1845 = vpop.f32.mrb[0].mxu0
    %v1846 = vadd.f32 0.0, %v1845
    %v1847 = vpop.f32.mrb[0].mxu0
    %v1848 = vadd.f32 0.0, %v1847
    %v1849 = vpop.f32.mrb[0].mxu0
    %v1850 = vadd.f32 0.0, %v1849
    %v1851 = vpop.f32.mrb[0].mxu0
    %v1852 = vadd.f32 0.0, %v1851
    %1853 = vmatprep.mubr.bf16.mxu0 %v1734
    %1854 = vmatmul.mubr.bf16.gmra.mrb[0].mxu0 %v1669
    %v1855 = vpop.f32.mrb[0].mxu0
    %v1856 = vadd.f32 0.0, %v1855
    %v1857 = vpop.f32.mrb[0].mxu0
    %v1858 = vadd.f32 0.0, %v1857
    %v1859 = vpop.f32.mrb[0].mxu0
    %v1860 = vadd.f32 0.0, %v1859
    %v1861 = vpop.f32.mrb[0].mxu0
    %v1862 = vadd.f32 0.0, %v1861
    %1863 = vmatprep.mubr.bf16.mxu0 %v1737
    %1864 = vmatmul.mubr.bf16.gmra.mrb[0].mxu0 %v1671
    %v1865 = vpop.f32.mrb[0].mxu0
    %v1866 = vadd.f32 0.0, %v1865
    %v1867 = vpop.f32.mrb[0].mxu0
    %v1868 = vadd.f32 0.0, %v1867
    %v1869 = vpop.f32.mrb[0].mxu0
    %v1870 = vadd.f32 0.0, %v1869
    %v1871 = vpop.f32.mrb[0].mxu0
    %v1872 = vadd.f32 0.0, %v1871
    %1873 = vmatprep.mubr.bf16.mxu0 %v1740
    %1874 = vmatmul.mubr.bf16.gmra.mrb[0].mxu0 %v1673
    %v1875 = vpop.f32.mrb[0].mxu0
    %v1876 = vadd.f32 0.0, %v1875
    %v1877 = vpop.f32.mrb[0].mxu0
    %v1878 = vadd.f32 0.0, %v1877
    %v1879 = vpop.f32.mrb[0].mxu0
    %v1880 = vadd.f32 0.0, %v1879
    %v1881 = vpop.f32.mrb[0].mxu0
    %v1882 = vadd.f32 0.0, %v1881
    %1883 = vmatprep.mubr.bf16.mxu0 %v1743
    %1884 = vmatmul.mubr.bf16.gmra.mrb[0].mxu0 %v1675
    %v1885 = vpop.f32.mrb[0].mxu0
    %v1886 = vadd.f32 0.0, %v1885
    %v1887 = vpop.f32.mrb[0].mxu0
    %v1888 = vadd.f32 0.0, %v1887
    %v1889 = vpop.f32.mrb[0].mxu0
    %v1890 = vadd.f32 0.0, %v1889
    %v1891 = vpop.f32.mrb[0].mxu0
    %v1892 = vadd.f32 0.0, %v1891
    %1893 = vmatprep.mubr.bf16.mxu0 %v1746
    %1894 = vmatmul.mubr.bf16.gmra.mrb[0].mxu0 %v1677
    %v1895 = vpop.f32.mrb[0].mxu0
    %v1896 = vadd.f32 0.0, %v1895
    %v1897 = vpop.f32.mrb[0].mxu0
    %v1898 = vadd.f32 0.0, %v1897
    %v1899 = vpop.f32.mrb[0].mxu0
    %v1900 = vadd.f32 0.0, %v1899
    %v1901 = vpop.f32.mrb[0].mxu0
    %v1902 = vadd.f32 0.0, %v1901
    %1903 = vmatprep.mubr.bf16.mxu0 %v1749
    %1904 = vmatmul.mubr.bf16.gmra.mrb[0].mxu0 %v1679
    %v1905 = vpop.f32.mrb[0].mxu0
    %v1906 = vadd.f32 0.0, %v1905
    %v1907 = vpop.f32.mrb[0].mxu0
    %v1908 = vadd.f32 0.0, %v1907
    %v1909 = vpop.f32.mrb[0].mxu0
    %v1910 = vadd.f32 0.0, %v1909
    %v1911 = vpop.f32.mrb[0].mxu0
    %v1912 = vadd.f32 0.0, %v1911
    %1913 = vmatprep.mubr.bf16.mxu0 %v1752
    %1914 = vmatmul.mubr.bf16.gmra.mrb[0].mxu0 %v1681
    %v1915 = vpop.f32.mrb[0].mxu0
    %v1916 = vadd.f32 0.0, %v1915
    %v1917 = vpop.f32.mrb[0].mxu0
    %v1918 = vadd.f32 0.0, %v1917
    %v1919 = vpop.f32.mrb[0].mxu0
    %v1920 = vadd.f32 0.0, %v1919
    %v1921 = vpop.f32.mrb[0].mxu0
    %v1922 = vadd.f32 0.0, %v1921
    %1923 = vmatprep.mubr.bf16.mxu0 %v1755
    %1924 = vmatmul.mubr.bf16.gmra.mrb[0].mxu0 %v1683
    %v1925 = vpop.f32.mrb[0].mxu0
    %v1926 = vadd.f32 0.0, %v1925
    %v1927 = vpop.f32.mrb[0].mxu0
    %v1928 = vadd.f32 0.0, %v1927
    %v1929 = vpop.f32.mrb[0].mxu0
    %v1930 = vadd.f32 0.0, %v1929
    %v1931 = vpop.f32.mrb[0].mxu0
    %v1932 = vadd.f32 0.0, %v1931
    %1933 = vmatprep.mubr.bf16.mxu0 %v1758
    %1934 = vmatmul.mubr.bf16.gmra.mrb[0].mxu0 %v1685
    %v1935 = vpop.f32.mrb[0].mxu0
    %v1936 = vadd.f32 0.0, %v1935
    %v1937 = vpop.f32.mrb[0].mxu0
    %v1938 = vadd.f32 0.0, %v1937
    %v1939 = vpop.f32.mrb[0].mxu0
    %v1940 = vadd.f32 0.0, %v1939
    %v1941 = vpop.f32.mrb[0].mxu0
    %v1942 = vadd.f32 0.0, %v1941
    %1943 = vmatprep.mubr.bf16.mxu0 %v1761
    %1944 = vmatmul.mubr.bf16.gmra.mrb[0].mxu0 %v1687
    %v1945 = vpop.f32.mrb[0].mxu0
    %v1946 = vadd.f32 0.0, %v1945
    %v1947 = vpop.f32.mrb[0].mxu0
    %v1948 = vadd.f32 0.0, %v1947
    %v1949 = vpop.f32.mrb[0].mxu0
    %v1950 = vadd.f32 0.0, %v1949
    %v1951 = vpop.f32.mrb[0].mxu0
    %v1952 = vadd.f32 0.0, %v1951
    %1953 = vmatprep.mubr.bf16.mxu0 %v1764
    %1954 = vmatmul.mubr.bf16.gmra.mrb[0].mxu0 %v1689
    %v1955 = vpop.f32.mrb[0].mxu0
    %v1956 = vadd.f32 0.0, %v1955
    %v1957 = vpop.f32.mrb[0].mxu0
    %v1958 = vadd.f32 0.0, %v1957
    %v1959 = vpop.f32.mrb[0].mxu0
    %v1960 = vadd.f32 0.0, %v1959
    %v1961 = vpop.f32.mrb[0].mxu0
    %v1962 = vadd.f32 0.0, %v1961
    %1963 = vmatprep.mubr.bf16.mxu0 %v1767
    %1964 = vmatmul.mubr.bf16.gmra.mrb[0].mxu0 %v1691
    %v1965 = vpop.f32.mrb[0].mxu0
    %v1966 = vadd.f32 0.0, %v1965
    %v1967 = vpop.f32.mrb[0].mxu0
    %v1968 = vadd.f32 0.0, %v1967
    %v1969 = vpop.f32.mrb[0].mxu0
    %v1970 = vadd.f32 0.0, %v1969
    %v1971 = vpop.f32.mrb[0].mxu0
    %v1972 = vadd.f32 0.0, %v1971
    %1973 = vmatprep.mubr.bf16.mxu0 %v1770
    %1974 = vmatmul.mubr.bf16.gmra.mrb[0].mxu0 %v1693
    %v1975 = vpop.f32.mrb[0].mxu0
    %v1976 = vadd.f32 0.0, %v1975
    %v1977 = vpop.f32.mrb[0].mxu0
    %v1978 = vadd.f32 0.0, %v1977
    %v1979 = vpop.f32.mrb[0].mxu0
    %v1980 = vadd.f32 0.0, %v1979
    %v1981 = vpop.f32.mrb[0].mxu0
    %v1982 = vadd.f32 0.0, %v1981
    %1983 = vmatprep.mubr.bf16.mxu0 %v1773
    %1984 = vmatmul.mubr.bf16.gmra.mrb[0].mxu0 %v1695
    %v1985 = vpop.f32.mrb[0].mxu0
    %v1986 = vadd.f32 0.0, %v1985
    %v1987 = vpop.f32.mrb[0].mxu0
    %v1988 = vadd.f32 0.0, %v1987
    %v1989 = vpop.f32.mrb[0].mxu0
    %v1990 = vadd.f32 0.0, %v1989
    %v1991 = vpop.f32.mrb[0].mxu0
    %v1992 = vadd.f32 0.0, %v1991
    %1993 = vmatprep.mubr.bf16.mxu0 %v1776
    %1994 = vmatmul.mubr.bf16.gmra.mrb[0].mxu0 %v1697
    %v1995 = vpop.f32.mrb[0].mxu0
    %v1996 = vadd.f32 0.0, %v1995
    %v1997 = vpop.f32.mrb[0].mxu0
    %v1998 = vadd.f32 0.0, %v1997
    %v1999 = vpop.f32.mrb[0].mxu0
    %v2000 = vadd.f32 0.0, %v1999
    %v2001 = vpop.f32.mrb[0].mxu0
    %v2002 = vadd.f32 0.0, %v2001
    %2003 = vmatprep.mubr.bf16.mxu0 %v1779
    %2004 = vmatmul.mubr.bf16.gmra.mrb[0].mxu0 %v1699
    %v2005 = vpop.f32.mrb[0].mxu0
    %v2006 = vadd.f32 0.0, %v2005
    %v2007 = vpop.f32.mrb[0].mxu0
    %v2008 = vadd.f32 0.0, %v2007
    %v2009 = vpop.f32.mrb[0].mxu0
    %v2010 = vadd.f32 0.0, %v2009
    %v2011 = vpop.f32.mrb[0].mxu0
    %v2012 = vadd.f32 0.0, %v2011
    %2013 = vdwg.mxu0
    %v2014 = vmax.f32 %v1303, %v1816
    %v2015 = vmax.f32 %v1305, %v1818
    %v2016 = vmax.f32 %v1307, %v1820
    %v2017 = vmax.f32 %v1309, %v1822
    %v2018 = vmax.f32 %v1313, %v1826
    %v2019 = vmax.f32 %v1315, %v1828
    %v2020 = vmax.f32 %v1317, %v1830
    %v2021 = vmax.f32 %v1319, %v1832
    %v2022 = vmax.f32 %v1323, %v1836
    %v2023 = vmax.f32 %v1325, %v1838
    %v2024 = vmax.f32 %v1327, %v1840
    %v2025 = vmax.f32 %v1329, %v1842
    %v2026 = vmax.f32 %v1333, %v1846
    %v2027 = vmax.f32 %v1335, %v1848
    %v2028 = vmax.f32 %v1337, %v1850
    %v2029 = vmax.f32 %v1339, %v1852
    %v2030 = vmax.f32 %v1343, %v1856
    %v2031 = vmax.f32 %v1345, %v1858
    %v2032 = vmax.f32 %v1347, %v1860
    %v2033 = vmax.f32 %v1349, %v1862
    %v2034 = vmax.f32 %v1353, %v1866
    %v2035 = vmax.f32 %v1355, %v1868
    %v2036 = vmax.f32 %v1357, %v1870
    %v2037 = vmax.f32 %v1359, %v1872
    %v2038 = vmax.f32 %v1363, %v1876
    %v2039 = vmax.f32 %v1365, %v1878
    %v2040 = vmax.f32 %v1367, %v1880
    %v2041 = vmax.f32 %v1369, %v1882
    %v2042 = vmax.f32 %v1373, %v1886
    %v2043 = vmax.f32 %v1375, %v1888
    %v2044 = vmax.f32 %v1377, %v1890
    %v2045 = vmax.f32 %v1379, %v1892
    %v2046 = vmax.f32 %v1383, %v1896
    %v2047 = vmax.f32 %v1385, %v1898
    %v2048 = vmax.f32 %v1387, %v1900
    %v2049 = vmax.f32 %v1389, %v1902
    %v2050 = vmax.f32 %v1393, %v1906
    %v2051 = vmax.f32 %v1395, %v1908
    %v2052 = vmax.f32 %v1397, %v1910
    %v2053 = vmax.f32 %v1399, %v1912
    %v2054 = vmax.f32 %v1403, %v1916
    %v2055 = vmax.f32 %v1405, %v1918
    %v2056 = vmax.f32 %v1407, %v1920
    %v2057 = vmax.f32 %v1409, %v1922
    %v2058 = vmax.f32 %v1413, %v1926
    %v2059 = vmax.f32 %v1415, %v1928
    %v2060 = vmax.f32 %v1417, %v1930
    %v2061 = vmax.f32 %v1419, %v1932
    %v2062 = vmax.f32 %v1423, %v1936
    %v2063 = vmax.f32 %v1425, %v1938
    %v2064 = vmax.f32 %v1427, %v1940
    %v2065 = vmax.f32 %v1429, %v1942
    %v2066 = vmax.f32 %v1433, %v1946
    %v2067 = vmax.f32 %v1435, %v1948
    %v2068 = vmax.f32 %v1437, %v1950
    %v2069 = vmax.f32 %v1439, %v1952
    %v2070 = vmax.f32 %v1443, %v1956
    %v2071 = vmax.f32 %v1445, %v1958
    %v2072 = vmax.f32 %v1447, %v1960
    %v2073 = vmax.f32 %v1449, %v1962
    %v2074 = vmax.f32 %v1453, %v1966
    %v2075 = vmax.f32 %v1455, %v1968
    %v2076 = vmax.f32 %v1457, %v1970
    %v2077 = vmax.f32 %v1459, %v1972
    %v2078 = vmax.f32 %v1463, %v1976
    %v2079 = vmax.f32 %v1465, %v1978
    %v2080 = vmax.f32 %v1467, %v1980
    %v2081 = vmax.f32 %v1469, %v1982
    %v2082 = vmax.f32 %v1473, %v1986
    %v2083 = vmax.f32 %v1475, %v1988
    %v2084 = vmax.f32 %v1477, %v1990
    %v2085 = vmax.f32 %v1479, %v1992
    %v2086 = vmax.f32 %v1483, %v1996
    %v2087 = vmax.f32 %v1485, %v1998
    %v2088 = vmax.f32 %v1487, %v2000
    %v2089 = vmax.f32 %v1489, %v2002
    %v2090 = vmax.f32 %v1493, %v2006
    %v2091 = vmax.f32 %v1495, %v2008
    %v2092 = vmax.f32 %v1497, %v2010
    %v2093 = vmax.f32 %v1499, %v2012
    %v2094 = vpack.c.bf16 %v2016, %v2014
    %v2095 = vpack.c.bf16 %v2017, %v2015
    %v2096 = vpack.c.bf16 %v2020, %v2018
    %v2097 = vpack.c.bf16 %v2021, %v2019
    %v2098 = vpack.c.bf16 %v2024, %v2022
    %v2099 = vpack.c.bf16 %v2025, %v2023
    %v2100 = vpack.c.bf16 %v2028, %v2026
    %v2101 = vpack.c.bf16 %v2029, %v2027
    %v2102 = vld [vmem:[%s5] sm:$0xff]
    %v2103 = vld [vmem:[%s5 + $0x8] sm:$0xff]
    %v2104 = vld [vmem:[%s5 + $0x10] sm:$0xff]
    %v2105 = vld [vmem:[%s5 + $0x18] sm:$0xff]
    %v2106 = vld [vmem:[%s5 + $0x20] sm:$0xff]
    %v2107 = vld [vmem:[%s5 + $0x28] sm:$0xff]
    %v2108 = vld [vmem:[%s5 + $0x30] sm:$0xff]
    %v2109 = vld [vmem:[%s5 + $0x38] sm:$0xff]
    %v2110 = vld [vmem:[%s5 + $0x40] sm:$0xff]
    %v2111 = vld [vmem:[%s5 + $0x48] sm:$0xff]
    %v2112 = vld [vmem:[%s5 + $0x50] sm:$0xff]
    %v2113 = vld [vmem:[%s5 + $0x58] sm:$0xff]
    %v2114 = vld [vmem:[%s5 + $0x60] sm:$0xff]
    %v2115 = vld [vmem:[%s5 + $0x68] sm:$0xff]
    %v2116 = vld [vmem:[%s5 + $0x70] sm:$0xff]
    %v2117 = vld [vmem:[%s5 + $0x78] sm:$0xff]
    %v2118 = vld [vmem:[%s5 + $0x80] sm:$0xff]
    %v2119 = vld [vmem:[%s5 + $0x88] sm:$0xff]
    %v2120 = vld [vmem:[%s5 + $0x90] sm:$0xff]
    %v2121 = vld [vmem:[%s5 + $0x98] sm:$0xff]
    %v2122 = vld [vmem:[%s5 + $0xa0] sm:$0xff]
    %v2123 = vld [vmem:[%s5 + $0xa8] sm:$0xff]
    %v2124 = vld [vmem:[%s5 + $0xb0] sm:$0xff]
    %v2125 = vld [vmem:[%s5 + $0xb8] sm:$0xff]
    %v2126 = vld [vmem:[%s5 + $0xc0] sm:$0xff]
    %v2127 = vld [vmem:[%s5 + $0xc8] sm:$0xff]
    %v2128 = vld [vmem:[%s5 + $0xd0] sm:$0xff]
    %v2129 = vld [vmem:[%s5 + $0xd8] sm:$0xff]
    %v2130 = vld [vmem:[%s5 + $0xe0] sm:$0xff]
    %v2131 = vld [vmem:[%s5 + $0xe8] sm:$0xff]
    %v2132 = vld [vmem:[%s5 + $0xf0] sm:$0xff]
    %v2133 = vld [vmem:[%s5 + $0xf8] sm:$0xff]
    %v2134 = vpack.c.bf16 %v2032, %v2030
    %v2135 = vpack.c.bf16 %v2033, %v2031
    %v2136 = vpack.c.bf16 %v2036, %v2034
    %v2137 = vpack.c.bf16 %v2037, %v2035
    %v2138 = vpack.c.bf16 %v2040, %v2038
    %v2139 = vpack.c.bf16 %v2041, %v2039
    %v2140 = vpack.c.bf16 %v2044, %v2042
    %v2141 = vpack.c.bf16 %v2045, %v2043
    %s2142 = scalar_lea.vmem %s5, 256
    %v2143 = vld [vmem:[%s2142] sm:$0xff]
    %v2144 = vld [vmem:[%s2142 + $0x8] sm:$0xff]
    %v2145 = vld [vmem:[%s2142 + $0x10] sm:$0xff]
    %v2146 = vld [vmem:[%s2142 + $0x18] sm:$0xff]
    %v2147 = vld [vmem:[%s2142 + $0x20] sm:$0xff]
    %v2148 = vld [vmem:[%s2142 + $0x28] sm:$0xff]
    %v2149 = vld [vmem:[%s2142 + $0x30] sm:$0xff]
    %v2150 = vld [vmem:[%s2142 + $0x38] sm:$0xff]
    %v2151 = vld [vmem:[%s2142 + $0x40] sm:$0xff]
    %v2152 = vld [vmem:[%s2142 + $0x48] sm:$0xff]
    %v2153 = vld [vmem:[%s2142 + $0x50] sm:$0xff]
    %v2154 = vld [vmem:[%s2142 + $0x58] sm:$0xff]
    %v2155 = vld [vmem:[%s2142 + $0x60] sm:$0xff]
    %v2156 = vld [vmem:[%s2142 + $0x68] sm:$0xff]
    %v2157 = vld [vmem:[%s2142 + $0x70] sm:$0xff]
    %v2158 = vld [vmem:[%s2142 + $0x78] sm:$0xff]
    %v2159 = vld [vmem:[%s2142 + $0x80] sm:$0xff]
    %v2160 = vld [vmem:[%s2142 + $0x88] sm:$0xff]
    %v2161 = vld [vmem:[%s2142 + $0x90] sm:$0xff]
    %v2162 = vld [vmem:[%s2142 + $0x98] sm:$0xff]
    %v2163 = vld [vmem:[%s2142 + $0xa0] sm:$0xff]
    %v2164 = vld [vmem:[%s2142 + $0xa8] sm:$0xff]
    %v2165 = vld [vmem:[%s2142 + $0xb0] sm:$0xff]
    %v2166 = vld [vmem:[%s2142 + $0xb8] sm:$0xff]
    %v2167 = vld [vmem:[%s2142 + $0xc0] sm:$0xff]
    %v2168 = vld [vmem:[%s2142 + $0xc8] sm:$0xff]
    %v2169 = vld [vmem:[%s2142 + $0xd0] sm:$0xff]
    %v2170 = vld [vmem:[%s2142 + $0xd8] sm:$0xff]
    %v2171 = vld [vmem:[%s2142 + $0xe0] sm:$0xff]
    %v2172 = vld [vmem:[%s2142 + $0xe8] sm:$0xff]
    %v2173 = vld [vmem:[%s2142 + $0xf0] sm:$0xff]
    %v2174 = vld [vmem:[%s2142 + $0xf8] sm:$0xff]
    %v2207 = vunpack.c.l.b16 %v2143
    %v2208 = vunpack.c.h.b16 %v2143
    %v2209 = vunpack.c.l.b16 %v2144
    %v2210 = vunpack.c.h.b16 %v2144
    %v2211 = vunpack.c.l.b16 %v2145
    %v2212 = vunpack.c.h.b16 %v2145
    %v2213 = vunpack.c.l.b16 %v2146
    %v2214 = vunpack.c.h.b16 %v2146
    %v2215 = vunpack.c.l.b16 %v2147
    %v2216 = vunpack.c.h.b16 %v2147
    %v2217 = vunpack.c.l.b16 %v2148
    %v2218 = vunpack.c.h.b16 %v2148
    %v2219 = vunpack.c.l.b16 %v2149
    %v2220 = vunpack.c.h.b16 %v2149
    %v2221 = vunpack.c.l.b16 %v2150
    %v2222 = vunpack.c.h.b16 %v2150
    %v2223 = vunpack.c.l.b16 %v2151
    %v2224 = vunpack.c.h.b16 %v2151
    %v2225 = vunpack.c.l.b16 %v2152
    %v2226 = vunpack.c.h.b16 %v2152
    %v2227 = vunpack.c.l.b16 %v2153
    %v2228 = vunpack.c.h.b16 %v2153
    %v2229 = vunpack.c.l.b16 %v2154
    %v2230 = vunpack.c.h.b16 %v2154
    %v2231 = vunpack.c.l.b16 %v2155
    %v2232 = vunpack.c.h.b16 %v2155
    %v2233 = vunpack.c.l.b16 %v2156
    %v2234 = vunpack.c.h.b16 %v2156
    %v2235 = vunpack.c.l.b16 %v2157
    %v2236 = vunpack.c.h.b16 %v2157
    %v2237 = vunpack.c.l.b16 %v2158
    %v2238 = vunpack.c.h.b16 %v2158
    %v2239 = vunpack.c.l.b16 %v2159
    %v2240 = vunpack.c.h.b16 %v2159
    %v2241 = vunpack.c.l.b16 %v2160
    %v2242 = vunpack.c.h.b16 %v2160
    %v2243 = vunpack.c.l.b16 %v2161
    %v2244 = vunpack.c.h.b16 %v2161
    %v2245 = vunpack.c.l.b16 %v2162
    %v2246 = vunpack.c.h.b16 %v2162
    %v2247 = vunpack.c.l.b16 %v2163
    %v2248 = vunpack.c.h.b16 %v2163
    %v2249 = vunpack.c.l.b16 %v2164
    %v2250 = vunpack.c.h.b16 %v2164
    %v2251 = vunpack.c.l.b16 %v2165
    %v2252 = vunpack.c.h.b16 %v2165
    %v2253 = vunpack.c.l.b16 %v2166
    %v2254 = vunpack.c.h.b16 %v2166
    %v2255 = vunpack.c.l.b16 %v2167
    %v2256 = vunpack.c.h.b16 %v2167
    %v2257 = vunpack.c.l.b16 %v2168
    %v2258 = vunpack.c.h.b16 %v2168
    %v2259 = vunpack.c.l.b16 %v2169
    %v2260 = vunpack.c.h.b16 %v2169
    %v2261 = vunpack.c.l.b16 %v2170
    %v2262 = vunpack.c.h.b16 %v2170
    %v2263 = vunpack.c.l.b16 %v2171
    %v2264 = vunpack.c.h.b16 %v2171
    %v2265 = vunpack.c.l.b16 %v2172
    %v2266 = vunpack.c.h.b16 %v2172
    %v2267 = vunpack.c.l.b16 %v2173
    %v2268 = vunpack.c.h.b16 %v2173
    %v2269 = vunpack.c.l.b16 %v2174
    %v2270 = vunpack.c.h.b16 %v2174
    %v2271 = vpack.c.b16 %v2209, %v2207
    %v2272 = vpack.c.b16 %v2210, %v2208
    %v2273 = vpack.c.b16 %v2213, %v2211
    %v2274 = vpack.c.b16 %v2214, %v2212
    %v2275 = vpack.c.b16 %v2217, %v2215
    %v2276 = vpack.c.b16 %v2218, %v2216
    %v2277 = vpack.c.b16 %v2221, %v2219
    %v2278 = vpack.c.b16 %v2222, %v2220
    %v2279 = vpack.c.b16 %v2225, %v2223
    %v2280 = vpack.c.b16 %v2226, %v2224
    %v2281 = vpack.c.b16 %v2229, %v2227
    %v2282 = vpack.c.b16 %v2230, %v2228
    %v2283 = vpack.c.b16 %v2233, %v2231
    %v2284 = vpack.c.b16 %v2234, %v2232
    %v2285 = vpack.c.b16 %v2237, %v2235
    %v2286 = vpack.c.b16 %v2238, %v2236
    %v2287 = vpack.c.b16 %v2241, %v2239
    %v2288 = vpack.c.b16 %v2242, %v2240
    %v2289 = vpack.c.b16 %v2245, %v2243
    %v2290 = vpack.c.b16 %v2246, %v2244
    %v2291 = vpack.c.b16 %v2249, %v2247
    %v2292 = vpack.c.b16 %v2250, %v2248
    %v2293 = vpack.c.b16 %v2253, %v2251
    %v2294 = vpack.c.b16 %v2254, %v2252
    %v2295 = vpack.c.b16 %v2257, %v2255
    %v2296 = vpack.c.b16 %v2258, %v2256
    %v2297 = vpack.c.b16 %v2261, %v2259
    %v2298 = vpack.c.b16 %v2262, %v2260
    %v2299 = vpack.c.b16 %v2265, %v2263
    %v2300 = vpack.c.b16 %v2266, %v2264
    %v2301 = vpack.c.b16 %v2269, %v2267
    %v2302 = vpack.c.b16 %v2270, %v2268
    %2335 = vmatprep.subr.bf16.mxu0 %v2272
    %2336 = vmatpush1.bf16.msra.mxu0 %v2271
    %2337 = vmatprep.subr.bf16.mxu0 %v2274
    %2338 = vmatpush1.bf16.msra.mxu0 %v2273
    %2339 = vmatprep.subr.bf16.mxu0 %v2276
    %2340 = vmatpush1.bf16.msra.mxu0 %v2275
    %2341 = vmatprep.subr.bf16.mxu0 %v2278
    %2342 = vmatpush1.bf16.msra.mxu0 %v2277
    %2343 = vmatprep.subr.bf16.mxu0 %v2280
    %2344 = vmatpush1.bf16.msra.mxu0 %v2279
    %2345 = vmatprep.subr.bf16.mxu0 %v2282
    %2346 = vmatpush1.bf16.msra.mxu0 %v2281
    %2347 = vmatprep.subr.bf16.mxu0 %v2284
    %2348 = vmatpush1.bf16.msra.mxu0 %v2283
    %2349 = vmatprep.subr.bf16.mxu0 %v2286
    %2350 = vmatpush1.bf16.msra.mxu0 %v2285
    %2351 = vmatprep.subr.bf16.mxu0 %v2288
    %2352 = vmatpush1.bf16.msra.mxu0 %v2287
    %2353 = vmatprep.subr.bf16.mxu0 %v2290
    %2354 = vmatpush1.bf16.msra.mxu0 %v2289
    %2355 = vmatprep.subr.bf16.mxu0 %v2292
    %2356 = vmatpush1.bf16.msra.mxu0 %v2291
    %2357 = vmatprep.subr.bf16.mxu0 %v2294
    %2358 = vmatpush1.bf16.msra.mxu0 %v2293
    %2359 = vmatprep.subr.bf16.mxu0 %v2296
    %2360 = vmatpush1.bf16.msra.mxu0 %v2295
    %2361 = vmatprep.subr.bf16.mxu0 %v2298
    %2362 = vmatpush1.bf16.msra.mxu0 %v2297
    %2363 = vmatprep.subr.bf16.mxu0 %v2300
    %2364 = vmatpush1.bf16.msra.mxu0 %v2299
    %2365 = vmatprep.subr.bf16.mxu0 %v2302
    %2366 = vmatpush1.bf16.msra.mxu0 %v2301
    %2367 = vmatprep.mubr.bf16.mxu0 %v2135
    %2368 = vmatmul.mubr.bf16.gmra.mrb[0].mxu0 %v2134
    %v2369 = vpop.f32.mrb[0].mxu0
    %v2370 = vadd.f32 0.0, %v2369
    %v2371 = vpop.f32.mrb[0].mxu0
    %v2372 = vadd.f32 0.0, %v2371
    %v2373 = vpop.f32.mrb[0].mxu0
    %v2374 = vadd.f32 0.0, %v2373
    %v2375 = vpop.f32.mrb[0].mxu0
    %v2376 = vadd.f32 0.0, %v2375
    %2377 = vmatprep.mubr.bf16.mxu0 %v2137
    %2378 = vmatmul.mubr.bf16.gmra.mrb[0].mxu0 %v2136
    %v2379 = vpop.f32.mrb[0].mxu0
    %v2380 = vadd.f32 0.0, %v2379
    %v2381 = vpop.f32.mrb[0].mxu0
    %v2382 = vadd.f32 0.0, %v2381
    %v2383 = vpop.f32.mrb[0].mxu0
    %v2384 = vadd.f32 0.0, %v2383
    %v2385 = vpop.f32.mrb[0].mxu0
    %v2386 = vadd.f32 0.0, %v2385
    %2387 = vmatprep.mubr.bf16.mxu0 %v2139
    %2388 = vmatmul.mubr.bf16.gmra.mrb[0].mxu0 %v2138
    %v2389 = vpop.f32.mrb[0].mxu0
    %v2390 = vadd.f32 0.0, %v2389
    %v2391 = vpop.f32.mrb[0].mxu0
    %v2392 = vadd.f32 0.0, %v2391
    %v2393 = vpop.f32.mrb[0].mxu0
    %v2394 = vadd.f32 0.0, %v2393
    %v2395 = vpop.f32.mrb[0].mxu0
    %v2396 = vadd.f32 0.0, %v2395
    %2397 = vmatprep.mubr.bf16.mxu0 %v2141
    %2398 = vmatmul.mubr.bf16.gmra.mrb[0].mxu0 %v2140
    %v2399 = vpop.f32.mrb[0].mxu0
    %v2400 = vadd.f32 0.0, %v2399
    %v2401 = vpop.f32.mrb[0].mxu0
    %v2402 = vadd.f32 0.0, %v2401
    %v2403 = vpop.f32.mrb[0].mxu0
    %v2404 = vadd.f32 0.0, %v2403
    %v2405 = vpop.f32.mrb[0].mxu0
    %v2406 = vadd.f32 0.0, %v2405
    %2407 = vdwg.mxu0
    %v2440 = vunpack.c.l.b16 %v2102
    %v2441 = vunpack.c.h.b16 %v2102
    %v2442 = vunpack.c.l.b16 %v2103
    %v2443 = vunpack.c.h.b16 %v2103
    %v2444 = vunpack.c.l.b16 %v2104
    %v2445 = vunpack.c.h.b16 %v2104
    %v2446 = vunpack.c.l.b16 %v2105
    %v2447 = vunpack.c.h.b16 %v2105
    %v2448 = vunpack.c.l.b16 %v2106
    %v2449 = vunpack.c.h.b16 %v2106
    %v2450 = vunpack.c.l.b16 %v2107
    %v2451 = vunpack.c.h.b16 %v2107
    %v2452 = vunpack.c.l.b16 %v2108
    %v2453 = vunpack.c.h.b16 %v2108
    %v2454 = vunpack.c.l.b16 %v2109
    %v2455 = vunpack.c.h.b16 %v2109
    %v2456 = vunpack.c.l.b16 %v2110
    %v2457 = vunpack.c.h.b16 %v2110
    %v2458 = vunpack.c.l.b16 %v2111
    %v2459 = vunpack.c.h.b16 %v2111
    %v2460 = vunpack.c.l.b16 %v2112
    %v2461 = vunpack.c.h.b16 %v2112
    %v2462 = vunpack.c.l.b16 %v2113
    %v2463 = vunpack.c.h.b16 %v2113
    %v2464 = vunpack.c.l.b16 %v2114
    %v2465 = vunpack.c.h.b16 %v2114
    %v2466 = vunpack.c.l.b16 %v2115
    %v2467 = vunpack.c.h.b16 %v2115
    %v2468 = vunpack.c.l.b16 %v2116
    %v2469 = vunpack.c.h.b16 %v2116
    %v2470 = vunpack.c.l.b16 %v2117
    %v2471 = vunpack.c.h.b16 %v2117
    %v2472 = vunpack.c.l.b16 %v2118
    %v2473 = vunpack.c.h.b16 %v2118
    %v2474 = vunpack.c.l.b16 %v2119
    %v2475 = vunpack.c.h.b16 %v2119
    %v2476 = vunpack.c.l.b16 %v2120
    %v2477 = vunpack.c.h.b16 %v2120
    %v2478 = vunpack.c.l.b16 %v2121
    %v2479 = vunpack.c.h.b16 %v2121
    %v2480 = vunpack.c.l.b16 %v2122
    %v2481 = vunpack.c.h.b16 %v2122
    %v2482 = vunpack.c.l.b16 %v2123
    %v2483 = vunpack.c.h.b16 %v2123
    %v2484 = vunpack.c.l.b16 %v2124
    %v2485 = vunpack.c.h.b16 %v2124
    %v2486 = vunpack.c.l.b16 %v2125
    %v2487 = vunpack.c.h.b16 %v2125
    %v2488 = vunpack.c.l.b16 %v2126
    %v2489 = vunpack.c.h.b16 %v2126
    %v2490 = vunpack.c.l.b16 %v2127
    %v2491 = vunpack.c.h.b16 %v2127
    %v2492 = vunpack.c.l.b16 %v2128
    %v2493 = vunpack.c.h.b16 %v2128
    %v2494 = vunpack.c.l.b16 %v2129
    %v2495 = vunpack.c.h.b16 %v2129
    %v2496 = vunpack.c.l.b16 %v2130
    %v2497 = vunpack.c.h.b16 %v2130
    %v2498 = vunpack.c.l.b16 %v2131
    %v2499 = vunpack.c.h.b16 %v2131
    %v2500 = vunpack.c.l.b16 %v2132
    %v2501 = vunpack.c.h.b16 %v2132
    %v2502 = vunpack.c.l.b16 %v2133
    %v2503 = vunpack.c.h.b16 %v2133
    %v2504 = vpack.c.b16 %v2442, %v2440
    %v2505 = vpack.c.b16 %v2443, %v2441
    %v2506 = vpack.c.b16 %v2446, %v2444
    %v2507 = vpack.c.b16 %v2447, %v2445
    %v2508 = vpack.c.b16 %v2450, %v2448
    %v2509 = vpack.c.b16 %v2451, %v2449
    %v2510 = vpack.c.b16 %v2454, %v2452
    %v2511 = vpack.c.b16 %v2455, %v2453
    %v2512 = vpack.c.b16 %v2458, %v2456
    %v2513 = vpack.c.b16 %v2459, %v2457
    %v2514 = vpack.c.b16 %v2462, %v2460
    %v2515 = vpack.c.b16 %v2463, %v2461
    %v2516 = vpack.c.b16 %v2466, %v2464
    %v2517 = vpack.c.b16 %v2467, %v2465
    %v2518 = vpack.c.b16 %v2470, %v2468
    %v2519 = vpack.c.b16 %v2471, %v2469
    %v2520 = vpack.c.b16 %v2474, %v2472
    %v2521 = vpack.c.b16 %v2475, %v2473
    %v2522 = vpack.c.b16 %v2478, %v2476
    %v2523 = vpack.c.b16 %v2479, %v2477
    %v2524 = vpack.c.b16 %v2482, %v2480
    %v2525 = vpack.c.b16 %v2483, %v2481
    %v2526 = vpack.c.b16 %v2486, %v2484
    %v2527 = vpack.c.b16 %v2487, %v2485
    %v2528 = vpack.c.b16 %v2490, %v2488
    %v2529 = vpack.c.b16 %v2491, %v2489
    %v2530 = vpack.c.b16 %v2494, %v2492
    %v2531 = vpack.c.b16 %v2495, %v2493
    %v2532 = vpack.c.b16 %v2498, %v2496
    %v2533 = vpack.c.b16 %v2499, %v2497
    %v2534 = vpack.c.b16 %v2502, %v2500
    %v2535 = vpack.c.b16 %v2503, %v2501
    %2568 = vmatprep.subr.bf16.mxu0 %v2505
    %2569 = vmatpush1.bf16.msra.mxu0 %v2504
    %2570 = vmatprep.subr.bf16.mxu0 %v2507
    %2571 = vmatpush1.bf16.msra.mxu0 %v2506
    %2572 = vmatprep.subr.bf16.mxu0 %v2509
    %2573 = vmatpush1.bf16.msra.mxu0 %v2508
    %2574 = vmatprep.subr.bf16.mxu0 %v2511
    %2575 = vmatpush1.bf16.msra.mxu0 %v2510
    %2576 = vmatprep.subr.bf16.mxu0 %v2513
    %2577 = vmatpush1.bf16.msra.mxu0 %v2512
    %2578 = vmatprep.subr.bf16.mxu0 %v2515
    %2579 = vmatpush1.bf16.msra.mxu0 %v2514
    %2580 = vmatprep.subr.bf16.mxu0 %v2517
    %2581 = vmatpush1.bf16.msra.mxu0 %v2516
    %2582 = vmatprep.subr.bf16.mxu0 %v2519
    %2583 = vmatpush1.bf16.msra.mxu0 %v2518
    %2584 = vmatprep.subr.bf16.mxu0 %v2521
    %2585 = vmatpush1.bf16.msra.mxu0 %v2520
    %2586 = vmatprep.subr.bf16.mxu0 %v2523
    %2587 = vmatpush1.bf16.msra.mxu0 %v2522
    %2588 = vmatprep.subr.bf16.mxu0 %v2525
    %2589 = vmatpush1.bf16.msra.mxu0 %v2524
    %2590 = vmatprep.subr.bf16.mxu0 %v2527
    %2591 = vmatpush1.bf16.msra.mxu0 %v2526
    %2592 = vmatprep.subr.bf16.mxu0 %v2529
    %2593 = vmatpush1.bf16.msra.mxu0 %v2528
    %2594 = vmatprep.subr.bf16.mxu0 %v2531
    %2595 = vmatpush1.bf16.msra.mxu0 %v2530
    %2596 = vmatprep.subr.bf16.mxu0 %v2533
    %2597 = vmatpush1.bf16.msra.mxu0 %v2532
    %2598 = vmatprep.subr.bf16.mxu0 %v2535
    %2599 = vmatpush1.bf16.msra.mxu0 %v2534
    %2600 = vmatprep.mubr.bf16.mxu0 %v2095
    %2601 = vmatmul.mubr.bf16.gmra.mrb[0].mxu0 %v2094
    %v2602 = vpop.f32.mrb[0].mxu0
    %v2603 = vadd.f32 %v2370, %v2602
    %v2604 = vpop.f32.mrb[0].mxu0
    %v2605 = vadd.f32 %v2372, %v2604
    %v2606 = vpop.f32.mrb[0].mxu0
    %v2607 = vadd.f32 %v2374, %v2606
    %v2608 = vpop.f32.mrb[0].mxu0
    %v2609 = vadd.f32 %v2376, %v2608
    %2610 = vmatprep.mubr.bf16.mxu0 %v2097
    %2611 = vmatmul.mubr.bf16.gmra.mrb[0].mxu0 %v2096
    %v2612 = vpop.f32.mrb[0].mxu0
    %v2613 = vadd.f32 %v2380, %v2612
    %v2614 = vpop.f32.mrb[0].mxu0
    %v2615 = vadd.f32 %v2382, %v2614
    %v2616 = vpop.f32.mrb[0].mxu0
    %v2617 = vadd.f32 %v2384, %v2616
    %v2618 = vpop.f32.mrb[0].mxu0
    %v2619 = vadd.f32 %v2386, %v2618
    %2620 = vmatprep.mubr.bf16.mxu0 %v2099
    %2621 = vmatmul.mubr.bf16.gmra.mrb[0].mxu0 %v2098
    %v2622 = vpop.f32.mrb[0].mxu0
    %v2623 = vadd.f32 %v2390, %v2622
    %v2624 = vpop.f32.mrb[0].mxu0
    %v2625 = vadd.f32 %v2392, %v2624
    %v2626 = vpop.f32.mrb[0].mxu0
    %v2627 = vadd.f32 %v2394, %v2626
    %v2628 = vpop.f32.mrb[0].mxu0
    %v2629 = vadd.f32 %v2396, %v2628
    %2630 = vmatprep.mubr.bf16.mxu0 %v2101
    %2631 = vmatmul.mubr.bf16.gmra.mrb[0].mxu0 %v2100
    %v2632 = vpop.f32.mrb[0].mxu0
    %v2633 = vadd.f32 %v2400, %v2632
    %v2634 = vpop.f32.mrb[0].mxu0
    %v2635 = vadd.f32 %v2402, %v2634
    %v2636 = vpop.f32.mrb[0].mxu0
    %v2637 = vadd.f32 %v2404, %v2636
    %v2638 = vpop.f32.mrb[0].mxu0
    %v2639 = vadd.f32 %v2406, %v2638
    %2640 = vdwg.mxu0
    %v2641 = vpack.c.bf16 %v2048, %v2046
    %v2642 = vpack.c.bf16 %v2049, %v2047
    %v2643 = vpack.c.bf16 %v2052, %v2050
    %v2644 = vpack.c.bf16 %v2053, %v2051
    %v2645 = vpack.c.bf16 %v2056, %v2054
    %v2646 = vpack.c.bf16 %v2057, %v2055
    %v2647 = vpack.c.bf16 %v2060, %v2058
    %v2648 = vpack.c.bf16 %v2061, %v2059
    %s2649 = scalar_lea.vmem %s5, 512
    %v2650 = vld [vmem:[%s2649] sm:$0xff]
    %v2651 = vld [vmem:[%s2649 + $0x8] sm:$0xff]
    %v2652 = vld [vmem:[%s2649 + $0x10] sm:$0xff]
    %v2653 = vld [vmem:[%s2649 + $0x18] sm:$0xff]
    %v2654 = vld [vmem:[%s2649 + $0x20] sm:$0xff]
    %v2655 = vld [vmem:[%s2649 + $0x28] sm:$0xff]
    %v2656 = vld [vmem:[%s2649 + $0x30] sm:$0xff]
    %v2657 = vld [vmem:[%s2649 + $0x38] sm:$0xff]
    %v2658 = vld [vmem:[%s2649 + $0x40] sm:$0xff]
    %v2659 = vld [vmem:[%s2649 + $0x48] sm:$0xff]
    %v2660 = vld [vmem:[%s2649 + $0x50] sm:$0xff]
    %v2661 = vld [vmem:[%s2649 + $0x58] sm:$0xff]
    %v2662 = vld [vmem:[%s2649 + $0x60] sm:$0xff]
    %v2663 = vld [vmem:[%s2649 + $0x68] sm:$0xff]
    %v2664 = vld [vmem:[%s2649 + $0x70] sm:$0xff]
    %v2665 = vld [vmem:[%s2649 + $0x78] sm:$0xff]
    %v2666 = vld [vmem:[%s2649 + $0x80] sm:$0xff]
    %v2667 = vld [vmem:[%s2649 + $0x88] sm:$0xff]
    %v2668 = vld [vmem:[%s2649 + $0x90] sm:$0xff]
    %v2669 = vld [vmem:[%s2649 + $0x98] sm:$0xff]
    %v2670 = vld [vmem:[%s2649 + $0xa0] sm:$0xff]
    %v2671 = vld [vmem:[%s2649 + $0xa8] sm:$0xff]
    %v2672 = vld [vmem:[%s2649 + $0xb0] sm:$0xff]
    %v2673 = vld [vmem:[%s2649 + $0xb8] sm:$0xff]
    %v2674 = vld [vmem:[%s2649 + $0xc0] sm:$0xff]
    %v2675 = vld [vmem:[%s2649 + $0xc8] sm:$0xff]
    %v2676 = vld [vmem:[%s2649 + $0xd0] sm:$0xff]
    %v2677 = vld [vmem:[%s2649 + $0xd8] sm:$0xff]
    %v2678 = vld [vmem:[%s2649 + $0xe0] sm:$0xff]
    %v2679 = vld [vmem:[%s2649 + $0xe8] sm:$0xff]
    %v2680 = vld [vmem:[%s2649 + $0xf0] sm:$0xff]
    %v2681 = vld [vmem:[%s2649 + $0xf8] sm:$0xff]
    %v2714 = vunpack.c.l.b16 %v2650
    %v2715 = vunpack.c.h.b16 %v2650
    %v2716 = vunpack.c.l.b16 %v2651
    %v2717 = vunpack.c.h.b16 %v2651
    %v2718 = vunpack.c.l.b16 %v2652
    %v2719 = vunpack.c.h.b16 %v2652
    %v2720 = vunpack.c.l.b16 %v2653
    %v2721 = vunpack.c.h.b16 %v2653
    %v2722 = vunpack.c.l.b16 %v2654
    %v2723 = vunpack.c.h.b16 %v2654
    %v2724 = vunpack.c.l.b16 %v2655
    %v2725 = vunpack.c.h.b16 %v2655
    %v2726 = vunpack.c.l.b16 %v2656
    %v2727 = vunpack.c.h.b16 %v2656
    %v2728 = vunpack.c.l.b16 %v2657
    %v2729 = vunpack.c.h.b16 %v2657
    %v2730 = vunpack.c.l.b16 %v2658
    %v2731 = vunpack.c.h.b16 %v2658
    %v2732 = vunpack.c.l.b16 %v2659
    %v2733 = vunpack.c.h.b16 %v2659
    %v2734 = vunpack.c.l.b16 %v2660
    %v2735 = vunpack.c.h.b16 %v2660
    %v2736 = vunpack.c.l.b16 %v2661
    %v2737 = vunpack.c.h.b16 %v2661
    %v2738 = vunpack.c.l.b16 %v2662
    %v2739 = vunpack.c.h.b16 %v2662
    %v2740 = vunpack.c.l.b16 %v2663
    %v2741 = vunpack.c.h.b16 %v2663
    %v2742 = vunpack.c.l.b16 %v2664
    %v2743 = vunpack.c.h.b16 %v2664
    %v2744 = vunpack.c.l.b16 %v2665
    %v2745 = vunpack.c.h.b16 %v2665
    %v2746 = vunpack.c.l.b16 %v2666
    %v2747 = vunpack.c.h.b16 %v2666
    %v2748 = vunpack.c.l.b16 %v2667
    %v2749 = vunpack.c.h.b16 %v2667
    %v2750 = vunpack.c.l.b16 %v2668
    %v2751 = vunpack.c.h.b16 %v2668
    %v2752 = vunpack.c.l.b16 %v2669
    %v2753 = vunpack.c.h.b16 %v2669
    %v2754 = vunpack.c.l.b16 %v2670
    %v2755 = vunpack.c.h.b16 %v2670
    %v2756 = vunpack.c.l.b16 %v2671
    %v2757 = vunpack.c.h.b16 %v2671
    %v2758 = vunpack.c.l.b16 %v2672
    %v2759 = vunpack.c.h.b16 %v2672
    %v2760 = vunpack.c.l.b16 %v2673
    %v2761 = vunpack.c.h.b16 %v2673
    %v2762 = vunpack.c.l.b16 %v2674
    %v2763 = vunpack.c.h.b16 %v2674
    %v2764 = vunpack.c.l.b16 %v2675
    %v2765 = vunpack.c.h.b16 %v2675
    %v2766 = vunpack.c.l.b16 %v2676
    %v2767 = vunpack.c.h.b16 %v2676
    %v2768 = vunpack.c.l.b16 %v2677
    %v2769 = vunpack.c.h.b16 %v2677
    %v2770 = vunpack.c.l.b16 %v2678
    %v2771 = vunpack.c.h.b16 %v2678
    %v2772 = vunpack.c.l.b16 %v2679
    %v2773 = vunpack.c.h.b16 %v2679
    %v2774 = vunpack.c.l.b16 %v2680
    %v2775 = vunpack.c.h.b16 %v2680
    %v2776 = vunpack.c.l.b16 %v2681
    %v2777 = vunpack.c.h.b16 %v2681
    %v2778 = vpack.c.b16 %v2716, %v2714
    %v2779 = vpack.c.b16 %v2717, %v2715
    %v2780 = vpack.c.b16 %v2720, %v2718
    %v2781 = vpack.c.b16 %v2721, %v2719
    %v2782 = vpack.c.b16 %v2724, %v2722
    %v2783 = vpack.c.b16 %v2725, %v2723
    %v2784 = vpack.c.b16 %v2728, %v2726
    %v2785 = vpack.c.b16 %v2729, %v2727
    %v2786 = vpack.c.b16 %v2732, %v2730
    %v2787 = vpack.c.b16 %v2733, %v2731
    %v2788 = vpack.c.b16 %v2736, %v2734
    %v2789 = vpack.c.b16 %v2737, %v2735
    %v2790 = vpack.c.b16 %v2740, %v2738
    %v2791 = vpack.c.b16 %v2741, %v2739
    %v2792 = vpack.c.b16 %v2744, %v2742
    %v2793 = vpack.c.b16 %v2745, %v2743
    %v2794 = vpack.c.b16 %v2748, %v2746
    %v2795 = vpack.c.b16 %v2749, %v2747
    %v2796 = vpack.c.b16 %v2752, %v2750
    %v2797 = vpack.c.b16 %v2753, %v2751
    %v2798 = vpack.c.b16 %v2756, %v2754
    %v2799 = vpack.c.b16 %v2757, %v2755
    %v2800 = vpack.c.b16 %v2760, %v2758
    %v2801 = vpack.c.b16 %v2761, %v2759
    %v2802 = vpack.c.b16 %v2764, %v2762
    %v2803 = vpack.c.b16 %v2765, %v2763
    %v2804 = vpack.c.b16 %v2768, %v2766
    %v2805 = vpack.c.b16 %v2769, %v2767
    %v2806 = vpack.c.b16 %v2772, %v2770
    %v2807 = vpack.c.b16 %v2773, %v2771
    %v2808 = vpack.c.b16 %v2776, %v2774
    %v2809 = vpack.c.b16 %v2777, %v2775
    %2842 = vmatprep.subr.bf16.mxu0 %v2779
    %2843 = vmatpush1.bf16.msra.mxu0 %v2778
    %2844 = vmatprep.subr.bf16.mxu0 %v2781
    %2845 = vmatpush1.bf16.msra.mxu0 %v2780
    %2846 = vmatprep.subr.bf16.mxu0 %v2783
    %2847 = vmatpush1.bf16.msra.mxu0 %v2782
    %2848 = vmatprep.subr.bf16.mxu0 %v2785
    %2849 = vmatpush1.bf16.msra.mxu0 %v2784
    %2850 = vmatprep.subr.bf16.mxu0 %v2787
    %2851 = vmatpush1.bf16.msra.mxu0 %v2786
    %2852 = vmatprep.subr.bf16.mxu0 %v2789
    %2853 = vmatpush1.bf16.msra.mxu0 %v2788
    %2854 = vmatprep.subr.bf16.mxu0 %v2791
    %2855 = vmatpush1.bf16.msra.mxu0 %v2790
    %2856 = vmatprep.subr.bf16.mxu0 %v2793
    %2857 = vmatpush1.bf16.msra.mxu0 %v2792
    %2858 = vmatprep.subr.bf16.mxu0 %v2795
    %2859 = vmatpush1.bf16.msra.mxu0 %v2794
    %2860 = vmatprep.subr.bf16.mxu0 %v2797
    %2861 = vmatpush1.bf16.msra.mxu0 %v2796
    %2862 = vmatprep.subr.bf16.mxu0 %v2799
    %2863 = vmatpush1.bf16.msra.mxu0 %v2798
    %2864 = vmatprep.subr.bf16.mxu0 %v2801
    %2865 = vmatpush1.bf16.msra.mxu0 %v2800
    %2866 = vmatprep.subr.bf16.mxu0 %v2803
    %2867 = vmatpush1.bf16.msra.mxu0 %v2802
    %2868 = vmatprep.subr.bf16.mxu0 %v2805
    %2869 = vmatpush1.bf16.msra.mxu0 %v2804
    %2870 = vmatprep.subr.bf16.mxu0 %v2807
    %2871 = vmatpush1.bf16.msra.mxu0 %v2806
    %2872 = vmatprep.subr.bf16.mxu0 %v2809
    %2873 = vmatpush1.bf16.msra.mxu0 %v2808
    %2874 = vmatprep.mubr.bf16.mxu0 %v2642
    %2875 = vmatmul.mubr.bf16.gmra.mrb[0].mxu0 %v2641
    %v2876 = vpop.f32.mrb[0].mxu0
    %v2877 = vadd.f32 0.0, %v2876
    %v2878 = vpop.f32.mrb[0].mxu0
    %v2879 = vadd.f32 0.0, %v2878
    %v2880 = vpop.f32.mrb[0].mxu0
    %v2881 = vadd.f32 0.0, %v2880
    %v2882 = vpop.f32.mrb[0].mxu0
    %v2883 = vadd.f32 0.0, %v2882
    %2884 = vmatprep.mubr.bf16.mxu0 %v2644
    %2885 = vmatmul.mubr.bf16.gmra.mrb[0].mxu0 %v2643
    %v2886 = vpop.f32.mrb[0].mxu0
    %v2887 = vadd.f32 0.0, %v2886
    %v2888 = vpop.f32.mrb[0].mxu0
    %v2889 = vadd.f32 0.0, %v2888
    %v2890 = vpop.f32.mrb[0].mxu0
    %v2891 = vadd.f32 0.0, %v2890
    %v2892 = vpop.f32.mrb[0].mxu0
    %v2893 = vadd.f32 0.0, %v2892
    %2894 = vmatprep.mubr.bf16.mxu0 %v2646
    %2895 = vmatmul.mubr.bf16.gmra.mrb[0].mxu0 %v2645
    %v2896 = vpop.f32.mrb[0].mxu0
    %v2897 = vadd.f32 0.0, %v2896
    %v2898 = vpop.f32.mrb[0].mxu0
    %v2899 = vadd.f32 0.0, %v2898
    %v2900 = vpop.f32.mrb[0].mxu0
    %v2901 = vadd.f32 0.0, %v2900
    %v2902 = vpop.f32.mrb[0].mxu0
    %v2903 = vadd.f32 0.0, %v2902
    %2904 = vmatprep.mubr.bf16.mxu0 %v2648
    %2905 = vmatmul.mubr.bf16.gmra.mrb[0].mxu0 %v2647
    %v2906 = vpop.f32.mrb[0].mxu0
    %v2907 = vadd.f32 0.0, %v2906
    %v2908 = vpop.f32.mrb[0].mxu0
    %v2909 = vadd.f32 0.0, %v2908
    %v2910 = vpop.f32.mrb[0].mxu0
    %v2911 = vadd.f32 0.0, %v2910
    %v2912 = vpop.f32.mrb[0].mxu0
    %v2913 = vadd.f32 0.0, %v2912
    %2914 = vdwg.mxu0
    %v2915 = vadd.f32 %v2603, %v2877
    %v2916 = vadd.f32 %v2605, %v2879
    %v2917 = vadd.f32 %v2607, %v2881
    %v2918 = vadd.f32 %v2609, %v2883
    %v2919 = vadd.f32 %v2613, %v2887
    %v2920 = vadd.f32 %v2615, %v2889
    %v2921 = vadd.f32 %v2617, %v2891
    %v2922 = vadd.f32 %v2619, %v2893
    %v2923 = vadd.f32 %v2623, %v2897
    %v2924 = vadd.f32 %v2625, %v2899
    %v2925 = vadd.f32 %v2627, %v2901
    %v2926 = vadd.f32 %v2629, %v2903
    %v2927 = vadd.f32 %v2633, %v2907
    %v2928 = vadd.f32 %v2635, %v2909
    %v2929 = vadd.f32 %v2637, %v2911
    %v2930 = vadd.f32 %v2639, %v2913
    %v2931 = vpack.c.bf16 %v2064, %v2062
    %v2932 = vpack.c.bf16 %v2065, %v2063
    %v2933 = vpack.c.bf16 %v2068, %v2066
    %v2934 = vpack.c.bf16 %v2069, %v2067
    %v2935 = vpack.c.bf16 %v2072, %v2070
    %v2936 = vpack.c.bf16 %v2073, %v2071
    %v2937 = vpack.c.bf16 %v2076, %v2074
    %v2938 = vpack.c.bf16 %v2077, %v2075
    %s2939 = scalar_lea.vmem %s5, 768
    %v2940 = vld [vmem:[%s2939] sm:$0xff]
    %v2941 = vld [vmem:[%s2939 + $0x8] sm:$0xff]
    %v2942 = vld [vmem:[%s2939 + $0x10] sm:$0xff]
    %v2943 = vld [vmem:[%s2939 + $0x18] sm:$0xff]
    %v2944 = vld [vmem:[%s2939 + $0x20] sm:$0xff]
    %v2945 = vld [vmem:[%s2939 + $0x28] sm:$0xff]
    %v2946 = vld [vmem:[%s2939 + $0x30] sm:$0xff]
    %v2947 = vld [vmem:[%s2939 + $0x38] sm:$0xff]
    %v2948 = vld [vmem:[%s2939 + $0x40] sm:$0xff]
    %v2949 = vld [vmem:[%s2939 + $0x48] sm:$0xff]
    %v2950 = vld [vmem:[%s2939 + $0x50] sm:$0xff]
    %v2951 = vld [vmem:[%s2939 + $0x58] sm:$0xff]
    %v2952 = vld [vmem:[%s2939 + $0x60] sm:$0xff]
    %v2953 = vld [vmem:[%s2939 + $0x68] sm:$0xff]
    %v2954 = vld [vmem:[%s2939 + $0x70] sm:$0xff]
    %v2955 = vld [vmem:[%s2939 + $0x78] sm:$0xff]
    %v2956 = vld [vmem:[%s2939 + $0x80] sm:$0xff]
    %v2957 = vld [vmem:[%s2939 + $0x88] sm:$0xff]
    %v2958 = vld [vmem:[%s2939 + $0x90] sm:$0xff]
    %v2959 = vld [vmem:[%s2939 + $0x98] sm:$0xff]
    %v2960 = vld [vmem:[%s2939 + $0xa0] sm:$0xff]
    %v2961 = vld [vmem:[%s2939 + $0xa8] sm:$0xff]
    %v2962 = vld [vmem:[%s2939 + $0xb0] sm:$0xff]
    %v2963 = vld [vmem:[%s2939 + $0xb8] sm:$0xff]
    %v2964 = vld [vmem:[%s2939 + $0xc0] sm:$0xff]
    %v2965 = vld [vmem:[%s2939 + $0xc8] sm:$0xff]
    %v2966 = vld [vmem:[%s2939 + $0xd0] sm:$0xff]
    %v2967 = vld [vmem:[%s2939 + $0xd8] sm:$0xff]
    %v2968 = vld [vmem:[%s2939 + $0xe0] sm:$0xff]
    %v2969 = vld [vmem:[%s2939 + $0xe8] sm:$0xff]
    %v2970 = vld [vmem:[%s2939 + $0xf0] sm:$0xff]
    %v2971 = vld [vmem:[%s2939 + $0xf8] sm:$0xff]
    %v3004 = vunpack.c.l.b16 %v2940
    %v3005 = vunpack.c.h.b16 %v2940
    %v3006 = vunpack.c.l.b16 %v2941
    %v3007 = vunpack.c.h.b16 %v2941
    %v3008 = vunpack.c.l.b16 %v2942
    %v3009 = vunpack.c.h.b16 %v2942
    %v3010 = vunpack.c.l.b16 %v2943
    %v3011 = vunpack.c.h.b16 %v2943
    %v3012 = vunpack.c.l.b16 %v2944
    %v3013 = vunpack.c.h.b16 %v2944
    %v3014 = vunpack.c.l.b16 %v2945
    %v3015 = vunpack.c.h.b16 %v2945
    %v3016 = vunpack.c.l.b16 %v2946
    %v3017 = vunpack.c.h.b16 %v2946
    %v3018 = vunpack.c.l.b16 %v2947
    %v3019 = vunpack.c.h.b16 %v2947
    %v3020 = vunpack.c.l.b16 %v2948
    %v3021 = vunpack.c.h.b16 %v2948
    %v3022 = vunpack.c.l.b16 %v2949
    %v3023 = vunpack.c.h.b16 %v2949
    %v3024 = vunpack.c.l.b16 %v2950
    %v3025 = vunpack.c.h.b16 %v2950
    %v3026 = vunpack.c.l.b16 %v2951
    %v3027 = vunpack.c.h.b16 %v2951
    %v3028 = vunpack.c.l.b16 %v2952
    %v3029 = vunpack.c.h.b16 %v2952
    %v3030 = vunpack.c.l.b16 %v2953
    %v3031 = vunpack.c.h.b16 %v2953
    %v3032 = vunpack.c.l.b16 %v2954
    %v3033 = vunpack.c.h.b16 %v2954
    %v3034 = vunpack.c.l.b16 %v2955
    %v3035 = vunpack.c.h.b16 %v2955
    %v3036 = vunpack.c.l.b16 %v2956
    %v3037 = vunpack.c.h.b16 %v2956
    %v3038 = vunpack.c.l.b16 %v2957
    %v3039 = vunpack.c.h.b16 %v2957
    %v3040 = vunpack.c.l.b16 %v2958
    %v3041 = vunpack.c.h.b16 %v2958
    %v3042 = vunpack.c.l.b16 %v2959
    %v3043 = vunpack.c.h.b16 %v2959
    %v3044 = vunpack.c.l.b16 %v2960
    %v3045 = vunpack.c.h.b16 %v2960
    %v3046 = vunpack.c.l.b16 %v2961
    %v3047 = vunpack.c.h.b16 %v2961
    %v3048 = vunpack.c.l.b16 %v2962
    %v3049 = vunpack.c.h.b16 %v2962
    %v3050 = vunpack.c.l.b16 %v2963
    %v3051 = vunpack.c.h.b16 %v2963
    %v3052 = vunpack.c.l.b16 %v2964
    %v3053 = vunpack.c.h.b16 %v2964
    %v3054 = vunpack.c.l.b16 %v2965
    %v3055 = vunpack.c.h.b16 %v2965
    %v3056 = vunpack.c.l.b16 %v2966
    %v3057 = vunpack.c.h.b16 %v2966
    %v3058 = vunpack.c.l.b16 %v2967
    %v3059 = vunpack.c.h.b16 %v2967
    %v3060 = vunpack.c.l.b16 %v2968
    %v3061 = vunpack.c.h.b16 %v2968
    %v3062 = vunpack.c.l.b16 %v2969
    %v3063 = vunpack.c.h.b16 %v2969
    %v3064 = vunpack.c.l.b16 %v2970
    %v3065 = vunpack.c.h.b16 %v2970
    %v3066 = vunpack.c.l.b16 %v2971
    %v3067 = vunpack.c.h.b16 %v2971
    %v3068 = vpack.c.b16 %v3006, %v3004
    %v3069 = vpack.c.b16 %v3007, %v3005
    %v3070 = vpack.c.b16 %v3010, %v3008
    %v3071 = vpack.c.b16 %v3011, %v3009
    %v3072 = vpack.c.b16 %v3014, %v3012
    %v3073 = vpack.c.b16 %v3015, %v3013
    %v3074 = vpack.c.b16 %v3018, %v3016
    %v3075 = vpack.c.b16 %v3019, %v3017
    %v3076 = vpack.c.b16 %v3022, %v3020
    %v3077 = vpack.c.b16 %v3023, %v3021
    %v3078 = vpack.c.b16 %v3026, %v3024
    %v3079 = vpack.c.b16 %v3027, %v3025
    %v3080 = vpack.c.b16 %v3030, %v3028
    %v3081 = vpack.c.b16 %v3031, %v3029
    %v3082 = vpack.c.b16 %v3034, %v3032
    %v3083 = vpack.c.b16 %v3035, %v3033
    %v3084 = vpack.c.b16 %v3038, %v3036
    %v3085 = vpack.c.b16 %v3039, %v3037
    %v3086 = vpack.c.b16 %v3042, %v3040
    %v3087 = vpack.c.b16 %v3043, %v3041
    %v3088 = vpack.c.b16 %v3046, %v3044
    %v3089 = vpack.c.b16 %v3047, %v3045
    %v3090 = vpack.c.b16 %v3050, %v3048
    %v3091 = vpack.c.b16 %v3051, %v3049
    %v3092 = vpack.c.b16 %v3054, %v3052
    %v3093 = vpack.c.b16 %v3055, %v3053
    %v3094 = vpack.c.b16 %v3058, %v3056
    %v3095 = vpack.c.b16 %v3059, %v3057
    %v3096 = vpack.c.b16 %v3062, %v3060
    %v3097 = vpack.c.b16 %v3063, %v3061
    %v3098 = vpack.c.b16 %v3066, %v3064
    %v3099 = vpack.c.b16 %v3067, %v3065
    %3132 = vmatprep.subr.bf16.mxu0 %v3069
    %3133 = vmatpush1.bf16.msra.mxu0 %v3068
    %3134 = vmatprep.subr.bf16.mxu0 %v3071
    %3135 = vmatpush1.bf16.msra.mxu0 %v3070
    %3136 = vmatprep.subr.bf16.mxu0 %v3073
    %3137 = vmatpush1.bf16.msra.mxu0 %v3072
    %3138 = vmatprep.subr.bf16.mxu0 %v3075
    %3139 = vmatpush1.bf16.msra.mxu0 %v3074
    %3140 = vmatprep.subr.bf16.mxu0 %v3077
    %3141 = vmatpush1.bf16.msra.mxu0 %v3076
    %3142 = vmatprep.subr.bf16.mxu0 %v3079
    %3143 = vmatpush1.bf16.msra.mxu0 %v3078
    %3144 = vmatprep.subr.bf16.mxu0 %v3081
    %3145 = vmatpush1.bf16.msra.mxu0 %v3080
    %3146 = vmatprep.subr.bf16.mxu0 %v3083
    %3147 = vmatpush1.bf16.msra.mxu0 %v3082
    %3148 = vmatprep.subr.bf16.mxu0 %v3085
    %3149 = vmatpush1.bf16.msra.mxu0 %v3084
    %3150 = vmatprep.subr.bf16.mxu0 %v3087
    %3151 = vmatpush1.bf16.msra.mxu0 %v3086
    %3152 = vmatprep.subr.bf16.mxu0 %v3089
    %3153 = vmatpush1.bf16.msra.mxu0 %v3088
    %3154 = vmatprep.subr.bf16.mxu0 %v3091
    %3155 = vmatpush1.bf16.msra.mxu0 %v3090
    %3156 = vmatprep.subr.bf16.mxu0 %v3093
    %3157 = vmatpush1.bf16.msra.mxu0 %v3092
    %3158 = vmatprep.subr.bf16.mxu0 %v3095
    %3159 = vmatpush1.bf16.msra.mxu0 %v3094
    %3160 = vmatprep.subr.bf16.mxu0 %v3097
    %3161 = vmatpush1.bf16.msra.mxu0 %v3096
    %3162 = vmatprep.subr.bf16.mxu0 %v3099
    %3163 = vmatpush1.bf16.msra.mxu0 %v3098
    %3164 = vmatprep.mubr.bf16.mxu0 %v2932
    %3165 = vmatmul.mubr.bf16.gmra.mrb[0].mxu0 %v2931
    %v3166 = vpop.f32.mrb[0].mxu0
    %v3167 = vadd.f32 0.0, %v3166
    %v3168 = vpop.f32.mrb[0].mxu0
    %v3169 = vadd.f32 0.0, %v3168
    %v3170 = vpop.f32.mrb[0].mxu0
    %v3171 = vadd.f32 0.0, %v3170
    %v3172 = vpop.f32.mrb[0].mxu0
    %v3173 = vadd.f32 0.0, %v3172
    %3174 = vmatprep.mubr.bf16.mxu0 %v2934
    %3175 = vmatmul.mubr.bf16.gmra.mrb[0].mxu0 %v2933
    %v3176 = vpop.f32.mrb[0].mxu0
    %v3177 = vadd.f32 0.0, %v3176
    %v3178 = vpop.f32.mrb[0].mxu0
    %v3179 = vadd.f32 0.0, %v3178
    %v3180 = vpop.f32.mrb[0].mxu0
    %v3181 = vadd.f32 0.0, %v3180
    %v3182 = vpop.f32.mrb[0].mxu0
    %v3183 = vadd.f32 0.0, %v3182
    %3184 = vmatprep.mubr.bf16.mxu0 %v2936
    %3185 = vmatmul.mubr.bf16.gmra.mrb[0].mxu0 %v2935
    %v3186 = vpop.f32.mrb[0].mxu0
    %v3187 = vadd.f32 0.0, %v3186
    %v3188 = vpop.f32.mrb[0].mxu0
    %v3189 = vadd.f32 0.0, %v3188
    %v3190 = vpop.f32.mrb[0].mxu0
    %v3191 = vadd.f32 0.0, %v3190
    %v3192 = vpop.f32.mrb[0].mxu0
    %v3193 = vadd.f32 0.0, %v3192
    %3194 = vmatprep.mubr.bf16.mxu0 %v2938
    %3195 = vmatmul.mubr.bf16.gmra.mrb[0].mxu0 %v2937
    %v3196 = vpop.f32.mrb[0].mxu0
    %v3197 = vadd.f32 0.0, %v3196
    %v3198 = vpop.f32.mrb[0].mxu0
    %v3199 = vadd.f32 0.0, %v3198
    %v3200 = vpop.f32.mrb[0].mxu0
    %v3201 = vadd.f32 0.0, %v3200
    %v3202 = vpop.f32.mrb[0].mxu0
    %v3203 = vadd.f32 0.0, %v3202
    %3204 = vdwg.mxu0
    %v3205 = vadd.f32 %v2915, %v3167
    %v3206 = vadd.f32 %v2916, %v3169
    %v3207 = vadd.f32 %v2917, %v3171
    %v3208 = vadd.f32 %v2918, %v3173
    %v3209 = vadd.f32 %v2919, %v3177
    %v3210 = vadd.f32 %v2920, %v3179
    %v3211 = vadd.f32 %v2921, %v3181
    %v3212 = vadd.f32 %v2922, %v3183
    %v3213 = vadd.f32 %v2923, %v3187
    %v3214 = vadd.f32 %v2924, %v3189
    %v3215 = vadd.f32 %v2925, %v3191
    %v3216 = vadd.f32 %v2926, %v3193
    %v3217 = vadd.f32 %v2927, %v3197
    %v3218 = vadd.f32 %v2928, %v3199
    %v3219 = vadd.f32 %v2929, %v3201
    %v3220 = vadd.f32 %v2930, %v3203
    %v3221 = vpack.c.bf16 %v2080, %v2078
    %v3222 = vpack.c.bf16 %v2081, %v2079
    %v3223 = vpack.c.bf16 %v2084, %v2082
    %v3224 = vpack.c.bf16 %v2085, %v2083
    %v3225 = vpack.c.bf16 %v2088, %v2086
    %v3226 = vpack.c.bf16 %v2089, %v2087
    %v3227 = vpack.c.bf16 %v2092, %v2090
    %v3228 = vpack.c.bf16 %v2093, %v2091
    %s3229 = scalar_lea.vmem %s5, 1024
    %v3230 = vld [vmem:[%s3229] sm:$0xff]
    %v3231 = vld [vmem:[%s3229 + $0x8] sm:$0xff]
    %v3232 = vld [vmem:[%s3229 + $0x10] sm:$0xff]
    %v3233 = vld [vmem:[%s3229 + $0x18] sm:$0xff]
    %v3234 = vld [vmem:[%s3229 + $0x20] sm:$0xff]
    %v3235 = vld [vmem:[%s3229 + $0x28] sm:$0xff]
    %v3236 = vld [vmem:[%s3229 + $0x30] sm:$0xff]
    %v3237 = vld [vmem:[%s3229 + $0x38] sm:$0xff]
    %v3238 = vld [vmem:[%s3229 + $0x40] sm:$0xff]
    %v3239 = vld [vmem:[%s3229 + $0x48] sm:$0xff]
    %v3240 = vld [vmem:[%s3229 + $0x50] sm:$0xff]
    %v3241 = vld [vmem:[%s3229 + $0x58] sm:$0xff]
    %v3242 = vld [vmem:[%s3229 + $0x60] sm:$0xff]
    %v3243 = vld [vmem:[%s3229 + $0x68] sm:$0xff]
    %v3244 = vld [vmem:[%s3229 + $0x70] sm:$0xff]
    %v3245 = vld [vmem:[%s3229 + $0x78] sm:$0xff]
    %v3246 = vld [vmem:[%s3229 + $0x80] sm:$0xff]
    %v3247 = vld [vmem:[%s3229 + $0x88] sm:$0xff]
    %v3248 = vld [vmem:[%s3229 + $0x90] sm:$0xff]
    %v3249 = vld [vmem:[%s3229 + $0x98] sm:$0xff]
    %v3250 = vld [vmem:[%s3229 + $0xa0] sm:$0xff]
    %v3251 = vld [vmem:[%s3229 + $0xa8] sm:$0xff]
    %v3252 = vld [vmem:[%s3229 + $0xb0] sm:$0xff]
    %v3253 = vld [vmem:[%s3229 + $0xb8] sm:$0xff]
    %v3254 = vld [vmem:[%s3229 + $0xc0] sm:$0xff]
    %v3255 = vld [vmem:[%s3229 + $0xc8] sm:$0xff]
    %v3256 = vld [vmem:[%s3229 + $0xd0] sm:$0xff]
    %v3257 = vld [vmem:[%s3229 + $0xd8] sm:$0xff]
    %v3258 = vld [vmem:[%s3229 + $0xe0] sm:$0xff]
    %v3259 = vld [vmem:[%s3229 + $0xe8] sm:$0xff]
    %v3260 = vld [vmem:[%s3229 + $0xf0] sm:$0xff]
    %v3261 = vld [vmem:[%s3229 + $0xf8] sm:$0xff]
    %v3294 = vunpack.c.l.b16 %v3230
    %v3295 = vunpack.c.h.b16 %v3230
    %v3296 = vunpack.c.l.b16 %v3231
    %v3297 = vunpack.c.h.b16 %v3231
    %v3298 = vunpack.c.l.b16 %v3232
    %v3299 = vunpack.c.h.b16 %v3232
    %v3300 = vunpack.c.l.b16 %v3233
    %v3301 = vunpack.c.h.b16 %v3233
    %v3302 = vunpack.c.l.b16 %v3234
    %v3303 = vunpack.c.h.b16 %v3234
    %v3304 = vunpack.c.l.b16 %v3235
    %v3305 = vunpack.c.h.b16 %v3235
    %v3306 = vunpack.c.l.b16 %v3236
    %v3307 = vunpack.c.h.b16 %v3236
    %v3308 = vunpack.c.l.b16 %v3237
    %v3309 = vunpack.c.h.b16 %v3237
    %v3310 = vunpack.c.l.b16 %v3238
    %v3311 = vunpack.c.h.b16 %v3238
    %v3312 = vunpack.c.l.b16 %v3239
    %v3313 = vunpack.c.h.b16 %v3239
    %v3314 = vunpack.c.l.b16 %v3240
    %v3315 = vunpack.c.h.b16 %v3240
    %v3316 = vunpack.c.l.b16 %v3241
    %v3317 = vunpack.c.h.b16 %v3241
    %v3318 = vunpack.c.l.b16 %v3242
    %v3319 = vunpack.c.h.b16 %v3242
    %v3320 = vunpack.c.l.b16 %v3243
    %v3321 = vunpack.c.h.b16 %v3243
    %v3322 = vunpack.c.l.b16 %v3244
    %v3323 = vunpack.c.h.b16 %v3244
    %v3324 = vunpack.c.l.b16 %v3245
    %v3325 = vunpack.c.h.b16 %v3245
    %v3326 = vunpack.c.l.b16 %v3246
    %v3327 = vunpack.c.h.b16 %v3246
    %v3328 = vunpack.c.l.b16 %v3247
    %v3329 = vunpack.c.h.b16 %v3247
    %v3330 = vunpack.c.l.b16 %v3248
    %v3331 = vunpack.c.h.b16 %v3248
    %v3332 = vunpack.c.l.b16 %v3249
    %v3333 = vunpack.c.h.b16 %v3249
    %v3334 = vunpack.c.l.b16 %v3250
    %v3335 = vunpack.c.h.b16 %v3250
    %v3336 = vunpack.c.l.b16 %v3251
    %v3337 = vunpack.c.h.b16 %v3251
    %v3338 = vunpack.c.l.b16 %v3252
    %v3339 = vunpack.c.h.b16 %v3252
    %v3340 = vunpack.c.l.b16 %v3253
    %v3341 = vunpack.c.h.b16 %v3253
    %v3342 = vunpack.c.l.b16 %v3254
    %v3343 = vunpack.c.h.b16 %v3254
    %v3344 = vunpack.c.l.b16 %v3255
    %v3345 = vunpack.c.h.b16 %v3255
    %v3346 = vunpack.c.l.b16 %v3256
    %v3347 = vunpack.c.h.b16 %v3256
    %v3348 = vunpack.c.l.b16 %v3257
    %v3349 = vunpack.c.h.b16 %v3257
    %v3350 = vunpack.c.l.b16 %v3258
    %v3351 = vunpack.c.h.b16 %v3258
    %v3352 = vunpack.c.l.b16 %v3259
    %v3353 = vunpack.c.h.b16 %v3259
    %v3354 = vunpack.c.l.b16 %v3260
    %v3355 = vunpack.c.h.b16 %v3260
    %v3356 = vunpack.c.l.b16 %v3261
    %v3357 = vunpack.c.h.b16 %v3261
    %v3358 = vpack.c.b16 %v3296, %v3294
    %v3359 = vpack.c.b16 %v3297, %v3295
    %v3360 = vpack.c.b16 %v3300, %v3298
    %v3361 = vpack.c.b16 %v3301, %v3299
    %v3362 = vpack.c.b16 %v3304, %v3302
    %v3363 = vpack.c.b16 %v3305, %v3303
    %v3364 = vpack.c.b16 %v3308, %v3306
    %v3365 = vpack.c.b16 %v3309, %v3307
    %v3366 = vpack.c.b16 %v3312, %v3310
    %v3367 = vpack.c.b16 %v3313, %v3311
    %v3368 = vpack.c.b16 %v3316, %v3314
    %v3369 = vpack.c.b16 %v3317, %v3315
    %v3370 = vpack.c.b16 %v3320, %v3318
    %v3371 = vpack.c.b16 %v3321, %v3319
    %v3372 = vpack.c.b16 %v3324, %v3322
    %v3373 = vpack.c.b16 %v3325, %v3323
    %v3374 = vpack.c.b16 %v3328, %v3326
    %v3375 = vpack.c.b16 %v3329, %v3327
    %v3376 = vpack.c.b16 %v3332, %v3330
    %v3377 = vpack.c.b16 %v3333, %v3331
    %v3378 = vpack.c.b16 %v3336, %v3334
    %v3379 = vpack.c.b16 %v3337, %v3335
    %v3380 = vpack.c.b16 %v3340, %v3338
    %v3381 = vpack.c.b16 %v3341, %v3339
    %v3382 = vpack.c.b16 %v3344, %v3342
    %v3383 = vpack.c.b16 %v3345, %v3343
    %v3384 = vpack.c.b16 %v3348, %v3346
    %v3385 = vpack.c.b16 %v3349, %v3347
    %v3386 = vpack.c.b16 %v3352, %v3350
    %v3387 = vpack.c.b16 %v3353, %v3351
    %v3388 = vpack.c.b16 %v3356, %v3354
    %v3389 = vpack.c.b16 %v3357, %v3355
    %3422 = vmatprep.subr.bf16.mxu0 %v3359
    %3423 = vmatpush1.bf16.msra.mxu0 %v3358
    %3424 = vmatprep.subr.bf16.mxu0 %v3361
    %3425 = vmatpush1.bf16.msra.mxu0 %v3360
    %3426 = vmatprep.subr.bf16.mxu0 %v3363
    %3427 = vmatpush1.bf16.msra.mxu0 %v3362
    %3428 = vmatprep.subr.bf16.mxu0 %v3365
    %3429 = vmatpush1.bf16.msra.mxu0 %v3364
    %3430 = vmatprep.subr.bf16.mxu0 %v3367
    %3431 = vmatpush1.bf16.msra.mxu0 %v3366
    %3432 = vmatprep.subr.bf16.mxu0 %v3369
    %3433 = vmatpush1.bf16.msra.mxu0 %v3368
    %3434 = vmatprep.subr.bf16.mxu0 %v3371
    %3435 = vmatpush1.bf16.msra.mxu0 %v3370
    %3436 = vmatprep.subr.bf16.mxu0 %v3373
    %3437 = vmatpush1.bf16.msra.mxu0 %v3372
    %3438 = vmatprep.subr.bf16.mxu0 %v3375
    %3439 = vmatpush1.bf16.msra.mxu0 %v3374
    %3440 = vmatprep.subr.bf16.mxu0 %v3377
    %3441 = vmatpush1.bf16.msra.mxu0 %v3376
    %3442 = vmatprep.subr.bf16.mxu0 %v3379
    %3443 = vmatpush1.bf16.msra.mxu0 %v3378
    %3444 = vmatprep.subr.bf16.mxu0 %v3381
    %3445 = vmatpush1.bf16.msra.mxu0 %v3380
    %3446 = vmatprep.subr.bf16.mxu0 %v3383
    %3447 = vmatpush1.bf16.msra.mxu0 %v3382
    %3448 = vmatprep.subr.bf16.mxu0 %v3385
    %3449 = vmatpush1.bf16.msra.mxu0 %v3384
    %3450 = vmatprep.subr.bf16.mxu0 %v3387
    %3451 = vmatpush1.bf16.msra.mxu0 %v3386
    %3452 = vmatprep.subr.bf16.mxu0 %v3389
    %3453 = vmatpush1.bf16.msra.mxu0 %v3388
    %3454 = vmatprep.mubr.bf16.mxu0 %v3222
    %3455 = vmatmul.mubr.bf16.gmra.mrb[0].mxu0 %v3221
    %v3456 = vpop.f32.mrb[0].mxu0
    %v3457 = vadd.f32 0.0, %v3456
    %v3458 = vpop.f32.mrb[0].mxu0
    %v3459 = vadd.f32 0.0, %v3458
    %v3460 = vpop.f32.mrb[0].mxu0
    %v3461 = vadd.f32 0.0, %v3460
    %v3462 = vpop.f32.mrb[0].mxu0
    %v3463 = vadd.f32 0.0, %v3462
    %3464 = vmatprep.mubr.bf16.mxu0 %v3224
    %3465 = vmatmul.mubr.bf16.gmra.mrb[0].mxu0 %v3223
    %v3466 = vpop.f32.mrb[0].mxu0
    %v3467 = vadd.f32 0.0, %v3466
    %v3468 = vpop.f32.mrb[0].mxu0
    %v3469 = vadd.f32 0.0, %v3468
    %v3470 = vpop.f32.mrb[0].mxu0
    %v3471 = vadd.f32 0.0, %v3470
    %v3472 = vpop.f32.mrb[0].mxu0
    %v3473 = vadd.f32 0.0, %v3472
    %3474 = vmatprep.mubr.bf16.mxu0 %v3226
    %3475 = vmatmul.mubr.bf16.gmra.mrb[0].mxu0 %v3225
    %v3476 = vpop.f32.mrb[0].mxu0
    %v3477 = vadd.f32 0.0, %v3476
    %v3478 = vpop.f32.mrb[0].mxu0
    %v3479 = vadd.f32 0.0, %v3478
    %v3480 = vpop.f32.mrb[0].mxu0
    %v3481 = vadd.f32 0.0, %v3480
    %v3482 = vpop.f32.mrb[0].mxu0
    %v3483 = vadd.f32 0.0, %v3482
    %3484 = vmatprep.mubr.bf16.mxu0 %v3228
    %3485 = vmatmul.mubr.bf16.gmra.mrb[0].mxu0 %v3227
    %v3486 = vpop.f32.mrb[0].mxu0
    %v3487 = vadd.f32 0.0, %v3486
    %v3488 = vpop.f32.mrb[0].mxu0
    %v3489 = vadd.f32 0.0, %v3488
    %v3490 = vpop.f32.mrb[0].mxu0
    %v3491 = vadd.f32 0.0, %v3490
    %v3492 = vpop.f32.mrb[0].mxu0
    %v3493 = vadd.f32 0.0, %v3492
    %3494 = vdwg.mxu0
    %v3495 = vadd.f32 %v3205, %v3457
    %v3496 = vadd.f32 %v3206, %v3459
    %v3497 = vadd.f32 %v3207, %v3461
    %v3498 = vadd.f32 %v3208, %v3463
    %v3499 = vadd.f32 %v3209, %v3467
    %v3500 = vadd.f32 %v3210, %v3469
    %v3501 = vadd.f32 %v3211, %v3471
    %v3502 = vadd.f32 %v3212, %v3473
    %v3503 = vadd.f32 %v3213, %v3477
    %v3504 = vadd.f32 %v3214, %v3479
    %v3505 = vadd.f32 %v3215, %v3481
    %v3506 = vadd.f32 %v3216, %v3483
    %v3507 = vadd.f32 %v3217, %v3487
    %v3508 = vadd.f32 %v3218, %v3489
    %v3509 = vadd.f32 %v3219, %v3491
    %v3510 = vadd.f32 %v3220, %v3493
    %v3511 = vld [vmem:[%s6] sm:$0x3]
    %v3513 = vlaneseq
    %v3514 = vshrl.u32 %v3513, 7
    %v3515 = vsub.s32 0, %v3514
    %v3516 = vrot.slane %v3511, %v3515
    %v3517 = vlaneseq
    %v3518 = vshrl.u32 %v3517, 7
    %v3519 = vsub.s32 1, %v3518
    %v3520 = vrot.slane %v3511, %v3519
    %v3523 = vadd.f32 %v3495, %v3516
    %v3524 = vadd.f32 %v3496, %v3520
    %v3525 = vadd.f32 %v3497, %v3516
    %v3526 = vadd.f32 %v3498, %v3520
    %v3527 = vadd.f32 %v3499, %v3516
    %v3528 = vadd.f32 %v3500, %v3520
    %v3529 = vadd.f32 %v3501, %v3516
    %v3530 = vadd.f32 %v3502, %v3520
    %v3531 = vadd.f32 %v3503, %v3516
    %v3532 = vadd.f32 %v3504, %v3520
    %v3533 = vadd.f32 %v3505, %v3516
    %v3534 = vadd.f32 %v3506, %v3520
    %v3535 = vadd.f32 %v3507, %v3516
    %v3536 = vadd.f32 %v3508, %v3520
    %v3537 = vadd.f32 %v3509, %v3516
    %v3538 = vadd.f32 %v3510, %v3520
    %v3539 = vmax.f32 %v3523, 0.0
    %v3540 = vmax.f32 %v3524, 0.0
    %v3541 = vmax.f32 %v3525, 0.0
    %v3542 = vmax.f32 %v3526, 0.0
    %v3543 = vmax.f32 %v3527, 0.0
    %v3544 = vmax.f32 %v3528, 0.0
    %v3545 = vmax.f32 %v3529, 0.0
    %v3546 = vmax.f32 %v3530, 0.0
    %v3547 = vmax.f32 %v3531, 0.0
    %v3548 = vmax.f32 %v3532, 0.0
    %v3549 = vmax.f32 %v3533, 0.0
    %v3550 = vmax.f32 %v3534, 0.0
    %v3551 = vmax.f32 %v3535, 0.0
    %v3552 = vmax.f32 %v3536, 0.0
    %v3553 = vmax.f32 %v3537, 0.0
    %v3554 = vmax.f32 %v3538, 0.0
    %v3555 = vmax.f32 %v3539, %v3540
    %v3556 = vmax.f32 %v3541, %v3542
    %v3557 = vmax.f32 %v3543, %v3544
    %v3558 = vmax.f32 %v3545, %v3546
    %v3559 = vmax.f32 %v3547, %v3548
    %v3560 = vmax.f32 %v3549, %v3550
    %v3561 = vmax.f32 %v3551, %v3552
    %v3562 = vmax.f32 %v3553, %v3554
    %v3563 = vpack.c.bf16 %v3556, %v3555
    %v3564 = vpack.c.bf16 %v3558, %v3557
    %v3565 = vpack.c.bf16 %v3560, %v3559
    %v3566 = vpack.c.bf16 %v3562, %v3561
    %v3567 = vld [vmem:[%s7] sm:$0xf]
    %v3568 = vld [vmem:[%s7 + $0x4] sm:$0xf]
    %v3569 = vld [vmem:[%s7 + $0x8] sm:$0xf]
    %v3570 = vld [vmem:[%s7 + $0xc] sm:$0xf]
    %v3575 = vunpack.c.l.b16 %v3567
    %v3576 = vunpack.c.l.b16 %v3568
    %v3577 = vunpack.c.l.b16 %v3569
    %v3578 = vunpack.c.l.b16 %v3570
    %v3579 = vpack.c.b16 %v3576, %v3575
    %v3580 = vpack.c.b16 %v3578, %v3577
    %v3582 = vsel %vm1207, %v3579, 0
    %v3585 = vsel %vm1207, %v3580, 0
    %3587 = vmatprep.subr.bf16.mxu0 0
    %3588 = vmatpush1.bf16.msra.mxu0 %v3563
    %3589 = vmatprep.subr.bf16.mxu0 0
    %3590 = vmatpush1.bf16.msra.mxu0 %v3564
    %3591 = vmatprep.subr.bf16.mxu0 0
    %3592 = vmatpush1.bf16.msra.mxu0 %v3565
    %3593 = vmatprep.subr.bf16.mxu0 0
    %3594 = vmatpush1.bf16.msra.mxu0 %v3566
    %3595 = vmatprep.subr.bf16.mxu0 0
    %3596 = vmatpush1.bf16.msra.mxu0 0
    %3597 = vmatprep.subr.bf16.mxu0 0
    %3598 = vmatpush1.bf16.msra.mxu0 0
    %3599 = vmatprep.subr.bf16.mxu0 0
    %3600 = vmatpush1.bf16.msra.mxu0 0
    %3601 = vmatprep.subr.bf16.mxu0 0
    %3602 = vmatpush1.bf16.msra.mxu0 0
    %3603 = vmatprep.subr.bf16.mxu0 0
    %3604 = vmatpush1.bf16.msra.mxu0 0
    %3605 = vmatprep.subr.bf16.mxu0 0
    %3606 = vmatpush1.bf16.msra.mxu0 0
    %3607 = vmatprep.subr.bf16.mxu0 0
    %3608 = vmatpush1.bf16.msra.mxu0 0
    %3609 = vmatprep.subr.bf16.mxu0 0
    %3610 = vmatpush1.bf16.msra.mxu0 0
    %3611 = vmatprep.subr.bf16.mxu0 0
    %3612 = vmatpush1.bf16.msra.mxu0 0
    %3613 = vmatprep.subr.bf16.mxu0 0
    %3614 = vmatpush1.bf16.msra.mxu0 0
    %3615 = vmatprep.subr.bf16.mxu0 0
    %3616 = vmatpush1.bf16.msra.mxu0 0
    %3617 = vmatprep.subr.bf16.mxu0 0
    %3618 = vmatpush1.bf16.msra.mxu0 0
    %3619 = vmatprep.mubr.bf16.mxu0 0
    %3620 = vmatmul.mubr.bf16.gmra.mrb[0].mxu0 %v3582
    %v3621 = vpop.f32.mrb[0].mxu0
    %v3622 = vadd.f32 0.0, %v3621
    %v3623 = vpop.f32.mrb[0].mxu0
    %v3624 = vpop.f32.mrb[0].mxu0
    %v3625 = vadd.f32 0.0, %v3624
    %v3626 = vpop.f32.mrb[0].mxu0
    %3627 = vmatprep.mubr.bf16.mxu0 0
    %3628 = vmatmul.mubr.bf16.gmra.mrb[0].mxu0 %v3585
    %v3629 = vpop.f32.mrb[0].mxu0
    %v3630 = vadd.f32 0.0, %v3629
    %v3631 = vpop.f32.mrb[0].mxu0
    %v3632 = vpop.f32.mrb[0].mxu0
    %v3633 = vadd.f32 0.0, %v3632
    %v3634 = vpop.f32.mrb[0].mxu0
    %3635 = vdwg.mxu0
    %v3636 = vld [vmem:[#allocation2] sm:$0xf]
    %v3637 = vld [vmem:[#allocation2 + $0x4] sm:$0xf]
    %v3638 = vld [vmem:[#allocation2 + $0x8] sm:$0xf]
    %v3639 = vld [vmem:[#allocation2 + $0xc] sm:$0xf]
    %v3644 = vunpack.c.l.b16 %v3636
    %v3645 = vunpack.c.l.b16 %v3637
    %v3646 = vunpack.c.l.b16 %v3638
    %v3647 = vunpack.c.l.b16 %v3639
    %v3648 = vpack.c.b16 %v3645, %v3644
    %v3649 = vpack.c.b16 %v3647, %v3646
    %v3651 = vsel %vm1207, %v3648, 0
    %v3654 = vsel %vm1207, %v3649, 0
    %3656 = vmatprep.subr.bf16.mxu0 0
    %3657 = vmatpush1.bf16.msra.mxu0 %v3563
    %3658 = vmatprep.subr.bf16.mxu0 0
    %3659 = vmatpush1.bf16.msra.mxu0 %v3564
    %3660 = vmatprep.subr.bf16.mxu0 0
    %3661 = vmatpush1.bf16.msra.mxu0 %v3565
    %3662 = vmatprep.subr.bf16.mxu0 0
    %3663 = vmatpush1.bf16.msra.mxu0 %v3566
    %3664 = vmatprep.subr.bf16.mxu0 0
    %3665 = vmatpush1.bf16.msra.mxu0 0
    %3666 = vmatprep.subr.bf16.mxu0 0
    %3667 = vmatpush1.bf16.msra.mxu0 0
    %3668 = vmatprep.subr.bf16.mxu0 0
    %3669 = vmatpush1.bf16.msra.mxu0 0
    %3670 = vmatprep.subr.bf16.mxu0 0
    %3671 = vmatpush1.bf16.msra.mxu0 0
    %3672 = vmatprep.subr.bf16.mxu0 0
    %3673 = vmatpush1.bf16.msra.mxu0 0
    %3674 = vmatprep.subr.bf16.mxu0 0
    %3675 = vmatpush1.bf16.msra.mxu0 0
    %3676 = vmatprep.subr.bf16.mxu0 0
    %3677 = vmatpush1.bf16.msra.mxu0 0
    %3678 = vmatprep.subr.bf16.mxu0 0
    %3679 = vmatpush1.bf16.msra.mxu0 0
    %3680 = vmatprep.subr.bf16.mxu0 0
    %3681 = vmatpush1.bf16.msra.mxu0 0
    %3682 = vmatprep.subr.bf16.mxu0 0
    %3683 = vmatpush1.bf16.msra.mxu0 0
    %3684 = vmatprep.subr.bf16.mxu0 0
    %3685 = vmatpush1.bf16.msra.mxu0 0
    %3686 = vmatprep.subr.bf16.mxu0 0
    %3687 = vmatpush1.bf16.msra.mxu0 0
    %3688 = vmatprep.mubr.bf16.mxu0 0
    %3689 = vmatmul.mubr.bf16.gmra.mrb[0].mxu0 %v3651
    %v3690 = vpop.f32.mrb[0].mxu0
    %v3691 = vadd.f32 0.0, %v3690
    %v3692 = vpop.f32.mrb[0].mxu0
    %v3693 = vpop.f32.mrb[0].mxu0
    %v3694 = vadd.f32 0.0, %v3693
    %v3695 = vpop.f32.mrb[0].mxu0
    %3696 = vmatprep.mubr.bf16.mxu0 0
    %3697 = vmatmul.mubr.bf16.gmra.mrb[0].mxu0 %v3654
    %v3698 = vpop.f32.mrb[0].mxu0
    %v3699 = vadd.f32 0.0, %v3698
    %v3700 = vpop.f32.mrb[0].mxu0
    %v3701 = vpop.f32.mrb[0].mxu0
    %v3702 = vadd.f32 0.0, %v3701
    %v3703 = vpop.f32.mrb[0].mxu0
    %3704 = vdwg.mxu0
    %v3705 = vmax.f32 %v3622, %v3691
    %v3706 = vmax.f32 %v3625, %v3694
    %v3707 = vmax.f32 %v3630, %v3699
    %v3708 = vmax.f32 %v3633, %v3702
    %v3709 = vpack.c.bf16 %v3705, %v3705
    %v3710 = vld [vmem:[%s9] sm:$0xff]
    %v3711 = vld [vmem:[%s9 + $0x8] sm:$0xff]
    %v3712 = vld [vmem:[%s9 + $0x10] sm:$0xff]
    %v3713 = vld [vmem:[%s9 + $0x18] sm:$0xff]
    %v3714 = vld [vmem:[%s9 + $0x20] sm:$0xff]
    %v3715 = vld [vmem:[%s9 + $0x28] sm:$0xff]
    %v3716 = vld [vmem:[%s9 + $0x30] sm:$0xff]
    %v3717 = vld [vmem:[%s9 + $0x38] sm:$0xff]
    %v3718 = vld [vmem:[%s9 + $0x40] sm:$0xff]
    %v3719 = vld [vmem:[%s9 + $0x48] sm:$0xff]
    %v3720 = vld [vmem:[%s9 + $0x50] sm:$0xff]
    %v3721 = vld [vmem:[%s9 + $0x58] sm:$0xff]
    %v3722 = vld [vmem:[%s9 + $0x60] sm:$0xff]
    %v3723 = vld [vmem:[%s9 + $0x68] sm:$0xff]
    %v3724 = vld [vmem:[%s9 + $0x70] sm:$0xff]
    %v3725 = vld [vmem:[%s9 + $0x78] sm:$0xff]
    %v3726 = vld [vmem:[%s9 + $0x80] sm:$0xff]
    %v3727 = vld [vmem:[%s9 + $0x88] sm:$0xff]
    %v3728 = vld [vmem:[%s9 + $0x90] sm:$0xff]
    %v3729 = vld [vmem:[%s9 + $0x98] sm:$0xff]
    %v3730 = vld [vmem:[%s9 + $0xa0] sm:$0xff]
    %v3731 = vld [vmem:[%s9 + $0xa8] sm:$0xff]
    %v3732 = vld [vmem:[%s9 + $0xb0] sm:$0xff]
    %v3733 = vld [vmem:[%s9 + $0xb8] sm:$0xff]
    %v3734 = vld [vmem:[%s9 + $0xc0] sm:$0xff]
    %v3735 = vld [vmem:[%s9 + $0xc8] sm:$0xff]
    %v3736 = vld [vmem:[%s9 + $0xd0] sm:$0xff]
    %v3737 = vld [vmem:[%s9 + $0xd8] sm:$0xff]
    %v3738 = vld [vmem:[%s9 + $0xe0] sm:$0xff]
    %v3739 = vld [vmem:[%s9 + $0xe8] sm:$0xff]
    %v3740 = vld [vmem:[%s9 + $0xf0] sm:$0xff]
    %v3741 = vld [vmem:[%s9 + $0xf8] sm:$0xff]
    %v3742 = vpack.c.bf16 %v3706, %v3706
    %s3743 = scalar_lea.vmem %s9, 256
    %v3744 = vld [vmem:[%s3743] sm:$0xff]
    %v3745 = vld [vmem:[%s3743 + $0x8] sm:$0xff]
    %v3746 = vld [vmem:[%s3743 + $0x10] sm:$0xff]
    %v3747 = vld [vmem:[%s3743 + $0x18] sm:$0xff]
    %v3748 = vld [vmem:[%s3743 + $0x20] sm:$0xff]
    %v3749 = vld [vmem:[%s3743 + $0x28] sm:$0xff]
    %v3750 = vld [vmem:[%s3743 + $0x30] sm:$0xff]
    %v3751 = vld [vmem:[%s3743 + $0x38] sm:$0xff]
    %v3752 = vld [vmem:[%s3743 + $0x40] sm:$0xff]
    %v3753 = vld [vmem:[%s3743 + $0x48] sm:$0xff]
    %v3754 = vld [vmem:[%s3743 + $0x50] sm:$0xff]
    %v3755 = vld [vmem:[%s3743 + $0x58] sm:$0xff]
    %v3756 = vld [vmem:[%s3743 + $0x60] sm:$0xff]
    %v3757 = vld [vmem:[%s3743 + $0x68] sm:$0xff]
    %v3758 = vld [vmem:[%s3743 + $0x70] sm:$0xff]
    %v3759 = vld [vmem:[%s3743 + $0x78] sm:$0xff]
    %v3760 = vld [vmem:[%s3743 + $0x80] sm:$0xff]
    %v3761 = vld [vmem:[%s3743 + $0x88] sm:$0xff]
    %v3762 = vld [vmem:[%s3743 + $0x90] sm:$0xff]
    %v3763 = vld [vmem:[%s3743 + $0x98] sm:$0xff]
    %v3764 = vld [vmem:[%s3743 + $0xa0] sm:$0xff]
    %v3765 = vld [vmem:[%s3743 + $0xa8] sm:$0xff]
    %v3766 = vld [vmem:[%s3743 + $0xb0] sm:$0xff]
    %v3767 = vld [vmem:[%s3743 + $0xb8] sm:$0xff]
    %v3768 = vld [vmem:[%s3743 + $0xc0] sm:$0xff]
    %v3769 = vld [vmem:[%s3743 + $0xc8] sm:$0xff]
    %v3770 = vld [vmem:[%s3743 + $0xd0] sm:$0xff]
    %v3771 = vld [vmem:[%s3743 + $0xd8] sm:$0xff]
    %v3772 = vld [vmem:[%s3743 + $0xe0] sm:$0xff]
    %v3773 = vld [vmem:[%s3743 + $0xe8] sm:$0xff]
    %v3774 = vld [vmem:[%s3743 + $0xf0] sm:$0xff]
    %v3775 = vld [vmem:[%s3743 + $0xf8] sm:$0xff]
    %v3808 = vunpack.c.l.b16 %v3744
    %v3809 = vunpack.c.h.b16 %v3744
    %v3810 = vunpack.c.l.b16 %v3745
    %v3811 = vunpack.c.h.b16 %v3745
    %v3812 = vunpack.c.l.b16 %v3746
    %v3813 = vunpack.c.h.b16 %v3746
    %v3814 = vunpack.c.l.b16 %v3747
    %v3815 = vunpack.c.h.b16 %v3747
    %v3816 = vunpack.c.l.b16 %v3748
    %v3817 = vunpack.c.h.b16 %v3748
    %v3818 = vunpack.c.l.b16 %v3749
    %v3819 = vunpack.c.h.b16 %v3749
    %v3820 = vunpack.c.l.b16 %v3750
    %v3821 = vunpack.c.h.b16 %v3750
    %v3822 = vunpack.c.l.b16 %v3751
    %v3823 = vunpack.c.h.b16 %v3751
    %v3824 = vunpack.c.l.b16 %v3752
    %v3825 = vunpack.c.h.b16 %v3752
    %v3826 = vunpack.c.l.b16 %v3753
    %v3827 = vunpack.c.h.b16 %v3753
    %v3828 = vunpack.c.l.b16 %v3754
    %v3829 = vunpack.c.h.b16 %v3754
    %v3830 = vunpack.c.l.b16 %v3755
    %v3831 = vunpack.c.h.b16 %v3755
    %v3832 = vunpack.c.l.b16 %v3756
    %v3833 = vunpack.c.h.b16 %v3756
    %v3834 = vunpack.c.l.b16 %v3757
    %v3835 = vunpack.c.h.b16 %v3757
    %v3836 = vunpack.c.l.b16 %v3758
    %v3837 = vunpack.c.h.b16 %v3758
    %v3838 = vunpack.c.l.b16 %v3759
    %v3839 = vunpack.c.h.b16 %v3759
    %v3840 = vunpack.c.l.b16 %v3760
    %v3841 = vunpack.c.h.b16 %v3760
    %v3842 = vunpack.c.l.b16 %v3761
    %v3843 = vunpack.c.h.b16 %v3761
    %v3844 = vunpack.c.l.b16 %v3762
    %v3845 = vunpack.c.h.b16 %v3762
    %v3846 = vunpack.c.l.b16 %v3763
    %v3847 = vunpack.c.h.b16 %v3763
    %v3848 = vunpack.c.l.b16 %v3764
    %v3849 = vunpack.c.h.b16 %v3764
    %v3850 = vunpack.c.l.b16 %v3765
    %v3851 = vunpack.c.h.b16 %v3765
    %v3852 = vunpack.c.l.b16 %v3766
    %v3853 = vunpack.c.h.b16 %v3766
    %v3854 = vunpack.c.l.b16 %v3767
    %v3855 = vunpack.c.h.b16 %v3767
    %v3856 = vunpack.c.l.b16 %v3768
    %v3857 = vunpack.c.h.b16 %v3768
    %v3858 = vunpack.c.l.b16 %v3769
    %v3859 = vunpack.c.h.b16 %v3769
    %v3860 = vunpack.c.l.b16 %v3770
    %v3861 = vunpack.c.h.b16 %v3770
    %v3862 = vunpack.c.l.b16 %v3771
    %v3863 = vunpack.c.h.b16 %v3771
    %v3864 = vunpack.c.l.b16 %v3772
    %v3865 = vunpack.c.h.b16 %v3772
    %v3866 = vunpack.c.l.b16 %v3773
    %v3867 = vunpack.c.h.b16 %v3773
    %v3868 = vunpack.c.l.b16 %v3774
    %v3869 = vunpack.c.h.b16 %v3774
    %v3870 = vunpack.c.l.b16 %v3775
    %v3871 = vunpack.c.h.b16 %v3775
    %v3872 = vpack.c.b16 %v3812, %v3808
    %v3873 = vpack.c.b16 %v3813, %v3809
    %v3874 = vpack.c.b16 %v3814, %v3810
    %v3875 = vpack.c.b16 %v3815, %v3811
    %v3876 = vpack.c.b16 %v3820, %v3816
    %v3877 = vpack.c.b16 %v3821, %v3817
    %v3878 = vpack.c.b16 %v3822, %v3818
    %v3879 = vpack.c.b16 %v3823, %v3819
    %v3880 = vpack.c.b16 %v3828, %v3824
    %v3881 = vpack.c.b16 %v3829, %v3825
    %v3882 = vpack.c.b16 %v3830, %v3826
    %v3883 = vpack.c.b16 %v3831, %v3827
    %v3884 = vpack.c.b16 %v3836, %v3832
    %v3885 = vpack.c.b16 %v3837, %v3833
    %v3886 = vpack.c.b16 %v3838, %v3834
    %v3887 = vpack.c.b16 %v3839, %v3835
    %v3888 = vpack.c.b16 %v3844, %v3840
    %v3889 = vpack.c.b16 %v3845, %v3841
    %v3890 = vpack.c.b16 %v3846, %v3842
    %v3891 = vpack.c.b16 %v3847, %v3843
    %v3892 = vpack.c.b16 %v3852, %v3848
    %v3893 = vpack.c.b16 %v3853, %v3849
    %v3894 = vpack.c.b16 %v3854, %v3850
    %v3895 = vpack.c.b16 %v3855, %v3851
    %v3896 = vpack.c.b16 %v3860, %v3856
    %v3897 = vpack.c.b16 %v3861, %v3857
    %v3898 = vpack.c.b16 %v3862, %v3858
    %v3899 = vpack.c.b16 %v3863, %v3859
    %v3900 = vpack.c.b16 %v3868, %v3864
    %v3901 = vpack.c.b16 %v3869, %v3865
    %v3902 = vpack.c.b16 %v3870, %v3866
    %v3903 = vpack.c.b16 %v3871, %v3867
    %3936 = vmatprep.subr.bf16.mxu0 %v3873
    %3937 = vmatpush1.bf16.msra.mxu0 %v3872
    %3938 = vmatprep.subr.bf16.mxu0 %v3877
    %3939 = vmatpush1.bf16.msra.mxu0 %v3876
    %3940 = vmatprep.subr.bf16.mxu0 %v3881
    %3941 = vmatpush1.bf16.msra.mxu0 %v3880
    %3942 = vmatprep.subr.bf16.mxu0 %v3885
    %3943 = vmatpush1.bf16.msra.mxu0 %v3884
    %3944 = vmatprep.subr.bf16.mxu0 %v3889
    %3945 = vmatpush1.bf16.msra.mxu0 %v3888
    %3946 = vmatprep.subr.bf16.mxu0 %v3893
    %3947 = vmatpush1.bf16.msra.mxu0 %v3892
    %3948 = vmatprep.subr.bf16.mxu0 %v3897
    %3949 = vmatpush1.bf16.msra.mxu0 %v3896
    %3950 = vmatprep.subr.bf16.mxu0 %v3901
    %3951 = vmatpush1.bf16.msra.mxu0 %v3900
    %3952 = vmatprep.subr.bf16.mxu0 0
    %3953 = vmatpush1.bf16.msra.mxu0 0
    %3954 = vmatprep.subr.bf16.mxu0 0
    %3955 = vmatpush1.bf16.msra.mxu0 0
    %3956 = vmatprep.subr.bf16.mxu0 0
    %3957 = vmatpush1.bf16.msra.mxu0 0
    %3958 = vmatprep.subr.bf16.mxu0 0
    %3959 = vmatpush1.bf16.msra.mxu0 0
    %3960 = vmatprep.subr.bf16.mxu0 0
    %3961 = vmatpush1.bf16.msra.mxu0 0
    %3962 = vmatprep.subr.bf16.mxu0 0
    %3963 = vmatpush1.bf16.msra.mxu0 0
    %3964 = vmatprep.subr.bf16.mxu0 0
    %3965 = vmatpush1.bf16.msra.mxu0 0
    %3966 = vmatprep.subr.bf16.mxu0 0
    %3967 = vmatpush1.bf16.msra.mxu0 0
    %3968 = vmatprep.mubr.bf16.mxu0 0
    %3969 = vmatmul.mubr.bf16.gmra.mrb[0].mxu0 %v3742
    %v3970 = vpop.f32.mrb[0].mxu0
    %v3971 = vadd.f32 0.0, %v3970
    %v3972 = vpop.f32.mrb[0].mxu0
    %v3973 = vadd.f32 0.0, %v3972
    %v3974 = vpop.f32.mrb[0].mxu0
    %v3975 = vpop.f32.mrb[0].mxu0
    %3976 = vdwg.mxu0
    %3977 = vmatprep.subr.bf16.mxu0 %v3875
    %3978 = vmatpush1.bf16.msra.mxu0 %v3874
    %3979 = vmatprep.subr.bf16.mxu0 %v3879
    %3980 = vmatpush1.bf16.msra.mxu0 %v3878
    %3981 = vmatprep.subr.bf16.mxu0 %v3883
    %3982 = vmatpush1.bf16.msra.mxu0 %v3882
    %3983 = vmatprep.subr.bf16.mxu0 %v3887
    %3984 = vmatpush1.bf16.msra.mxu0 %v3886
    %3985 = vmatprep.subr.bf16.mxu0 %v3891
    %3986 = vmatpush1.bf16.msra.mxu0 %v3890
    %3987 = vmatprep.subr.bf16.mxu0 %v3895
    %3988 = vmatpush1.bf16.msra.mxu0 %v3894
    %3989 = vmatprep.subr.bf16.mxu0 %v3899
    %3990 = vmatpush1.bf16.msra.mxu0 %v3898
    %3991 = vmatprep.subr.bf16.mxu0 %v3903
    %3992 = vmatpush1.bf16.msra.mxu0 %v3902
    %3993 = vmatprep.subr.bf16.mxu0 0
    %3994 = vmatpush1.bf16.msra.mxu0 0
    %3995 = vmatprep.subr.bf16.mxu0 0
    %3996 = vmatpush1.bf16.msra.mxu0 0
    %3997 = vmatprep.subr.bf16.mxu0 0
    %3998 = vmatpush1.bf16.msra.mxu0 0
    %3999 = vmatprep.subr.bf16.mxu0 0
    %4000 = vmatpush1.bf16.msra.mxu0 0
    %4001 = vmatprep.subr.bf16.mxu0 0
    %4002 = vmatpush1.bf16.msra.mxu0 0
    %4003 = vmatprep.subr.bf16.mxu0 0
    %4004 = vmatpush1.bf16.msra.mxu0 0
    %4005 = vmatprep.subr.bf16.mxu0 0
    %4006 = vmatpush1.bf16.msra.mxu0 0
    %4007 = vmatprep.subr.bf16.mxu0 0
    %4008 = vmatpush1.bf16.msra.mxu0 0
    %4009 = vmatprep.mubr.bf16.mxu0 0
    %4010 = vmatmul.mubr.bf16.gmra.mrb[0].mxu0 %v3742
    %v4011 = vpop.f32.mrb[0].mxu0
    %v4012 = vadd.f32 0.0, %v4011
    %v4013 = vpop.f32.mrb[0].mxu0
    %v4014 = vadd.f32 0.0, %v4013
    %v4015 = vpop.f32.mrb[0].mxu0
    %v4016 = vpop.f32.mrb[0].mxu0
    %4017 = vdwg.mxu0
    %v4050 = vunpack.c.l.b16 %v3710
    %v4051 = vunpack.c.h.b16 %v3710
    %v4052 = vunpack.c.l.b16 %v3711
    %v4053 = vunpack.c.h.b16 %v3711
    %v4054 = vunpack.c.l.b16 %v3712
    %v4055 = vunpack.c.h.b16 %v3712
    %v4056 = vunpack.c.l.b16 %v3713
    %v4057 = vunpack.c.h.b16 %v3713
    %v4058 = vunpack.c.l.b16 %v3714
    %v4059 = vunpack.c.h.b16 %v3714
    %v4060 = vunpack.c.l.b16 %v3715
    %v4061 = vunpack.c.h.b16 %v3715
    %v4062 = vunpack.c.l.b16 %v3716
    %v4063 = vunpack.c.h.b16 %v3716
    %v4064 = vunpack.c.l.b16 %v3717
    %v4065 = vunpack.c.h.b16 %v3717
    %v4066 = vunpack.c.l.b16 %v3718
    %v4067 = vunpack.c.h.b16 %v3718
    %v4068 = vunpack.c.l.b16 %v3719
    %v4069 = vunpack.c.h.b16 %v3719
    %v4070 = vunpack.c.l.b16 %v3720
    %v4071 = vunpack.c.h.b16 %v3720
    %v4072 = vunpack.c.l.b16 %v3721
    %v4073 = vunpack.c.h.b16 %v3721
    %v4074 = vunpack.c.l.b16 %v3722
    %v4075 = vunpack.c.h.b16 %v3722
    %v4076 = vunpack.c.l.b16 %v3723
    %v4077 = vunpack.c.h.b16 %v3723
    %v4078 = vunpack.c.l.b16 %v3724
    %v4079 = vunpack.c.h.b16 %v3724
    %v4080 = vunpack.c.l.b16 %v3725
    %v4081 = vunpack.c.h.b16 %v3725
    %v4082 = vunpack.c.l.b16 %v3726
    %v4083 = vunpack.c.h.b16 %v3726
    %v4084 = vunpack.c.l.b16 %v3727
    %v4085 = vunpack.c.h.b16 %v3727
    %v4086 = vunpack.c.l.b16 %v3728
    %v4087 = vunpack.c.h.b16 %v3728
    %v4088 = vunpack.c.l.b16 %v3729
    %v4089 = vunpack.c.h.b16 %v3729
    %v4090 = vunpack.c.l.b16 %v3730
    %v4091 = vunpack.c.h.b16 %v3730
    %v4092 = vunpack.c.l.b16 %v3731
    %v4093 = vunpack.c.h.b16 %v3731
    %v4094 = vunpack.c.l.b16 %v3732
    %v4095 = vunpack.c.h.b16 %v3732
    %v4096 = vunpack.c.l.b16 %v3733
    %v4097 = vunpack.c.h.b16 %v3733
    %v4098 = vunpack.c.l.b16 %v3734
    %v4099 = vunpack.c.h.b16 %v3734
    %v4100 = vunpack.c.l.b16 %v3735
    %v4101 = vunpack.c.h.b16 %v3735
    %v4102 = vunpack.c.l.b16 %v3736
    %v4103 = vunpack.c.h.b16 %v3736
    %v4104 = vunpack.c.l.b16 %v3737
    %v4105 = vunpack.c.h.b16 %v3737
    %v4106 = vunpack.c.l.b16 %v3738
    %v4107 = vunpack.c.h.b16 %v3738
    %v4108 = vunpack.c.l.b16 %v3739
    %v4109 = vunpack.c.h.b16 %v3739
    %v4110 = vunpack.c.l.b16 %v3740
    %v4111 = vunpack.c.h.b16 %v3740
    %v4112 = vunpack.c.l.b16 %v3741
    %v4113 = vunpack.c.h.b16 %v3741
    %v4114 = vpack.c.b16 %v4054, %v4050
    %v4115 = vpack.c.b16 %v4055, %v4051
    %v4116 = vpack.c.b16 %v4056, %v4052
    %v4117 = vpack.c.b16 %v4057, %v4053
    %v4118 = vpack.c.b16 %v4062, %v4058
    %v4119 = vpack.c.b16 %v4063, %v4059
    %v4120 = vpack.c.b16 %v4064, %v4060
    %v4121 = vpack.c.b16 %v4065, %v4061
    %v4122 = vpack.c.b16 %v4070, %v4066
    %v4123 = vpack.c.b16 %v4071, %v4067
    %v4124 = vpack.c.b16 %v4072, %v4068
    %v4125 = vpack.c.b16 %v4073, %v4069
    %v4126 = vpack.c.b16 %v4078, %v4074
    %v4127 = vpack.c.b16 %v4079, %v4075
    %v4128 = vpack.c.b16 %v4080, %v4076
    %v4129 = vpack.c.b16 %v4081, %v4077
    %v4130 = vpack.c.b16 %v4086, %v4082
    %v4131 = vpack.c.b16 %v4087, %v4083
    %v4132 = vpack.c.b16 %v4088, %v4084
    %v4133 = vpack.c.b16 %v4089, %v4085
    %v4134 = vpack.c.b16 %v4094, %v4090
    %v4135 = vpack.c.b16 %v4095, %v4091
    %v4136 = vpack.c.b16 %v4096, %v4092
    %v4137 = vpack.c.b16 %v4097, %v4093
    %v4138 = vpack.c.b16 %v4102, %v4098
    %v4139 = vpack.c.b16 %v4103, %v4099
    %v4140 = vpack.c.b16 %v4104, %v4100
    %v4141 = vpack.c.b16 %v4105, %v4101
    %v4142 = vpack.c.b16 %v4110, %v4106
    %v4143 = vpack.c.b16 %v4111, %v4107
    %v4144 = vpack.c.b16 %v4112, %v4108
    %v4145 = vpack.c.b16 %v4113, %v4109
    %4178 = vmatprep.subr.bf16.mxu0 %v4115
    %4179 = vmatpush1.bf16.msra.mxu0 %v4114
    %4180 = vmatprep.subr.bf16.mxu0 %v4119
    %4181 = vmatpush1.bf16.msra.mxu0 %v4118
    %4182 = vmatprep.subr.bf16.mxu0 %v4123
    %4183 = vmatpush1.bf16.msra.mxu0 %v4122
    %4184 = vmatprep.subr.bf16.mxu0 %v4127
    %4185 = vmatpush1.bf16.msra.mxu0 %v4126
    %4186 = vmatprep.subr.bf16.mxu0 %v4131
    %4187 = vmatpush1.bf16.msra.mxu0 %v4130
    %4188 = vmatprep.subr.bf16.mxu0 %v4135
    %4189 = vmatpush1.bf16.msra.mxu0 %v4134
    %4190 = vmatprep.subr.bf16.mxu0 %v4139
    %4191 = vmatpush1.bf16.msra.mxu0 %v4138
    %4192 = vmatprep.subr.bf16.mxu0 %v4143
    %4193 = vmatpush1.bf16.msra.mxu0 %v4142
    %4194 = vmatprep.subr.bf16.mxu0 0
    %4195 = vmatpush1.bf16.msra.mxu0 0
    %4196 = vmatprep.subr.bf16.mxu0 0
    %4197 = vmatpush1.bf16.msra.mxu0 0
    %4198 = vmatprep.subr.bf16.mxu0 0
    %4199 = vmatpush1.bf16.msra.mxu0 0
    %4200 = vmatprep.subr.bf16.mxu0 0
    %4201 = vmatpush1.bf16.msra.mxu0 0
    %4202 = vmatprep.subr.bf16.mxu0 0
    %4203 = vmatpush1.bf16.msra.mxu0 0
    %4204 = vmatprep.subr.bf16.mxu0 0
    %4205 = vmatpush1.bf16.msra.mxu0 0
    %4206 = vmatprep.subr.bf16.mxu0 0
    %4207 = vmatpush1.bf16.msra.mxu0 0
    %4208 = vmatprep.subr.bf16.mxu0 0
    %4209 = vmatpush1.bf16.msra.mxu0 0
    %4210 = vmatprep.mubr.bf16.mxu0 0
    %4211 = vmatmul.mubr.bf16.gmra.mrb[0].mxu0 %v3709
    %v4212 = vpop.f32.mrb[0].mxu0
    %v4213 = vadd.f32 %v3971, %v4212
    %v4214 = vpop.f32.mrb[0].mxu0
    %v4215 = vadd.f32 %v3973, %v4214
    %v4216 = vpop.f32.mrb[0].mxu0
    %v4217 = vpop.f32.mrb[0].mxu0
    %4218 = vdwg.mxu0
    %4219 = vmatprep.subr.bf16.mxu0 %v4117
    %4220 = vmatpush1.bf16.msra.mxu0 %v4116
    %4221 = vmatprep.subr.bf16.mxu0 %v4121
    %4222 = vmatpush1.bf16.msra.mxu0 %v4120
    %4223 = vmatprep.subr.bf16.mxu0 %v4125
    %4224 = vmatpush1.bf16.msra.mxu0 %v4124
    %4225 = vmatprep.subr.bf16.mxu0 %v4129
    %4226 = vmatpush1.bf16.msra.mxu0 %v4128
    %4227 = vmatprep.subr.bf16.mxu0 %v4133
    %4228 = vmatpush1.bf16.msra.mxu0 %v4132
    %4229 = vmatprep.subr.bf16.mxu0 %v4137
    %4230 = vmatpush1.bf16.msra.mxu0 %v4136
    %4231 = vmatprep.subr.bf16.mxu0 %v4141
    %4232 = vmatpush1.bf16.msra.mxu0 %v4140
    %4233 = vmatprep.subr.bf16.mxu0 %v4145
    %4234 = vmatpush1.bf16.msra.mxu0 %v4144
    %4235 = vmatprep.subr.bf16.mxu0 0
    %4236 = vmatpush1.bf16.msra.mxu0 0
    %4237 = vmatprep.subr.bf16.mxu0 0
    %4238 = vmatpush1.bf16.msra.mxu0 0
    %4239 = vmatprep.subr.bf16.mxu0 0
    %4240 = vmatpush1.bf16.msra.mxu0 0
    %4241 = vmatprep.subr.bf16.mxu0 0
    %4242 = vmatpush1.bf16.msra.mxu0 0
    %4243 = vmatprep.subr.bf16.mxu0 0
    %4244 = vmatpush1.bf16.msra.mxu0 0
    %4245 = vmatprep.subr.bf16.mxu0 0
    %4246 = vmatpush1.bf16.msra.mxu0 0
    %4247 = vmatprep.subr.bf16.mxu0 0
    %4248 = vmatpush1.bf16.msra.mxu0 0
    %4249 = vmatprep.subr.bf16.mxu0 0
    %4250 = vmatpush1.bf16.msra.mxu0 0
    %4251 = vmatprep.mubr.bf16.mxu0 0
    %4252 = vmatmul.mubr.bf16.gmra.mrb[0].mxu0 %v3709
    %v4253 = vpop.f32.mrb[0].mxu0
    %v4254 = vadd.f32 %v4012, %v4253
    %v4255 = vpop.f32.mrb[0].mxu0
    %v4256 = vadd.f32 %v4014, %v4255
    %v4257 = vpop.f32.mrb[0].mxu0
    %v4258 = vpop.f32.mrb[0].mxu0
    %4259 = vdwg.mxu0
    %v4260 = vpack.c.bf16 %v3707, %v3707
    %s4261 = scalar_lea.vmem %s9, 512
    %v4262 = vld [vmem:[%s4261] sm:$0xff]
    %v4263 = vld [vmem:[%s4261 + $0x8] sm:$0xff]
    %v4264 = vld [vmem:[%s4261 + $0x10] sm:$0xff]
    %v4265 = vld [vmem:[%s4261 + $0x18] sm:$0xff]
    %v4266 = vld [vmem:[%s4261 + $0x20] sm:$0xff]
    %v4267 = vld [vmem:[%s4261 + $0x28] sm:$0xff]
    %v4268 = vld [vmem:[%s4261 + $0x30] sm:$0xff]
    %v4269 = vld [vmem:[%s4261 + $0x38] sm:$0xff]
    %v4270 = vld [vmem:[%s4261 + $0x40] sm:$0xff]
    %v4271 = vld [vmem:[%s4261 + $0x48] sm:$0xff]
    %v4272 = vld [vmem:[%s4261 + $0x50] sm:$0xff]
    %v4273 = vld [vmem:[%s4261 + $0x58] sm:$0xff]
    %v4274 = vld [vmem:[%s4261 + $0x60] sm:$0xff]
    %v4275 = vld [vmem:[%s4261 + $0x68] sm:$0xff]
    %v4276 = vld [vmem:[%s4261 + $0x70] sm:$0xff]
    %v4277 = vld [vmem:[%s4261 + $0x78] sm:$0xff]
    %v4278 = vld [vmem:[%s4261 + $0x80] sm:$0xff]
    %v4279 = vld [vmem:[%s4261 + $0x88] sm:$0xff]
    %v4280 = vld [vmem:[%s4261 + $0x90] sm:$0xff]
    %v4281 = vld [vmem:[%s4261 + $0x98] sm:$0xff]
    %v4282 = vld [vmem:[%s4261 + $0xa0] sm:$0xff]
    %v4283 = vld [vmem:[%s4261 + $0xa8] sm:$0xff]
    %v4284 = vld [vmem:[%s4261 + $0xb0] sm:$0xff]
    %v4285 = vld [vmem:[%s4261 + $0xb8] sm:$0xff]
    %v4286 = vld [vmem:[%s4261 + $0xc0] sm:$0xff]
    %v4287 = vld [vmem:[%s4261 + $0xc8] sm:$0xff]
    %v4288 = vld [vmem:[%s4261 + $0xd0] sm:$0xff]
    %v4289 = vld [vmem:[%s4261 + $0xd8] sm:$0xff]
    %v4290 = vld [vmem:[%s4261 + $0xe0] sm:$0xff]
    %v4291 = vld [vmem:[%s4261 + $0xe8] sm:$0xff]
    %v4292 = vld [vmem:[%s4261 + $0xf0] sm:$0xff]
    %v4293 = vld [vmem:[%s4261 + $0xf8] sm:$0xff]
    %v4326 = vunpack.c.l.b16 %v4262
    %v4327 = vunpack.c.h.b16 %v4262
    %v4328 = vunpack.c.l.b16 %v4263
    %v4329 = vunpack.c.h.b16 %v4263
    %v4330 = vunpack.c.l.b16 %v4264
    %v4331 = vunpack.c.h.b16 %v4264
    %v4332 = vunpack.c.l.b16 %v4265
    %v4333 = vunpack.c.h.b16 %v4265
    %v4334 = vunpack.c.l.b16 %v4266
    %v4335 = vunpack.c.h.b16 %v4266
    %v4336 = vunpack.c.l.b16 %v4267
    %v4337 = vunpack.c.h.b16 %v4267
    %v4338 = vunpack.c.l.b16 %v4268
    %v4339 = vunpack.c.h.b16 %v4268
    %v4340 = vunpack.c.l.b16 %v4269
    %v4341 = vunpack.c.h.b16 %v4269
    %v4342 = vunpack.c.l.b16 %v4270
    %v4343 = vunpack.c.h.b16 %v4270
    %v4344 = vunpack.c.l.b16 %v4271
    %v4345 = vunpack.c.h.b16 %v4271
    %v4346 = vunpack.c.l.b16 %v4272
    %v4347 = vunpack.c.h.b16 %v4272
    %v4348 = vunpack.c.l.b16 %v4273
    %v4349 = vunpack.c.h.b16 %v4273
    %v4350 = vunpack.c.l.b16 %v4274
    %v4351 = vunpack.c.h.b16 %v4274
    %v4352 = vunpack.c.l.b16 %v4275
    %v4353 = vunpack.c.h.b16 %v4275
    %v4354 = vunpack.c.l.b16 %v4276
    %v4355 = vunpack.c.h.b16 %v4276
    %v4356 = vunpack.c.l.b16 %v4277
    %v4357 = vunpack.c.h.b16 %v4277
    %v4358 = vunpack.c.l.b16 %v4278
    %v4359 = vunpack.c.h.b16 %v4278
    %v4360 = vunpack.c.l.b16 %v4279
    %v4361 = vunpack.c.h.b16 %v4279
    %v4362 = vunpack.c.l.b16 %v4280
    %v4363 = vunpack.c.h.b16 %v4280
    %v4364 = vunpack.c.l.b16 %v4281
    %v4365 = vunpack.c.h.b16 %v4281
    %v4366 = vunpack.c.l.b16 %v4282
    %v4367 = vunpack.c.h.b16 %v4282
    %v4368 = vunpack.c.l.b16 %v4283
    %v4369 = vunpack.c.h.b16 %v4283
    %v4370 = vunpack.c.l.b16 %v4284
    %v4371 = vunpack.c.h.b16 %v4284
    %v4372 = vunpack.c.l.b16 %v4285
    %v4373 = vunpack.c.h.b16 %v4285
    %v4374 = vunpack.c.l.b16 %v4286
    %v4375 = vunpack.c.h.b16 %v4286
    %v4376 = vunpack.c.l.b16 %v4287
    %v4377 = vunpack.c.h.b16 %v4287
    %v4378 = vunpack.c.l.b16 %v4288
    %v4379 = vunpack.c.h.b16 %v4288
    %v4380 = vunpack.c.l.b16 %v4289
    %v4381 = vunpack.c.h.b16 %v4289
    %v4382 = vunpack.c.l.b16 %v4290
    %v4383 = vunpack.c.h.b16 %v4290
    %v4384 = vunpack.c.l.b16 %v4291
    %v4385 = vunpack.c.h.b16 %v4291
    %v4386 = vunpack.c.l.b16 %v4292
    %v4387 = vunpack.c.h.b16 %v4292
    %v4388 = vunpack.c.l.b16 %v4293
    %v4389 = vunpack.c.h.b16 %v4293
    %v4390 = vpack.c.b16 %v4330, %v4326
    %v4391 = vpack.c.b16 %v4331, %v4327
    %v4392 = vpack.c.b16 %v4332, %v4328
    %v4393 = vpack.c.b16 %v4333, %v4329
    %v4394 = vpack.c.b16 %v4338, %v4334
    %v4395 = vpack.c.b16 %v4339, %v4335
    %v4396 = vpack.c.b16 %v4340, %v4336
    %v4397 = vpack.c.b16 %v4341, %v4337
    %v4398 = vpack.c.b16 %v4346, %v4342
    %v4399 = vpack.c.b16 %v4347, %v4343
    %v4400 = vpack.c.b16 %v4348, %v4344
    %v4401 = vpack.c.b16 %v4349, %v4345
    %v4402 = vpack.c.b16 %v4354, %v4350
    %v4403 = vpack.c.b16 %v4355, %v4351
    %v4404 = vpack.c.b16 %v4356, %v4352
    %v4405 = vpack.c.b16 %v4357, %v4353
    %v4406 = vpack.c.b16 %v4362, %v4358
    %v4407 = vpack.c.b16 %v4363, %v4359
    %v4408 = vpack.c.b16 %v4364, %v4360
    %v4409 = vpack.c.b16 %v4365, %v4361
    %v4410 = vpack.c.b16 %v4370, %v4366
    %v4411 = vpack.c.b16 %v4371, %v4367
    %v4412 = vpack.c.b16 %v4372, %v4368
    %v4413 = vpack.c.b16 %v4373, %v4369
    %v4414 = vpack.c.b16 %v4378, %v4374
    %v4415 = vpack.c.b16 %v4379, %v4375
    %v4416 = vpack.c.b16 %v4380, %v4376
    %v4417 = vpack.c.b16 %v4381, %v4377
    %v4418 = vpack.c.b16 %v4386, %v4382
    %v4419 = vpack.c.b16 %v4387, %v4383
    %v4420 = vpack.c.b16 %v4388, %v4384
    %v4421 = vpack.c.b16 %v4389, %v4385
    %4454 = vmatprep.subr.bf16.mxu0 %v4391
    %4455 = vmatpush1.bf16.msra.mxu0 %v4390
    %4456 = vmatprep.subr.bf16.mxu0 %v4395
    %4457 = vmatpush1.bf16.msra.mxu0 %v4394
    %4458 = vmatprep.subr.bf16.mxu0 %v4399
    %4459 = vmatpush1.bf16.msra.mxu0 %v4398
    %4460 = vmatprep.subr.bf16.mxu0 %v4403
    %4461 = vmatpush1.bf16.msra.mxu0 %v4402
    %4462 = vmatprep.subr.bf16.mxu0 %v4407
    %4463 = vmatpush1.bf16.msra.mxu0 %v4406
    %4464 = vmatprep.subr.bf16.mxu0 %v4411
    %4465 = vmatpush1.bf16.msra.mxu0 %v4410
    %4466 = vmatprep.subr.bf16.mxu0 %v4415
    %4467 = vmatpush1.bf16.msra.mxu0 %v4414
    %4468 = vmatprep.subr.bf16.mxu0 %v4419
    %4469 = vmatpush1.bf16.msra.mxu0 %v4418
    %4470 = vmatprep.subr.bf16.mxu0 0
    %4471 = vmatpush1.bf16.msra.mxu0 0
    %4472 = vmatprep.subr.bf16.mxu0 0
    %4473 = vmatpush1.bf16.msra.mxu0 0
    %4474 = vmatprep.subr.bf16.mxu0 0
    %4475 = vmatpush1.bf16.msra.mxu0 0
    %4476 = vmatprep.subr.bf16.mxu0 0
    %4477 = vmatpush1.bf16.msra.mxu0 0
    %4478 = vmatprep.subr.bf16.mxu0 0
    %4479 = vmatpush1.bf16.msra.mxu0 0
    %4480 = vmatprep.subr.bf16.mxu0 0
    %4481 = vmatpush1.bf16.msra.mxu0 0
    %4482 = vmatprep.subr.bf16.mxu0 0
    %4483 = vmatpush1.bf16.msra.mxu0 0
    %4484 = vmatprep.subr.bf16.mxu0 0
    %4485 = vmatpush1.bf16.msra.mxu0 0
    %4486 = vmatprep.mubr.bf16.mxu0 0
    %4487 = vmatmul.mubr.bf16.gmra.mrb[0].mxu0 %v4260
    %v4488 = vpop.f32.mrb[0].mxu0
    %v4489 = vadd.f32 0.0, %v4488
    %v4490 = vpop.f32.mrb[0].mxu0
    %v4491 = vadd.f32 0.0, %v4490
    %v4492 = vpop.f32.mrb[0].mxu0
    %v4493 = vpop.f32.mrb[0].mxu0
    %4494 = vdwg.mxu0
    %4495 = vmatprep.subr.bf16.mxu0 %v4393
    %4496 = vmatpush1.bf16.msra.mxu0 %v4392
    %4497 = vmatprep.subr.bf16.mxu0 %v4397
    %4498 = vmatpush1.bf16.msra.mxu0 %v4396
    %4499 = vmatprep.subr.bf16.mxu0 %v4401
    %4500 = vmatpush1.bf16.msra.mxu0 %v4400
    %4501 = vmatprep.subr.bf16.mxu0 %v4405
    %4502 = vmatpush1.bf16.msra.mxu0 %v4404
    %4503 = vmatprep.subr.bf16.mxu0 %v4409
    %4504 = vmatpush1.bf16.msra.mxu0 %v4408
    %4505 = vmatprep.subr.bf16.mxu0 %v4413
    %4506 = vmatpush1.bf16.msra.mxu0 %v4412
    %4507 = vmatprep.subr.bf16.mxu0 %v4417
    %4508 = vmatpush1.bf16.msra.mxu0 %v4416
    %4509 = vmatprep.subr.bf16.mxu0 %v4421
    %4510 = vmatpush1.bf16.msra.mxu0 %v4420
    %4511 = vmatprep.subr.bf16.mxu0 0
    %4512 = vmatpush1.bf16.msra.mxu0 0
    %4513 = vmatprep.subr.bf16.mxu0 0
    %4514 = vmatpush1.bf16.msra.mxu0 0
    %4515 = vmatprep.subr.bf16.mxu0 0
    %4516 = vmatpush1.bf16.msra.mxu0 0
    %4517 = vmatprep.subr.bf16.mxu0 0
    %4518 = vmatpush1.bf16.msra.mxu0 0
    %4519 = vmatprep.subr.bf16.mxu0 0
    %4520 = vmatpush1.bf16.msra.mxu0 0
    %4521 = vmatprep.subr.bf16.mxu0 0
    %4522 = vmatpush1.bf16.msra.mxu0 0
    %4523 = vmatprep.subr.bf16.mxu0 0
    %4524 = vmatpush1.bf16.msra.mxu0 0
    %4525 = vmatprep.subr.bf16.mxu0 0
    %4526 = vmatpush1.bf16.msra.mxu0 0
    %4527 = vmatprep.mubr.bf16.mxu0 0
    %4528 = vmatmul.mubr.bf16.gmra.mrb[0].mxu0 %v4260
    %v4529 = vpop.f32.mrb[0].mxu0
    %v4530 = vadd.f32 0.0, %v4529
    %v4531 = vpop.f32.mrb[0].mxu0
    %v4532 = vadd.f32 0.0, %v4531
    %v4533 = vpop.f32.mrb[0].mxu0
    %v4534 = vpop.f32.mrb[0].mxu0
    %4535 = vdwg.mxu0
    %v4536 = vadd.f32 %v4213, %v4489
    %v4537 = vadd.f32 %v4215, %v4491
    %v4538 = vadd.f32 %v4254, %v4530
    %v4539 = vadd.f32 %v4256, %v4532
    %v4540 = vpack.c.bf16 %v3708, %v3708
    %s4541 = scalar_lea.vmem %s9, 768
    %v4542 = vld [vmem:[%s4541] sm:$0xff]
    %v4543 = vld [vmem:[%s4541 + $0x8] sm:$0xff]
    %v4544 = vld [vmem:[%s4541 + $0x10] sm:$0xff]
    %v4545 = vld [vmem:[%s4541 + $0x18] sm:$0xff]
    %v4546 = vld [vmem:[%s4541 + $0x20] sm:$0xff]
    %v4547 = vld [vmem:[%s4541 + $0x28] sm:$0xff]
    %v4548 = vld [vmem:[%s4541 + $0x30] sm:$0xff]
    %v4549 = vld [vmem:[%s4541 + $0x38] sm:$0xff]
    %v4550 = vld [vmem:[%s4541 + $0x40] sm:$0xff]
    %v4551 = vld [vmem:[%s4541 + $0x48] sm:$0xff]
    %v4552 = vld [vmem:[%s4541 + $0x50] sm:$0xff]
    %v4553 = vld [vmem:[%s4541 + $0x58] sm:$0xff]
    %v4554 = vld [vmem:[%s4541 + $0x60] sm:$0xff]
    %v4555 = vld [vmem:[%s4541 + $0x68] sm:$0xff]
    %v4556 = vld [vmem:[%s4541 + $0x70] sm:$0xff]
    %v4557 = vld [vmem:[%s4541 + $0x78] sm:$0xff]
    %v4558 = vld [vmem:[%s4541 + $0x80] sm:$0xff]
    %v4559 = vld [vmem:[%s4541 + $0x88] sm:$0xff]
    %v4560 = vld [vmem:[%s4541 + $0x90] sm:$0xff]
    %v4561 = vld [vmem:[%s4541 + $0x98] sm:$0xff]
    %v4562 = vld [vmem:[%s4541 + $0xa0] sm:$0xff]
    %v4563 = vld [vmem:[%s4541 + $0xa8] sm:$0xff]
    %v4564 = vld [vmem:[%s4541 + $0xb0] sm:$0xff]
    %v4565 = vld [vmem:[%s4541 + $0xb8] sm:$0xff]
    %v4566 = vld [vmem:[%s4541 + $0xc0] sm:$0xff]
    %v4567 = vld [vmem:[%s4541 + $0xc8] sm:$0xff]
    %v4568 = vld [vmem:[%s4541 + $0xd0] sm:$0xff]
    %v4569 = vld [vmem:[%s4541 + $0xd8] sm:$0xff]
    %v4570 = vld [vmem:[%s4541 + $0xe0] sm:$0xff]
    %v4571 = vld [vmem:[%s4541 + $0xe8] sm:$0xff]
    %v4572 = vld [vmem:[%s4541 + $0xf0] sm:$0xff]
    %v4573 = vld [vmem:[%s4541 + $0xf8] sm:$0xff]
    %v4606 = vunpack.c.l.b16 %v4542
    %v4607 = vunpack.c.h.b16 %v4542
    %v4608 = vunpack.c.l.b16 %v4543
    %v4609 = vunpack.c.h.b16 %v4543
    %v4610 = vunpack.c.l.b16 %v4544
    %v4611 = vunpack.c.h.b16 %v4544
    %v4612 = vunpack.c.l.b16 %v4545
    %v4613 = vunpack.c.h.b16 %v4545
    %v4614 = vunpack.c.l.b16 %v4546
    %v4615 = vunpack.c.h.b16 %v4546
    %v4616 = vunpack.c.l.b16 %v4547
    %v4617 = vunpack.c.h.b16 %v4547
    %v4618 = vunpack.c.l.b16 %v4548
    %v4619 = vunpack.c.h.b16 %v4548
    %v4620 = vunpack.c.l.b16 %v4549
    %v4621 = vunpack.c.h.b16 %v4549
    %v4622 = vunpack.c.l.b16 %v4550
    %v4623 = vunpack.c.h.b16 %v4550
    %v4624 = vunpack.c.l.b16 %v4551
    %v4625 = vunpack.c.h.b16 %v4551
    %v4626 = vunpack.c.l.b16 %v4552
    %v4627 = vunpack.c.h.b16 %v4552
    %v4628 = vunpack.c.l.b16 %v4553
    %v4629 = vunpack.c.h.b16 %v4553
    %v4630 = vunpack.c.l.b16 %v4554
    %v4631 = vunpack.c.h.b16 %v4554
    %v4632 = vunpack.c.l.b16 %v4555
    %v4633 = vunpack.c.h.b16 %v4555
    %v4634 = vunpack.c.l.b16 %v4556
    %v4635 = vunpack.c.h.b16 %v4556
    %v4636 = vunpack.c.l.b16 %v4557
    %v4637 = vunpack.c.h.b16 %v4557
    %v4638 = vunpack.c.l.b16 %v4558
    %v4639 = vunpack.c.h.b16 %v4558
    %v4640 = vunpack.c.l.b16 %v4559
    %v4641 = vunpack.c.h.b16 %v4559
    %v4642 = vunpack.c.l.b16 %v4560
    %v4643 = vunpack.c.h.b16 %v4560
    %v4644 = vunpack.c.l.b16 %v4561
    %v4645 = vunpack.c.h.b16 %v4561
    %v4646 = vunpack.c.l.b16 %v4562
    %v4647 = vunpack.c.h.b16 %v4562
    %v4648 = vunpack.c.l.b16 %v4563
    %v4649 = vunpack.c.h.b16 %v4563
    %v4650 = vunpack.c.l.b16 %v4564
    %v4651 = vunpack.c.h.b16 %v4564
    %v4652 = vunpack.c.l.b16 %v4565
    %v4653 = vunpack.c.h.b16 %v4565
    %v4654 = vunpack.c.l.b16 %v4566
    %v4655 = vunpack.c.h.b16 %v4566
    %v4656 = vunpack.c.l.b16 %v4567
    %v4657 = vunpack.c.h.b16 %v4567
    %v4658 = vunpack.c.l.b16 %v4568
    %v4659 = vunpack.c.h.b16 %v4568
    %v4660 = vunpack.c.l.b16 %v4569
    %v4661 = vunpack.c.h.b16 %v4569
    %v4662 = vunpack.c.l.b16 %v4570
    %v4663 = vunpack.c.h.b16 %v4570
    %v4664 = vunpack.c.l.b16 %v4571
    %v4665 = vunpack.c.h.b16 %v4571
    %v4666 = vunpack.c.l.b16 %v4572
    %v4667 = vunpack.c.h.b16 %v4572
    %v4668 = vunpack.c.l.b16 %v4573
    %v4669 = vunpack.c.h.b16 %v4573
    %v4670 = vpack.c.b16 %v4610, %v4606
    %v4671 = vpack.c.b16 %v4611, %v4607
    %v4672 = vpack.c.b16 %v4612, %v4608
    %v4673 = vpack.c.b16 %v4613, %v4609
    %v4674 = vpack.c.b16 %v4618, %v4614
    %v4675 = vpack.c.b16 %v4619, %v4615
    %v4676 = vpack.c.b16 %v4620, %v4616
    %v4677 = vpack.c.b16 %v4621, %v4617
    %v4678 = vpack.c.b16 %v4626, %v4622
    %v4679 = vpack.c.b16 %v4627, %v4623
    %v4680 = vpack.c.b16 %v4628, %v4624
    %v4681 = vpack.c.b16 %v4629, %v4625
    %v4682 = vpack.c.b16 %v4634, %v4630
    %v4683 = vpack.c.b16 %v4635, %v4631
    %v4684 = vpack.c.b16 %v4636, %v4632
    %v4685 = vpack.c.b16 %v4637, %v4633
    %v4686 = vpack.c.b16 %v4642, %v4638
    %v4687 = vpack.c.b16 %v4643, %v4639
    %v4688 = vpack.c.b16 %v4644, %v4640
    %v4689 = vpack.c.b16 %v4645, %v4641
    %v4690 = vpack.c.b16 %v4650, %v4646
    %v4691 = vpack.c.b16 %v4651, %v4647
    %v4692 = vpack.c.b16 %v4652, %v4648
    %v4693 = vpack.c.b16 %v4653, %v4649
    %v4694 = vpack.c.b16 %v4658, %v4654
    %v4695 = vpack.c.b16 %v4659, %v4655
    %v4696 = vpack.c.b16 %v4660, %v4656
    %v4697 = vpack.c.b16 %v4661, %v4657
    %v4698 = vpack.c.b16 %v4666, %v4662
    %v4699 = vpack.c.b16 %v4667, %v4663
    %v4700 = vpack.c.b16 %v4668, %v4664
    %v4701 = vpack.c.b16 %v4669, %v4665
    %4734 = vmatprep.subr.bf16.mxu0 %v4671
    %4735 = vmatpush1.bf16.msra.mxu0 %v4670
    %4736 = vmatprep.subr.bf16.mxu0 %v4675
    %4737 = vmatpush1.bf16.msra.mxu0 %v4674
    %4738 = vmatprep.subr.bf16.mxu0 %v4679
    %4739 = vmatpush1.bf16.msra.mxu0 %v4678
    %4740 = vmatprep.subr.bf16.mxu0 %v4683
    %4741 = vmatpush1.bf16.msra.mxu0 %v4682
    %4742 = vmatprep.subr.bf16.mxu0 %v4687
    %4743 = vmatpush1.bf16.msra.mxu0 %v4686
    %4744 = vmatprep.subr.bf16.mxu0 %v4691
    %4745 = vmatpush1.bf16.msra.mxu0 %v4690
    %4746 = vmatprep.subr.bf16.mxu0 %v4695
    %4747 = vmatpush1.bf16.msra.mxu0 %v4694
    %4748 = vmatprep.subr.bf16.mxu0 %v4699
    %4749 = vmatpush1.bf16.msra.mxu0 %v4698
    %4750 = vmatprep.subr.bf16.mxu0 0
    %4751 = vmatpush1.bf16.msra.mxu0 0
    %4752 = vmatprep.subr.bf16.mxu0 0
    %4753 = vmatpush1.bf16.msra.mxu0 0
    %4754 = vmatprep.subr.bf16.mxu0 0
    %4755 = vmatpush1.bf16.msra.mxu0 0
    %4756 = vmatprep.subr.bf16.mxu0 0
    %4757 = vmatpush1.bf16.msra.mxu0 0
    %4758 = vmatprep.subr.bf16.mxu0 0
    %4759 = vmatpush1.bf16.msra.mxu0 0
    %4760 = vmatprep.subr.bf16.mxu0 0
    %4761 = vmatpush1.bf16.msra.mxu0 0
    %4762 = vmatprep.subr.bf16.mxu0 0
    %4763 = vmatpush1.bf16.msra.mxu0 0
    %4764 = vmatprep.subr.bf16.mxu0 0
    %4765 = vmatpush1.bf16.msra.mxu0 0
    %4766 = vmatprep.mubr.bf16.mxu0 0
    %4767 = vmatmul.mubr.bf16.gmra.mrb[0].mxu0 %v4540
    %v4768 = vpop.f32.mrb[0].mxu0
    %v4769 = vadd.f32 0.0, %v4768
    %v4770 = vpop.f32.mrb[0].mxu0
    %v4771 = vadd.f32 0.0, %v4770
    %v4772 = vpop.f32.mrb[0].mxu0
    %v4773 = vpop.f32.mrb[0].mxu0
    %4774 = vdwg.mxu0
    %4775 = vmatprep.subr.bf16.mxu0 %v4673
    %4776 = vmatpush1.bf16.msra.mxu0 %v4672
    %4777 = vmatprep.subr.bf16.mxu0 %v4677
    %4778 = vmatpush1.bf16.msra.mxu0 %v4676
    %4779 = vmatprep.subr.bf16.mxu0 %v4681
    %4780 = vmatpush1.bf16.msra.mxu0 %v4680
    %4781 = vmatprep.subr.bf16.mxu0 %v4685
    %4782 = vmatpush1.bf16.msra.mxu0 %v4684
    %4783 = vmatprep.subr.bf16.mxu0 %v4689
    %4784 = vmatpush1.bf16.msra.mxu0 %v4688
    %4785 = vmatprep.subr.bf16.mxu0 %v4693
    %4786 = vmatpush1.bf16.msra.mxu0 %v4692
    %4787 = vmatprep.subr.bf16.mxu0 %v4697
    %4788 = vmatpush1.bf16.msra.mxu0 %v4696
    %4789 = vmatprep.subr.bf16.mxu0 %v4701
    %4790 = vmatpush1.bf16.msra.mxu0 %v4700
    %4791 = vmatprep.subr.bf16.mxu0 0
    %4792 = vmatpush1.bf16.msra.mxu0 0
    %4793 = vmatprep.subr.bf16.mxu0 0
    %4794 = vmatpush1.bf16.msra.mxu0 0
    %4795 = vmatprep.subr.bf16.mxu0 0
    %4796 = vmatpush1.bf16.msra.mxu0 0
    %4797 = vmatprep.subr.bf16.mxu0 0
    %4798 = vmatpush1.bf16.msra.mxu0 0
    %4799 = vmatprep.subr.bf16.mxu0 0
    %4800 = vmatpush1.bf16.msra.mxu0 0
    %4801 = vmatprep.subr.bf16.mxu0 0
    %4802 = vmatpush1.bf16.msra.mxu0 0
    %4803 = vmatprep.subr.bf16.mxu0 0
    %4804 = vmatpush1.bf16.msra.mxu0 0
    %4805 = vmatprep.subr.bf16.mxu0 0
    %4806 = vmatpush1.bf16.msra.mxu0 0
    %4807 = vmatprep.mubr.bf16.mxu0 0
    %4808 = vmatmul.mubr.bf16.gmra.mrb[0].mxu0 %v4540
    %v4809 = vpop.f32.mrb[0].mxu0
    %v4810 = vadd.f32 0.0, %v4809
    %v4811 = vpop.f32.mrb[0].mxu0
    %v4812 = vadd.f32 0.0, %v4811
    %v4813 = vpop.f32.mrb[0].mxu0
    %v4814 = vpop.f32.mrb[0].mxu0
    %4815 = vdwg.mxu0
    %v4816 = vadd.f32 %v4536, %v4769
    %v4817 = vadd.f32 %v4537, %v4771
    %v4818 = vadd.f32 %v4538, %v4810
    %v4819 = vadd.f32 %v4539, %v4812
    %v4820 = vld [vmem:[#allocation4] sm:$0xf]
    %v4822 = vlaneseq
    %v4823 = vshrl.u32 %v4822, 7
    %v4824 = vsub.s32 0, %v4823
    %v4825 = vrot.slane %v4820, %v4824
    %v4826 = vlaneseq
    %v4827 = vshrl.u32 %v4826, 7
    %v4828 = vsub.s32 1, %v4827
    %v4829 = vrot.slane %v4820, %v4828
    %v4830 = vlaneseq
    %v4831 = vshrl.u32 %v4830, 7
    %v4832 = vsub.s32 2, %v4831
    %v4833 = vrot.slane %v4820, %v4832
    %v4834 = vlaneseq
    %v4835 = vshrl.u32 %v4834, 7
    %v4836 = vsub.s32 3, %v4835
    %v4837 = vrot.slane %v4820, %v4836
    %v4842 = vadd.f32 %v4816, %v4825
    %v4843 = vadd.f32 %v4817, %v4829
    %v4844 = vadd.f32 %v4818, %v4833
    %v4845 = vadd.f32 %v4819, %v4837
    %v4846 = vmax.f32 %v4842, 0.0
    %v4847 = vmax.f32 %v4843, 0.0
    %v4848 = vmax.f32 %v4844, 0.0
    %v4849 = vmax.f32 %v4845, 0.0
    %v4850 = vpack.c.bf16 %v4846, %v4846
    %v4851 = vpack.c.bf16 %v4847, %v4847
    %v4852 = vpack.c.bf16 %v4848, %v4848
    %v4853 = vpack.c.bf16 %v4849, %v4849
    %v4854 = vld [vmem:[%s11] sm:$0xf]
    %v4855 = vld [vmem:[%s11 + $0x4] sm:$0xf]
    %v4856 = vld [vmem:[%s11 + $0x8] sm:$0xf]
    %v4857 = vld [vmem:[%s11 + $0xc] sm:$0xf]
    %v4858 = vld [vmem:[%s11 + $0x10] sm:$0xf]
    %v4859 = vld [vmem:[%s11 + $0x14] sm:$0xf]
    %v4860 = vld [vmem:[%s11 + $0x18] sm:$0xf]
    %v4861 = vld [vmem:[%s11 + $0x1c] sm:$0xf]
    %v4862 = vld [vmem:[%s11 + $0x20] sm:$0xf]
    %v4863 = vld [vmem:[%s11 + $0x24] sm:$0xf]
    %v4864 = vld [vmem:[%s11 + $0x28] sm:$0xf]
    %v4865 = vld [vmem:[%s11 + $0x2c] sm:$0xf]
    %v4866 = vld [vmem:[%s11 + $0x30] sm:$0xf]
    %v4867 = vld [vmem:[%s11 + $0x34] sm:$0xf]
    %v4868 = vld [vmem:[%s11 + $0x38] sm:$0xf]
    %v4869 = vld [vmem:[%s11 + $0x3c] sm:$0xf]
    %v4870 = vld [vmem:[%s11 + $0x40] sm:$0xf]
    %v4871 = vld [vmem:[%s11 + $0x44] sm:$0xf]
    %v4872 = vld [vmem:[%s11 + $0x48] sm:$0xf]
    %v4873 = vld [vmem:[%s11 + $0x4c] sm:$0xf]
    %v4874 = vld [vmem:[%s11 + $0x50] sm:$0xf]
    %v4875 = vld [vmem:[%s11 + $0x54] sm:$0xf]
    %v4876 = vld [vmem:[%s11 + $0x58] sm:$0xf]
    %v4877 = vld [vmem:[%s11 + $0x5c] sm:$0xf]
    %v4878 = vld [vmem:[%s11 + $0x60] sm:$0xf]
    %v4879 = vld [vmem:[%s11 + $0x64] sm:$0xf]
    %v4880 = vld [vmem:[%s11 + $0x68] sm:$0xf]
    %v4881 = vld [vmem:[%s11 + $0x6c] sm:$0xf]
    %v4882 = vld [vmem:[%s11 + $0x70] sm:$0xf]
    %v4883 = vld [vmem:[%s11 + $0x74] sm:$0xf]
    %v4884 = vld [vmem:[%s11 + $0x78] sm:$0xf]
    %v4885 = vld [vmem:[%s11 + $0x7c] sm:$0xf]
    %v4886 = vld [vmem:[%s11 + $0x80] sm:$0xf]
    %v4887 = vld [vmem:[%s11 + $0x84] sm:$0xf]
    %v4888 = vld [vmem:[%s11 + $0x88] sm:$0xf]
    %v4889 = vld [vmem:[%s11 + $0x8c] sm:$0xf]
    %v4890 = vld [vmem:[%s11 + $0x90] sm:$0xf]
    %v4891 = vld [vmem:[%s11 + $0x94] sm:$0xf]
    %v4892 = vld [vmem:[%s11 + $0x98] sm:$0xf]
    %v4893 = vld [vmem:[%s11 + $0x9c] sm:$0xf]
    %v4894 = vld [vmem:[%s11 + $0xa0] sm:$0xf]
    %v4895 = vld [vmem:[%s11 + $0xa4] sm:$0xf]
    %v4896 = vld [vmem:[%s11 + $0xa8] sm:$0xf]
    %v4897 = vld [vmem:[%s11 + $0xac] sm:$0xf]
    %v4898 = vld [vmem:[%s11 + $0xb0] sm:$0xf]
    %v4899 = vld [vmem:[%s11 + $0xb4] sm:$0xf]
    %v4900 = vld [vmem:[%s11 + $0xb8] sm:$0xf]
    %v4901 = vld [vmem:[%s11 + $0xbc] sm:$0xf]
    %v4902 = vld [vmem:[%s11 + $0xc0] sm:$0xf]
    %v4903 = vld [vmem:[%s11 + $0xc4] sm:$0xf]
    %v4904 = vld [vmem:[%s11 + $0xc8] sm:$0xf]
    %v4905 = vld [vmem:[%s11 + $0xcc] sm:$0xf]
    %v4906 = vld [vmem:[%s11 + $0xd0] sm:$0xf]
    %v4907 = vld [vmem:[%s11 + $0xd4] sm:$0xf]
    %v4908 = vld [vmem:[%s11 + $0xd8] sm:$0xf]
    %v4909 = vld [vmem:[%s11 + $0xdc] sm:$0xf]
    %v4910 = vld [vmem:[%s11 + $0xe0] sm:$0xf]
    %v4911 = vld [vmem:[%s11 + $0xe4] sm:$0xf]
    %v4912 = vld [vmem:[%s11 + $0xe8] sm:$0xf]
    %v4913 = vld [vmem:[%s11 + $0xec] sm:$0xf]
    %v4914 = vld [vmem:[%s11 + $0xf0] sm:$0xf]
    %v4915 = vld [vmem:[%s11 + $0xf4] sm:$0xf]
    %v4916 = vld [vmem:[%s11 + $0xf8] sm:$0xf]
    %v4917 = vld [vmem:[%s11 + $0xfc] sm:$0xf]
    %v4918 = vld [vmem:[#allocation6] sm:$0x1]
    %v4920 = vlaneseq
    %v4921 = vshrl.u32 %v4920, 7
    %v4922 = vsub.s32 0, %v4921
    %v4923 = vrot.slane %v4918, %v4922
    %v4989 = vunpack.c.l.b16 %v4854
    %v4990 = vunpack.c.l.b16 %v4855
    %v4991 = vunpack.c.l.b16 %v4856
    %v4992 = vunpack.c.l.b16 %v4857
    %v4993 = vunpack.c.l.b16 %v4858
    %v4994 = vunpack.c.l.b16 %v4859
    %v4995 = vunpack.c.l.b16 %v4860
    %v4996 = vunpack.c.l.b16 %v4861
    %v4997 = vunpack.c.l.b16 %v4862
    %v4998 = vunpack.c.l.b16 %v4863
    %v4999 = vunpack.c.l.b16 %v4864
    %v5000 = vunpack.c.l.b16 %v4865
    %v5001 = vunpack.c.l.b16 %v4866
    %v5002 = vunpack.c.l.b16 %v4867
    %v5003 = vunpack.c.l.b16 %v4868
    %v5004 = vunpack.c.l.b16 %v4869
    %v5005 = vunpack.c.l.b16 %v4870
    %v5006 = vunpack.c.l.b16 %v4871
    %v5007 = vunpack.c.l.b16 %v4872
    %v5008 = vunpack.c.l.b16 %v4873
    %v5009 = vunpack.c.l.b16 %v4874
    %v5010 = vunpack.c.l.b16 %v4875
    %v5011 = vunpack.c.l.b16 %v4876
    %v5012 = vunpack.c.l.b16 %v4877
    %v5013 = vunpack.c.l.b16 %v4878
    %v5014 = vunpack.c.l.b16 %v4879
    %v5015 = vunpack.c.l.b16 %v4880
    %v5016 = vunpack.c.l.b16 %v4881
    %v5017 = vunpack.c.l.b16 %v4882
    %v5018 = vunpack.c.l.b16 %v4883
    %v5019 = vunpack.c.l.b16 %v4884
    %v5020 = vunpack.c.l.b16 %v4885
    %v5021 = vunpack.c.l.b16 %v4886
    %v5022 = vunpack.c.l.b16 %v4887
    %v5023 = vunpack.c.l.b16 %v4888
    %v5024 = vunpack.c.l.b16 %v4889
    %v5025 = vunpack.c.l.b16 %v4890
    %v5026 = vunpack.c.l.b16 %v4891
    %v5027 = vunpack.c.l.b16 %v4892
    %v5028 = vunpack.c.l.b16 %v4893
    %v5029 = vunpack.c.l.b16 %v4894
    %v5030 = vunpack.c.l.b16 %v4895
    %v5031 = vunpack.c.l.b16 %v4896
    %v5032 = vunpack.c.l.b16 %v4897
    %v5033 = vunpack.c.l.b16 %v4898
    %v5034 = vunpack.c.l.b16 %v4899
    %v5035 = vunpack.c.l.b16 %v4900
    %v5036 = vunpack.c.l.b16 %v4901
    %v5037 = vunpack.c.l.b16 %v4902
    %v5038 = vunpack.c.l.b16 %v4903
    %v5039 = vunpack.c.l.b16 %v4904
    %v5040 = vunpack.c.l.b16 %v4905
    %v5041 = vunpack.c.l.b16 %v4906
    %v5042 = vunpack.c.l.b16 %v4907
    %v5043 = vunpack.c.l.b16 %v4908
    %v5044 = vunpack.c.l.b16 %v4909
    %v5045 = vunpack.c.l.b16 %v4910
    %v5046 = vunpack.c.l.b16 %v4911
    %v5047 = vunpack.c.l.b16 %v4912
    %v5048 = vunpack.c.l.b16 %v4913
    %v5049 = vunpack.c.l.b16 %v4914
    %v5050 = vunpack.c.l.b16 %v4915
    %v5051 = vunpack.c.l.b16 %v4916
    %v5052 = vunpack.c.l.b16 %v4917
    %v5053 = vpack.c.b16 %v4990, %v4989
    %v5054 = vpack.c.b16 %v4992, %v4991
    %v5055 = vpack.c.b16 %v4994, %v4993
    %v5056 = vpack.c.b16 %v4996, %v4995
    %v5057 = vpack.c.b16 %v4998, %v4997
    %v5058 = vpack.c.b16 %v5000, %v4999
    %v5059 = vpack.c.b16 %v5002, %v5001
    %v5060 = vpack.c.b16 %v5004, %v5003
    %v5061 = vpack.c.b16 %v5006, %v5005
    %v5062 = vpack.c.b16 %v5008, %v5007
    %v5063 = vpack.c.b16 %v5010, %v5009
    %v5064 = vpack.c.b16 %v5012, %v5011
    %v5065 = vpack.c.b16 %v5014, %v5013
    %v5066 = vpack.c.b16 %v5016, %v5015
    %v5067 = vpack.c.b16 %v5018, %v5017
    %v5068 = vpack.c.b16 %v5020, %v5019
    %v5069 = vpack.c.b16 %v5022, %v5021
    %v5070 = vpack.c.b16 %v5024, %v5023
    %v5071 = vpack.c.b16 %v5026, %v5025
    %v5072 = vpack.c.b16 %v5028, %v5027
    %v5073 = vpack.c.b16 %v5030, %v5029
    %v5074 = vpack.c.b16 %v5032, %v5031
    %v5075 = vpack.c.b16 %v5034, %v5033
    %v5076 = vpack.c.b16 %v5036, %v5035
    %v5077 = vpack.c.b16 %v5038, %v5037
    %v5078 = vpack.c.b16 %v5040, %v5039
    %v5079 = vpack.c.b16 %v5042, %v5041
    %v5080 = vpack.c.b16 %v5044, %v5043
    %v5081 = vpack.c.b16 %v5046, %v5045
    %v5082 = vpack.c.b16 %v5048, %v5047
    %v5083 = vpack.c.b16 %v5050, %v5049
    %v5084 = vpack.c.b16 %v5052, %v5051
    %5117 = vmatprep.subr.bf16.mxu0 0
    %5118 = vmatpush1.bf16.msra.mxu0 %v5053
    %5119 = vmatprep.subr.bf16.mxu0 0
    %5120 = vmatpush1.bf16.msra.mxu0 %v5054
    %5121 = vmatprep.subr.bf16.mxu0 0
    %5122 = vmatpush1.bf16.msra.mxu0 %v5055
    %5123 = vmatprep.subr.bf16.mxu0 0
    %5124 = vmatpush1.bf16.msra.mxu0 %v5056
    %5125 = vmatprep.subr.bf16.mxu0 0
    %5126 = vmatpush1.bf16.msra.mxu0 %v5057
    %5127 = vmatprep.subr.bf16.mxu0 0
    %5128 = vmatpush1.bf16.msra.mxu0 %v5058
    %5129 = vmatprep.subr.bf16.mxu0 0
    %5130 = vmatpush1.bf16.msra.mxu0 %v5059
    %5131 = vmatprep.subr.bf16.mxu0 0
    %5132 = vmatpush1.bf16.msra.mxu0 %v5060
    %5133 = vmatprep.subr.bf16.mxu0 0
    %5134 = vmatpush1.bf16.msra.mxu0 %v5061
    %5135 = vmatprep.subr.bf16.mxu0 0
    %5136 = vmatpush1.bf16.msra.mxu0 %v5062
    %5137 = vmatprep.subr.bf16.mxu0 0
    %5138 = vmatpush1.bf16.msra.mxu0 %v5063
    %5139 = vmatprep.subr.bf16.mxu0 0
    %5140 = vmatpush1.bf16.msra.mxu0 %v5064
    %5141 = vmatprep.subr.bf16.mxu0 0
    %5142 = vmatpush1.bf16.msra.mxu0 %v5065
    %5143 = vmatprep.subr.bf16.mxu0 0
    %5144 = vmatpush1.bf16.msra.mxu0 %v5066
    %5145 = vmatprep.subr.bf16.mxu0 0
    %5146 = vmatpush1.bf16.msra.mxu0 %v5067
    %5147 = vmatprep.subr.bf16.mxu0 0
    %5148 = vmatpush1.bf16.msra.mxu0 %v5068
    %5149 = vmatprep.mubr.bf16.mxu0 %v4851
    %5150 = vmatmul.mubr.bf16.gmra.mrb[0].mxu0 %v4850
    %v5151 = vpop.f32.mrb[0].mxu0
    %v5152 = vadd.f32 %v4923, %v5151
    %v5153 = vpop.f32.mrb[0].mxu0
    %v5154 = vpop.f32.mrb[0].mxu0
    %v5155 = vpop.f32.mrb[0].mxu0
    %5156 = vdwg.mxu0
    %5157 = vmatprep.subr.bf16.mxu0 0
    %5158 = vmatpush1.bf16.msra.mxu0 %v5069
    %5159 = vmatprep.subr.bf16.mxu0 0
    %5160 = vmatpush1.bf16.msra.mxu0 %v5070
    %5161 = vmatprep.subr.bf16.mxu0 0
    %5162 = vmatpush1.bf16.msra.mxu0 %v5071
    %5163 = vmatprep.subr.bf16.mxu0 0
    %5164 = vmatpush1.bf16.msra.mxu0 %v5072
    %5165 = vmatprep.subr.bf16.mxu0 0
    %5166 = vmatpush1.bf16.msra.mxu0 %v5073
    %5167 = vmatprep.subr.bf16.mxu0 0
    %5168 = vmatpush1.bf16.msra.mxu0 %v5074
    %5169 = vmatprep.subr.bf16.mxu0 0
    %5170 = vmatpush1.bf16.msra.mxu0 %v5075
    %5171 = vmatprep.subr.bf16.mxu0 0
    %5172 = vmatpush1.bf16.msra.mxu0 %v5076
    %5173 = vmatprep.subr.bf16.mxu0 0
    %5174 = vmatpush1.bf16.msra.mxu0 %v5077
    %5175 = vmatprep.subr.bf16.mxu0 0
    %5176 = vmatpush1.bf16.msra.mxu0 %v5078
    %5177 = vmatprep.subr.bf16.mxu0 0
    %5178 = vmatpush1.bf16.msra.mxu0 %v5079
    %5179 = vmatprep.subr.bf16.mxu0 0
    %5180 = vmatpush1.bf16.msra.mxu0 %v5080
    %5181 = vmatprep.subr.bf16.mxu0 0
    %5182 = vmatpush1.bf16.msra.mxu0 %v5081
    %5183 = vmatprep.subr.bf16.mxu0 0
    %5184 = vmatpush1.bf16.msra.mxu0 %v5082
    %5185 = vmatprep.subr.bf16.mxu0 0
    %5186 = vmatpush1.bf16.msra.mxu0 %v5083
    %5187 = vmatprep.subr.bf16.mxu0 0
    %5188 = vmatpush1.bf16.msra.mxu0 %v5084
    %5189 = vmatprep.mubr.bf16.mxu0 %v4853
    %5190 = vmatmul.mubr.bf16.gmra.mrb[0].mxu0 %v4852
    %v5191 = vpop.f32.mrb[0].mxu0
    %v5192 = vadd.f32 %v5152, %v5191
    %v5193 = vpop.f32.mrb[0].mxu0
    %v5194 = vpop.f32.mrb[0].mxu0
    %v5195 = vpop.f32.mrb[0].mxu0
    %5196 = vdwg.mxu0
    %5197 = vst [vmem:[%s13] sm:$0xff] %v5192
    // Predicated region
    $region66: #{cnn_forward.1} parent=1 // pred_check
      _
    $region67: #{cnn_forward.1} parent=1 // pred_check_branch
      %5199 = sbr.rel (0) target = $region69
    $region68: #{cnn_forward.1} parent=1 // pred_region
      _
    $region69: #{cnn_forward.1} parent=1 // pred_fallthru
      _
    // Predicated region
    $region70: #{cnn_forward.1} parent=1 // pred_check
      _
    $region71: #{cnn_forward.1} parent=1 // pred_check_branch
      %5201 = sbr.rel (0) target = $region73
    $region72: #{cnn_forward.1} parent=1 // pred_region
      _
    $region73: #{cnn_forward.1} parent=1 // pred_fallthru
      _
    %5202 = vsyncpa [#allocation3], 1
    %5203 = vsyncpa [#allocation5], 1

</llo_original>
